<compile_context>
chip_gen: v7x
topology: tpu7x:2x2x1
jax: 0.10.0
libtpu: 0.0.40
codegen_flags: <defaults>
</compile_context>

<pallas_src>
import functools

import jax
import jax.numpy as jnp
from jax.experimental import pallas as pl
from jax.experimental.pallas import tpu as pltpu

EPS = 1e-5    # nn.BatchNorm2d default
LANE = 128    # TPU lane width


# ---------------------------------------------------------------------------
# helpers
# ---------------------------------------------------------------------------
def _round_up(v, m):
    return (v + m - 1) // m * m


def _vmem_limit(block_bytes, scratch_bytes=0):
    """Scoped-VMEM budget: double-buffered pipeline blocks + scratch, with
    headroom for compiler temporaries; floored at the 32 MiB scoped default,
    capped below v7x's 64 MiB physical VMEM.
    TODO(synk): raise the cap toward ~100 MiB when targeting v5e/v6e only."""
    est = 3 * (2 * block_bytes + scratch_bytes)
    return int(max(32 * 1024 * 1024, min(est, 56 * 1024 * 1024)))


def _pick_row_tile(m, cap=1024):
    """Largest multiple of 8 that divides m, capped so that (when possible)
    there are >= 2 tiles for the 'parallel' grid axis (v7x megacore)."""
    if m % 8 != 0:
        return m                                  # block == full array (allowed)
    cap = max(8, min(cap, m // 2 if m >= 16 else m))
    best = 8
    for t in range(8, cap + 1, 8):
        if m % t == 0:
            best = t
    return best


def _tile_stats(st_ref, y):
    """Per-tile BN statistics of y (rows are samples): [sum, centered sum-sq].
    Centered about the tile mean so the cross-tile combine (Chan's formula)
    avoids the E[x^2] - E[x]^2 cancellation flagged in review."""
    n = y.shape[0]
    s = jnp.sum(y, axis=0, keepdims=True)                    # (1, C)
    d = y - s * (1.0 / n)
    ssc = jnp.sum(d * d, axis=0, keepdims=True)              # (1, C)
    st_ref[...] = jnp.concatenate([s, ssc], axis=0)[None]    # (1, 2, C)


def _finalize_bn(stats, n_per_tile, gamma, beta):
    """Combine per-tile stats -> batch mean / biased variance -> fold the BN
    affine into per-channel scale/shift (training-mode BatchNorm)."""
    sums = stats[:, 0, :]                                    # (T, C)
    sscs = stats[:, 1, :]                                    # (T, C)
    total = n_per_tile * stats.shape[0]
    mean = jnp.sum(sums, axis=0) / total                     # (C,)
    tile_mean = sums / n_per_tile
    var = (jnp.sum(sscs, axis=0)
           + n_per_tile * jnp.sum((tile_mean - mean[None, :]) ** 2, axis=0)) / total
    scale = gamma * jax.lax.rsqrt(var + EPS)
    shift = beta - mean * scale
    return scale.reshape(1, -1), shift.reshape(1, -1)


# ---------------------------------------------------------------------------
# kernels
# ---------------------------------------------------------------------------
def _conv1x1_stats_kernel(x_ref, sc_ref, sh_ref, w_ref, y_ref, st_ref, *,
                          apply_bn_relu):
    """y = (optional BN-affine + ReLU of) x  @  w, plus per-tile stats of y.

    x_ref : (TM, Cin_p)  f32   sc/sh : (1, Cin_p) f32   w_ref : (Cin_p, Cout_p) bf16
    y_ref : (TM, Cout_p) f32   st_ref: (1, 2, Cout_p) f32
    """
    x = x_ref[...]
    if apply_bn_relu:
        x = jnp.maximum(x * sc_ref[...] + sh_ref[...], 0.0)
    y = jnp.dot(x.astype(jnp.bfloat16), w_ref[...],
                preferred_element_type=jnp.float32)
    y_ref[...] = y
    _tile_stats(st_ref, y)


def _conv3x3_stats_kernel(y1_ref, sc_ref, sh_ref, w2_ref, y2_ref, st_ref,
                          mid_ref):
    """BN1-affine + ReLU + 3x3 conv (stride 1, pad 1) for one image, plus
    per-image BN statistics of the conv output.

    y1_ref : (1, H, W, Wd)     f32   raw conv1 output
    sc/sh  : (1, Wd)           f32   folded BN1 scale/shift
    w2_ref : (9*Wd, Wd)        bf16  tap-major 3x3 weights (t = ky*3 + kx)
    y2_ref : (1, H, W, Wd)     f32
    st_ref : (1, 2, Wd)        f32
    mid_ref: (1, H+2, W+2, Wd) bf16  scratch: spatially padded BN1 output
    """
    _, hp, wp, wd = mid_ref.shape
    h, w = hp - 2, wp - 2
    m = h * w

    # BN1 (batch stats folded to scale/shift) + ReLU; cast to bf16 ONCE.
    y1 = y1_ref[...].reshape(m, wd)
    a = jnp.maximum(y1 * sc_ref[...] + sh_ref[...], 0.0)

    # Spatial zero padding (padding=1): single unmasked memset of the bf16
    # scratch, then overwrite the interior (no width-1 masked border stores).
    mid_ref[...] = jnp.zeros_like(mid_ref)
    mid_ref[:, 1:h + 1, 1:w + 1, :] = a.astype(jnp.bfloat16).reshape(1, h, w, wd)
    midp = mid_ref[...]

    def tap(t):
        dy, dx = divmod(t, 3)
        return midp[:, dy:dy + h, dx:dx + w, :].reshape(m, wd)

    # 3x3 conv = accumulating MXU matmuls over the 9 taps.  Taps fused in
    # pairs so each dot has K = 2*Wd (full 256-deep MXU on v6e/v7x).
    acc = jnp.zeros((m, wd), jnp.float32)
    for t0 in range(0, 8, 2):
        lhs = jnp.concatenate([tap(t0), tap(t0 + 1)], axis=-1)   # (m, 2*Wd) bf16
        acc = acc + jnp.dot(lhs, w2_ref[t0 * wd:(t0 + 2) * wd, :],
                            preferred_element_type=jnp.float32)
    acc = acc + jnp.dot(tap(8), w2_ref[8 * wd:9 * wd, :],
                        preferred_element_type=jnp.float32)

    y2_ref[...] = acc.reshape(1, h, w, wd)
    _tile_stats(st_ref, acc)


def _bn_residual_relu_kernel(y_ref, sc_ref, sh_ref, x_ref, o_ref):
    """out = relu(BN3-affine(y3) + identity)."""
    o_ref[...] = jnp.maximum(y_ref[...] * sc_ref[...] + sh_ref[...]
                             + x_ref[...], 0.0)


# ---------------------------------------------------------------------------
# pallas_call wrappers
# ---------------------------------------------------------------------------
def _conv1x1_call(x2d, scale, shift, w, tm, *, apply_bn_relu):
    m, cin_p = x2d.shape
    cout_p = w.shape[1]
    t = m // tm
    blk = tm * cin_p * 4 + cin_p * cout_p * 2 + tm * cout_p * 4 + 2 * cout_p * 4
    return pl.pallas_call(
        functools.partial(_conv1x1_stats_kernel, apply_bn_relu=apply_bn_relu),
        out_shape=(jax.ShapeDtypeStruct((m, cout_p), jnp.float32),
                   jax.ShapeDtypeStruct((t, 2, cout_p), jnp.float32)),
        grid_spec=pltpu.PrefetchScalarGridSpec(
            num_scalar_prefetch=0, grid=(t,),
            in_specs=[pl.BlockSpec((tm, cin_p), lambda i: (i, 0)),
                      pl.BlockSpec((1, cin_p), lambda i: (0, 0)),
                      pl.BlockSpec((1, cin_p), lambda i: (0, 0)),
                      pl.BlockSpec((cin_p, cout_p), lambda i: (0, 0))],
            out_specs=[pl.BlockSpec((tm, cout_p), lambda i: (i, 0)),
                       pl.BlockSpec((1, 2, cout_p), lambda i: (i, 0, 0))]),
        compiler_params=pltpu.CompilerParams(
            dimension_semantics=("parallel",),
            vmem_limit_bytes=_vmem_limit(blk)),
    )(x2d, scale, shift, w)


def _conv3x3_call(y1_nhwc, scale, shift, w2m):
    n, h, w, wd = y1_nhwc.shape
    blk = 2 * h * w * wd * 4 + 9 * wd * wd * 2
    scratch = (h + 2) * (w + 2) * wd * 2
    return pl.pallas_call(
        _conv3x3_stats_kernel,
        out_shape=(jax.ShapeDtypeStruct((n, h, w, wd), jnp.float32),
                   jax.ShapeDtypeStruct((n, 2, wd), jnp.float32)),
        grid_spec=pltpu.PrefetchScalarGridSpec(
            num_scalar_prefetch=0, grid=(n,),
            in_specs=[pl.BlockSpec((1, h, w, wd), lambda i: (i, 0, 0, 0)),
                      pl.BlockSpec((1, wd), lambda i: (0, 0)),
                      pl.BlockSpec((1, wd), lambda i: (0, 0)),
                      pl.BlockSpec((9 * wd, wd), lambda i: (0, 0))],
            out_specs=[pl.BlockSpec((1, h, w, wd), lambda i: (i, 0, 0, 0)),
                       pl.BlockSpec((1, 2, wd), lambda i: (i, 0, 0))],
            scratch_shapes=[pltpu.VMEM((1, h + 2, w + 2, wd), jnp.bfloat16)]),
        compiler_params=pltpu.CompilerParams(
            dimension_semantics=("parallel",),
            vmem_limit_bytes=_vmem_limit(blk, scratch)),
    )(y1_nhwc, scale, shift, w2m)


def _bn_residual_call(y3, scale, shift, x2d, tm):
    m, cp = y3.shape
    t = m // tm
    blk = 3 * tm * cp * 4
    return pl.pallas_call(
        _bn_residual_relu_kernel,
        out_shape=jax.ShapeDtypeStruct((m, cp), jnp.float32),
        grid_spec=pltpu.PrefetchScalarGridSpec(
            num_scalar_prefetch=0, grid=(t,),
            in_specs=[pl.BlockSpec((tm, cp), lambda i: (i, 0)),
                      pl.BlockSpec((1, cp), lambda i: (0, 0)),
                      pl.BlockSpec((1, cp), lambda i: (0, 0)),
                      pl.BlockSpec((tm, cp), lambda i: (i, 0))],
            out_specs=pl.BlockSpec((tm, cp), lambda i: (i, 0))),
        compiler_params=pltpu.CompilerParams(
            dimension_semantics=("parallel",),
            vmem_limit_bytes=_vmem_limit(blk)),
    )(y3, scale, shift, x2d)


# ---------------------------------------------------------------------------
# Bottleneck forward
# ---------------------------------------------------------------------------
def _bottleneck_impl(x_nchw, w1, g1, b1, w2, g2, b2, w3, g3, b3, *, stride=1):
    """Bottleneck forward, training-mode BatchNorm (batch statistics).

    x_nchw: (N, Cin, H, W) f32.  w1: (width, Cin, 1, 1)  w2: (width, width, 3, 3)
    w3: (Cout, width, 1, 1).  g*/b*: BN affine vectors.
    """
    assert stride == 1, "TODO(synk): stride>1 / downsample path not implemented"
    n, cin, h, w = x_nchw.shape
    width = w1.shape[0]
    cout = w3.shape[0]
    assert w1.shape == (width, cin, 1, 1)
    assert w2.shape == (width, width, 3, 3)
    assert w3.shape == (cout, width, 1, 1)
    assert cin == cout, ("identity residual (downsample=None) requires "
                         "inplanes == planes * expansion")

    cp = _round_up(cin, LANE)      # padded in/out channels
    wd = _round_up(width, LANE)    # padded bottleneck width

    # NCHW -> NHWC + channel zero-pad so every lane axis is a dense 128*k.
    x = jnp.transpose(x_nchw, (0, 2, 3, 1)).astype(jnp.float32)
    x = jnp.pad(x, ((0, 0), (0, 0), (0, 0), (0, cp - cin)))
    m = n * h * w
    x2d = x.reshape(m, cp)

    # Weights as padded bf16 MXU matrices (padded rows/cols are exact zeros).
    w1_m = jnp.zeros((cp, wd), jnp.float32).at[:cin, :width].set(
        jnp.transpose(w1.reshape(width, cin), (1, 0)).astype(jnp.float32)
    ).astype(jnp.bfloat16)
    w2_t = jnp.transpose(w2.astype(jnp.float32), (2, 3, 1, 0)).reshape(9, width, width)
    w2_m = jnp.zeros((9, wd, wd), jnp.float32).at[:, :width, :width].set(
        w2_t).reshape(9 * wd, wd).astype(jnp.bfloat16)
    w3_m = jnp.zeros((wd, cp), jnp.float32).at[:width, :cout].set(
        jnp.transpose(w3.reshape(cout, width), (1, 0)).astype(jnp.float32)
    ).astype(jnp.bfloat16)

    def pad_vec(v, c):   # padded channels carry gamma = beta = 0 -> stay 0
        return jnp.zeros((c,), jnp.float32).at[:v.shape[0]].set(
            v.astype(jnp.float32))

    g1p, b1p = pad_vec(g1, wd), pad_vec(b1, wd)
    g2p, b2p = pad_vec(g2, wd), pad_vec(b2, wd)
    g3p, b3p = pad_vec(g3, cp), pad_vec(b3, cp)

    tm = _pick_row_tile(m)
    ones = jnp.ones((1, cp), jnp.float32)     # dummies (conv1 applies no affine)
    zeros = jnp.zeros((1, cp), jnp.float32)

    # pass 1: conv1 (1x1) + per-tile BN1 stats
    y1, st1 = _conv1x1_call(x2d, ones, zeros, w1_m, tm, apply_bn_relu=False)
    sc1, sh1 = _finalize_bn(st1, float(tm), g1p, b1p)

    # pass 2: BN1+ReLU fused into conv2 (3x3) + per-image BN2 stats
    y2, st2 = _conv3x3_call(y1.reshape(n, h, w, wd), sc1, sh1, w2_m)
    sc2, sh2 = _finalize_bn(st2, float(h * w), g2p, b2p)

    # pass 3: BN2+ReLU fused into conv3 (1x1) + per-tile BN3 stats
    y3, st3 = _conv1x1_call(y2.reshape(m, wd), sc2, sh2, w3_m, tm,
                            apply_bn_relu=True)
    sc3, sh3 = _finalize_bn(st3, float(tm), g3p, b3p)

    # pass 4: BN3 + identity residual + final ReLU
    out2d = _bn_residual_call(y3, sc3, sh3, x2d, tm)

    out = out2d.reshape(n, h, w, cp)[:, :, :, :cout]
    return jnp.transpose(out, (0, 3, 1, 2))   # -> NCHW


bottleneck = jax.jit(_bottleneck_impl, static_argnames=("stride",))


# ---------------------------------------------------------------------------
# pure-JAX reference (mirrors the PyTorch forward in train mode)
# ---------------------------------------------------------------------------
def ref_bottleneck(x, w1, g1, b1, w2, g2, b2, w3, g3, b3, *,
                   matmul_dtype=jnp.float32):
    def conv(a, wgt, pad):
        return jax.lax.conv_general_dilated(
            a.astype(matmul_dtype), wgt.astype(matmul_dtype), (1, 1),
            ((pad, pad), (pad, pad)),
            dimension_numbers=('NCHW', 'OIHW', 'NCHW'),
            preferred_element_type=jnp.float32)

    def bn(y, g, b):
        mu = jnp.mean(y, axis=(0, 2, 3), keepdims=True)
        v = jnp.mean((y - mu) ** 2, axis=(0, 2, 3), keepdims=True)
        return (y - mu) * jax.lax.rsqrt(v + EPS) * g.reshape(1, -1, 1, 1) \
            + b.reshape(1, -1, 1, 1)

    out = jax.nn.relu(bn(conv(x, w1, 0), g1, b1))
    out = jax.nn.relu(bn(conv(out, w2, 1), g2, b2))
    out = bn(conv(out, w3, 0), g3, b3)
    return jax.nn.relu(out + x)


if __name__ == "__main__":
    key = jax.random.PRNGKey(0)
    ks = jax.random.split(key, 10)

    # Bottleneck(inplanes=16, planes=4): width=4, out=16, stride=1,
    # downsample=None (inplanes == planes*expansion -> identity residual).
    N, planes, H, W = 2, 4, 16, 16
    inplanes = planes * 4
    width = planes
    cout = planes * 4

    x = jax.random.normal(ks[0], (N, inplanes, H, W), jnp.float32)
    w1 = 0.2 * jax.random.normal(ks[1], (width, inplanes, 1, 1), jnp.float32)
    w2 = 0.2 * jax.random.normal(ks[2], (width, width, 3, 3), jnp.float32)
    w3 = 0.2 * jax.random.normal(ks[3], (cout, width, 1, 1), jnp.float32)
    g1 = 1.0 + 0.1 * jax.random.normal(ks[4], (width,), jnp.float32)
    b1 = 0.1 * jax.random.normal(ks[5], (width,), jnp.float32)
    g2 = 1.0 + 0.1 * jax.random.normal(ks[6], (width,), jnp.float32)
    b2 = 0.1 * jax.random.normal(ks[7], (width,), jnp.float32)
    g3 = 1.0 + 0.1 * jax.random.normal(ks[8], (cout,), jnp.float32)
    b3 = 0.1 * jax.random.normal(ks[9], (cout,), jnp.float32)

    out = jax.block_until_ready(
        bottleneck(x, w1, g1, b1, w2, g2, b2, w3, g3, b3))
    assert out.shape == (N, cout, H, W), out.shape

    # Matched-precision check: reference with the same bf16 conv-input rounding.
    ref_b = jax.block_until_ready(ref_bottleneck(
        x, w1, g1, b1, w2, g2, b2, w3, g3, b3, matmul_dtype=jnp.bfloat16))
    err_b = float(jnp.max(jnp.abs(out - ref_b)))
    assert jnp.allclose(out, ref_b, atol=1e-2, rtol=1e-2), err_b

    # Loose sanity check against full-f32 module semantics.
    ref_f = jax.block_until_ready(ref_bottleneck(
        x, w1, g1, b1, w2, g2, b2, w3, g3, b3, matmul_dtype=jnp.float32))
    err_f = float(jnp.max(jnp.abs(out - ref_f)))
    assert jnp.allclose(out, ref_f, atol=1e-1, rtol=1e-1), err_f

    print("KERNEL_OK")
</pallas_src>

<mosaic_0001>
module attributes {stable_mosaic.version = 11 : i64} {
  func.func @_conv1x1_stats_kernel(%arg0: i32, %arg1: memref<256x128xf32, #tpu.memory_space<vmem>>, %arg2: memref<1x128xf32, #tpu.memory_space<vmem>>, %arg3: memref<1x128xf32, #tpu.memory_space<vmem>>, %arg4: memref<128x128xbf16, #tpu.memory_space<vmem>>, %arg5: memref<256x128xf32, #tpu.memory_space<vmem>>, %arg6: memref<1x2x128xf32, #tpu.memory_space<vmem>>) attributes {dimension_semantics = [#tpu.dimension_semantics<parallel>], iteration_bounds = array<i64: 2>, scalar_prefetch = 0 : i64, scratch_operands = 0 : i64, tpu.core_type = #tpu.core_type<tc>, window_params = [{transform_indices = @transform_0, window_bounds = array<i64: 256, 128>}, {pipeline_mode = #tpu.pipeline_mode<synchronous>, transform_indices = @transform_1, window_bounds = array<i64: 1, 128>}, {pipeline_mode = #tpu.pipeline_mode<synchronous>, transform_indices = @transform_2, window_bounds = array<i64: 1, 128>}, {pipeline_mode = #tpu.pipeline_mode<synchronous>, transform_indices = @transform_3, window_bounds = array<i64: 128, 128>}, {transform_indices = @transform_4, window_bounds = array<i64: 256, 128>}, {transform_indices = @transform_5, window_bounds = array<i64: 1, 2, 128>}]} {
    %c0 = arith.constant 0 : index
    %c0_0 = arith.constant 0 : index
    %0 = vector.load %arg1[%c0, %c0_0] : memref<256x128xf32, #tpu.memory_space<vmem>>, vector<256x128xf32>
    %1 = arith.truncf %0 : vector<256x128xf32> to vector<256x128xbf16>
    %c0_1 = arith.constant 0 : index
    %c0_2 = arith.constant 0 : index
    %2 = vector.load %arg4[%c0_1, %c0_2] : memref<128x128xbf16, #tpu.memory_space<vmem>>, vector<128x128xbf16>
    %cst = arith.constant dense<0.000000e+00> : vector<256x128xf32>
    %3 = tpu.matmul %1, %2, %cst {dimension_numbers = #tpu.dot_dimension_numbers<[1], [0], [0], [1], [0, 0, 1, 1], [], []>} : vector<256x128xbf16>, vector<128x128xbf16>, vector<256x128xf32> -> vector<256x128xf32>
    %c0_3 = arith.constant 0 : index
    %c0_4 = arith.constant 0 : index
    %4 = vector.load %arg5[%c0_3, %c0_4] : memref<256x128xf32, #tpu.memory_space<vmem>>, vector<256x128xf32>
    tpu.vector_store %arg5[%c0_3, %c0_4], %3 {strides = array<i32>} : memref<256x128xf32, #tpu.memory_space<vmem>>, vector<256x128xf32>,
    %cst_5 = arith.constant dense<0.000000e+00> : vector<128xf32>
    %5 = vector.multi_reduction <add>, %3, %cst_5 [0] : vector<256x128xf32> to vector<128xf32>
    %6 = vector.shape_cast %5 : vector<128xf32> to vector<1x128xf32>
    %cst_6 = arith.constant 3.906250e-03 : f32
    %7 = vector.broadcast %cst_6 : f32 to vector<1x128xf32>
    %8 = arith.mulf %6, %7 : vector<1x128xf32>
    %9 = vector.broadcast %8 : vector<1x128xf32> to vector<256x128xf32>
    %10 = arith.subf %3, %9 : vector<256x128xf32>
    %11 = arith.mulf %10, %10 : vector<256x128xf32>
    %cst_7 = arith.constant dense<0.000000e+00> : vector<128xf32>
    %12 = vector.multi_reduction <add>, %11, %cst_7 [0] : vector<256x128xf32> to vector<128xf32>
    %13 = vector.shape_cast %12 : vector<128xf32> to vector<1x128xf32>
    %14 = tpu.concatenate %6, %13 in 0 : vector<1x128xf32>, vector<1x128xf32> -> vector<2x128xf32>
    %15 = vector.shape_cast %14 : vector<2x128xf32> to vector<1x2x128xf32>
    %c0_8 = arith.constant 0 : index
    %c0_9 = arith.constant 0 : index
    %c0_10 = arith.constant 0 : index
    %16 = vector.load %arg6[%c0_8, %c0_9, %c0_10] : memref<1x2x128xf32, #tpu.memory_space<vmem>>, vector<1x2x128xf32>
    tpu.vector_store %arg6[%c0_8, %c0_9, %c0_10], %15 {strides = array<i32>} : memref<1x2x128xf32, #tpu.memory_space<vmem>>, vector<1x2x128xf32>,
    return
  }
  func.func @transform_0(%arg0: i32) -> (i32, i32) {
    %c0_i32 = arith.constant 0 : i32
    %c0_i32_0 = arith.constant 0 : i32
    return %arg0, %c0_i32 : i32, i32
  }
  func.func @transform_1(%arg0: i32) -> (i32, i32) {
    %c0_i32 = arith.constant 0 : i32
    %c0_i32_0 = arith.constant 0 : i32
    %c0_i32_1 = arith.constant 0 : i32
    return %c0_i32, %c0_i32_0 : i32, i32
  }
  func.func @transform_2(%arg0: i32) -> (i32, i32) {
    %c0_i32 = arith.constant 0 : i32
    %c0_i32_0 = arith.constant 0 : i32
    %c0_i32_1 = arith.constant 0 : i32
    return %c0_i32, %c0_i32_0 : i32, i32
  }
  func.func @transform_3(%arg0: i32) -> (i32, i32) {
    %c0_i32 = arith.constant 0 : i32
    %c0_i32_0 = arith.constant 0 : i32
    %c0_i32_1 = arith.constant 0 : i32
    return %c0_i32, %c0_i32_0 : i32, i32
  }
  func.func @transform_4(%arg0: i32) -> (i32, i32) {
    %c0_i32 = arith.constant 0 : i32
    %c0_i32_0 = arith.constant 0 : i32
    return %arg0, %c0_i32 : i32, i32
  }
  func.func @transform_5(%arg0: i32) -> (i32, i32, i32) {
    %c0_i32 = arith.constant 0 : i32
    %c0_i32_0 = arith.constant 0 : i32
    %c0_i32_1 = arith.constant 0 : i32
    return %arg0, %c0_i32, %c0_i32_0 : i32, i32, i32
  }
}

module attributes {stable_mosaic.version = 11 : i64} {
  func.func @_conv3x3_stats_kernel(%arg0: i32, %arg1: memref<1x16x16x128xf32, #tpu.memory_space<vmem>>, %arg2: memref<1x128xf32, #tpu.memory_space<vmem>>, %arg3: memref<1x128xf32, #tpu.memory_space<vmem>>, %arg4: memref<1152x128xbf16, #tpu.memory_space<vmem>>, %arg5: memref<1x16x16x128xf32, #tpu.memory_space<vmem>>, %arg6: memref<1x2x128xf32, #tpu.memory_space<vmem>>, %arg7: memref<1x18x18x128xbf16, #tpu.memory_space<vmem>>) attributes {dimension_semantics = [#tpu.dimension_semantics<parallel>], iteration_bounds = array<i64: 2>, scalar_prefetch = 0 : i64, scratch_operands = 1 : i64, tpu.core_type = #tpu.core_type<tc>, window_params = [{transform_indices = @transform_0, window_bounds = array<i64: 1, 16, 16, 128>}, {pipeline_mode = #tpu.pipeline_mode<synchronous>, transform_indices = @transform_1, window_bounds = array<i64: 1, 128>}, {pipeline_mode = #tpu.pipeline_mode<synchronous>, transform_indices = @transform_2, window_bounds = array<i64: 1, 128>}, {pipeline_mode = #tpu.pipeline_mode<synchronous>, transform_indices = @transform_3, window_bounds = array<i64: 1152, 128>}, {transform_indices = @transform_4, window_bounds = array<i64: 1, 16, 16, 128>}, {transform_indices = @transform_5, window_bounds = array<i64: 1, 2, 128>}]} {
    %c0 = arith.constant 0 : index
    %c0_0 = arith.constant 0 : index
    %c0_1 = arith.constant 0 : index
    %c0_2 = arith.constant 0 : index
    %0 = vector.load %arg1[%c0, %c0_0, %c0_1, %c0_2] : memref<1x16x16x128xf32, #tpu.memory_space<vmem>>, vector<1x16x16x128xf32>
    %1 = vector.shape_cast %0 : vector<1x16x16x128xf32> to vector<256x128xf32>
    %c0_3 = arith.constant 0 : index
    %c0_4 = arith.constant 0 : index
    %2 = vector.load %arg2[%c0_3, %c0_4] : memref<1x128xf32, #tpu.memory_space<vmem>>, vector<1x128xf32>
    %3 = vector.broadcast %2 : vector<1x128xf32> to vector<256x128xf32>
    %4 = arith.mulf %1, %3 : vector<256x128xf32>
    %c0_5 = arith.constant 0 : index
    %c0_6 = arith.constant 0 : index
    %5 = vector.load %arg3[%c0_5, %c0_6] : memref<1x128xf32, #tpu.memory_space<vmem>>, vector<1x128xf32>
    %6 = vector.broadcast %5 : vector<1x128xf32> to vector<256x128xf32>
    %7 = arith.addf %4, %6 : vector<256x128xf32>
    %cst = arith.constant 0.000000e+00 : f32
    %8 = vector.broadcast %cst : f32 to vector<256x128xf32>
    %9 = arith.maximumf %7, %8 : vector<256x128xf32>
    %cst_7 = arith.constant 0.000000e+00 : bf16
    %10 = vector.broadcast %cst_7 : bf16 to vector<1x18x18x128xbf16>
    %c0_8 = arith.constant 0 : index
    %c0_9 = arith.constant 0 : index
    %c0_10 = arith.constant 0 : index
    %c0_11 = arith.constant 0 : index
    %11 = vector.load %arg7[%c0_8, %c0_9, %c0_10, %c0_11] : memref<1x18x18x128xbf16, #tpu.memory_space<vmem>>, vector<1x18x18x128xbf16>
    tpu.vector_store %arg7[%c0_8, %c0_9, %c0_10, %c0_11], %10 {strides = array<i32>} : memref<1x18x18x128xbf16, #tpu.memory_space<vmem>>, vector<1x18x18x128xbf16>,
    %12 = arith.truncf %9 : vector<256x128xf32> to vector<256x128xbf16>
    %13 = vector.shape_cast %12 : vector<256x128xbf16> to vector<1x16x16x128xbf16>
    %c0_12 = arith.constant 0 : index
    %c1 = arith.constant 1 : index
    %c1_13 = arith.constant 1 : index
    %c0_14 = arith.constant 0 : index
    %14 = vector.load %arg7[%c0_12, %c1, %c1_13, %c0_14] : memref<1x18x18x128xbf16, #tpu.memory_space<vmem>>, vector<1x16x16x128xbf16>
    tpu.vector_store %arg7[%c0_12, %c1, %c1_13, %c0_14], %13 {strides = array<i32>} : memref<1x18x18x128xbf16, #tpu.memory_space<vmem>>, vector<1x16x16x128xbf16>,
    %c0_15 = arith.constant 0 : index
    %c0_16 = arith.constant 0 : index
    %c0_17 = arith.constant 0 : index
    %c0_18 = arith.constant 0 : index
    %15 = vector.load %arg7[%c0_15, %c0_16, %c0_17, %c0_18] : memref<1x18x18x128xbf16, #tpu.memory_space<vmem>>, vector<1x18x18x128xbf16>
    %cst_19 = arith.constant 0.000000e+00 : f32
    %16 = vector.broadcast %cst_19 : f32 to vector<256x128xf32>
    %17 = vector.extract_strided_slice %15 {offsets = [0, 0, 0, 0], sizes = [1, 16, 16, 128], strides = [1, 1, 1, 1]} : vector<1x18x18x128xbf16> to vector<1x16x16x128xbf16>
    %18 = vector.shape_cast %17 : vector<1x16x16x128xbf16> to vector<256x128xbf16>
    %19 = vector.extract_strided_slice %15 {offsets = [0, 0, 1, 0], sizes = [1, 16, 16, 128], strides = [1, 1, 1, 1]} : vector<1x18x18x128xbf16> to vector<1x16x16x128xbf16>
    %20 = vector.shape_cast %19 : vector<1x16x16x128xbf16> to vector<256x128xbf16>
    %21 = tpu.concatenate %18, %20 in 1 : vector<256x128xbf16>, vector<256x128xbf16> -> vector<256x256xbf16>
    %c0_20 = arith.constant 0 : index
    %c0_21 = arith.constant 0 : index
    %22 = vector.load %arg4[%c0_20, %c0_21] : memref<1152x128xbf16, #tpu.memory_space<vmem>>, vector<256x128xbf16>
    %cst_22 = arith.constant dense<0.000000e+00> : vector<256x128xf32>
    %23 = tpu.matmul %21, %22, %cst_22 {dimension_numbers = #tpu.dot_dimension_numbers<[1], [0], [0], [1], [0, 0, 1, 1], [], []>} : vector<256x256xbf16>, vector<256x128xbf16>, vector<256x128xf32> -> vector<256x128xf32>
    %24 = arith.addf %16, %23 : vector<256x128xf32>
    %25 = vector.extract_strided_slice %15 {offsets = [0, 0, 2, 0], sizes = [1, 16, 16, 128], strides = [1, 1, 1, 1]} : vector<1x18x18x128xbf16> to vector<1x16x16x128xbf16>
    %26 = vector.shape_cast %25 : vector<1x16x16x128xbf16> to vector<256x128xbf16>
    %27 = vector.extract_strided_slice %15 {offsets = [0, 1, 0, 0], sizes = [1, 16, 16, 128], strides = [1, 1, 1, 1]} : vector<1x18x18x128xbf16> to vector<1x16x16x128xbf16>
    %28 = vector.shape_cast %27 : vector<1x16x16x128xbf16> to vector<256x128xbf16>
    %29 = tpu.concatenate %26, %28 in 1 : vector<256x128xbf16>, vector<256x128xbf16> -> vector<256x256xbf16>
    %c256 = arith.constant 256 : index
    %c0_23 = arith.constant 0 : index
    %30 = vector.load %arg4[%c256, %c0_23] : memref<1152x128xbf16, #tpu.memory_space<vmem>>, vector<256x128xbf16>
    %cst_24 = arith.constant dense<0.000000e+00> : vector<256x128xf32>
    %31 = tpu.matmul %29, %30, %cst_24 {dimension_numbers = #tpu.dot_dimension_numbers<[1], [0], [0], [1], [0, 0, 1, 1], [], []>} : vector<256x256xbf16>, vector<256x128xbf16>, vector<256x128xf32> -> vector<256x128xf32>
    %32 = arith.addf %24, %31 : vector<256x128xf32>
    %33 = vector.extract_strided_slice %15 {offsets = [0, 1, 1, 0], sizes = [1, 16, 16, 128], strides = [1, 1, 1, 1]} : vector<1x18x18x128xbf16> to vector<1x16x16x128xbf16>
    %34 = vector.shape_cast %33 : vector<1x16x16x128xbf16> to vector<256x128xbf16>
    %35 = vector.extract_strided_slice %15 {offsets = [0, 1, 2, 0], sizes = [1, 16, 16, 128], strides = [1, 1, 1, 1]} : vector<1x18x18x128xbf16> to vector<1x16x16x128xbf16>
    %36 = vector.shape_cast %35 : vector<1x16x16x128xbf16> to vector<256x128xbf16>
    %37 = tpu.concatenate %34, %36 in 1 : vector<256x128xbf16>, vector<256x128xbf16> -> vector<256x256xbf16>
    %c512 = arith.constant 512 : index
    %c0_25 = arith.constant 0 : index
    %38 = vector.load %arg4[%c512, %c0_25] : memref<1152x128xbf16, #tpu.memory_space<vmem>>, vector<256x128xbf16>
    %cst_26 = arith.constant dense<0.000000e+00> : vector<256x128xf32>
    %39 = tpu.matmul %37, %38, %cst_26 {dimension_numbers = #tpu.dot_dimension_numbers<[1], [0], [0], [1], [0, 0, 1, 1], [], []>} : vector<256x256xbf16>, vector<256x128xbf16>, vector<256x128xf32> -> vector<256x128xf32>
    %40 = arith.addf %32, %39 : vector<256x128xf32>
    %41 = vector.extract_strided_slice %15 {offsets = [0, 2, 0, 0], sizes = [1, 16, 16, 128], strides = [1, 1, 1, 1]} : vector<1x18x18x128xbf16> to vector<1x16x16x128xbf16>
    %42 = vector.shape_cast %41 : vector<1x16x16x128xbf16> to vector<256x128xbf16>
    %43 = vector.extract_strided_slice %15 {offsets = [0, 2, 1, 0], sizes = [1, 16, 16, 128], strides = [1, 1, 1, 1]} : vector<1x18x18x128xbf16> to vector<1x16x16x128xbf16>
    %44 = vector.shape_cast %43 : vector<1x16x16x128xbf16> to vector<256x128xbf16>
    %45 = tpu.concatenate %42, %44 in 1 : vector<256x128xbf16>, vector<256x128xbf16> -> vector<256x256xbf16>
    %c768 = arith.constant 768 : index
    %c0_27 = arith.constant 0 : index
    %46 = vector.load %arg4[%c768, %c0_27] : memref<1152x128xbf16, #tpu.memory_space<vmem>>, vector<256x128xbf16>
    %cst_28 = arith.constant dense<0.000000e+00> : vector<256x128xf32>
    %47 = tpu.matmul %45, %46, %cst_28 {dimension_numbers = #tpu.dot_dimension_numbers<[1], [0], [0], [1], [0, 0, 1, 1], [], []>} : vector<256x256xbf16>, vector<256x128xbf16>, vector<256x128xf32> -> vector<256x128xf32>
    %48 = arith.addf %40, %47 : vector<256x128xf32>
    %49 = vector.extract_strided_slice %15 {offsets = [0, 2, 2, 0], sizes = [1, 16, 16, 128], strides = [1, 1, 1, 1]} : vector<1x18x18x128xbf16> to vector<1x16x16x128xbf16>
    %50 = vector.shape_cast %49 : vector<1x16x16x128xbf16> to vector<256x128xbf16>
    %c1024 = arith.constant 1024 : index
    %c0_29 = arith.constant 0 : index
    %51 = vector.load %arg4[%c1024, %c0_29] : memref<1152x128xbf16, #tpu.memory_space<vmem>>, vector<128x128xbf16>
    %cst_30 = arith.constant dense<0.000000e+00> : vector<256x128xf32>
    %52 = tpu.matmul %50, %51, %cst_30 {dimension_numbers = #tpu.dot_dimension_numbers<[1], [0], [0], [1], [0, 0, 1, 1], [], []>} : vector<256x128xbf16>, vector<128x128xbf16>, vector<256x128xf32> -> vector<256x128xf32>
    %53 = arith.addf %48, %52 : vector<256x128xf32>
    %54 = vector.shape_cast %53 : vector<256x128xf32> to vector<1x16x16x128xf32>
    %c0_31 = arith.constant 0 : index
    %c0_32 = arith.constant 0 : index
    %c0_33 = arith.constant 0 : index
    %c0_34 = arith.constant 0 : index
    %55 = vector.load %arg5[%c0_31, %c0_32, %c0_33, %c0_34] : memref<1x16x16x128xf32, #tpu.memory_space<vmem>>, vector<1x16x16x128xf32>
    tpu.vector_store %arg5[%c0_31, %c0_32, %c0_33, %c0_34], %54 {strides = array<i32>} : memref<1x16x16x128xf32, #tpu.memory_space<vmem>>, vector<1x16x16x128xf32>,
    %cst_35 = arith.constant dense<0.000000e+00> : vector<128xf32>
    %56 = vector.multi_reduction <add>, %53, %cst_35 [0] : vector<256x128xf32> to vector<128xf32>
    %57 = vector.shape_cast %56 : vector<128xf32> to vector<1x128xf32>
    %cst_36 = arith.constant 3.906250e-03 : f32
    %58 = vector.broadcast %cst_36 : f32 to vector<1x128xf32>
    %59 = arith.mulf %57, %58 : vector<1x128xf32>
    %60 = vector.broadcast %59 : vector<1x128xf32> to vector<256x128xf32>
    %61 = arith.subf %53, %60 : vector<256x128xf32>
    %62 = arith.mulf %61, %61 : vector<256x128xf32>
    %cst_37 = arith.constant dense<0.000000e+00> : vector<128xf32>
    %63 = vector.multi_reduction <add>, %62, %cst_37 [0] : vector<256x128xf32> to vector<128xf32>
    %64 = vector.shape_cast %63 : vector<128xf32> to vector<1x128xf32>
    %65 = tpu.concatenate %57, %64 in 0 : vector<1x128xf32>, vector<1x128xf32> -> vector<2x128xf32>
    %66 = vector.shape_cast %65 : vector<2x128xf32> to vector<1x2x128xf32>
    %c0_38 = arith.constant 0 : index
    %c0_39 = arith.constant 0 : index
    %c0_40 = arith.constant 0 : index
    %67 = vector.load %arg6[%c0_38, %c0_39, %c0_40] : memref<1x2x128xf32, #tpu.memory_space<vmem>>, vector<1x2x128xf32>
    tpu.vector_store %arg6[%c0_38, %c0_39, %c0_40], %66 {strides = array<i32>} : memref<1x2x128xf32, #tpu.memory_space<vmem>>, vector<1x2x128xf32>,
    return
  }
  func.func @transform_0(%arg0: i32) -> (i32, i32, i32, i32) {
    %c0_i32 = arith.constant 0 : i32
    %c0_i32_0 = arith.constant 0 : i32
    %c0_i32_1 = arith.constant 0 : i32
    %c0_i32_2 = arith.constant 0 : i32
    return %arg0, %c0_i32, %c0_i32_0, %c0_i32_1 : i32, i32, i32, i32
  }
  func.func @transform_1(%arg0: i32) -> (i32, i32) {
    %c0_i32 = arith.constant 0 : i32
    %c0_i32_0 = arith.constant 0 : i32
    %c0_i32_1 = arith.constant 0 : i32
    return %c0_i32, %c0_i32_0 : i32, i32
  }
  func.func @transform_2(%arg0: i32) -> (i32, i32) {
    %c0_i32 = arith.constant 0 : i32
    %c0_i32_0 = arith.constant 0 : i32
    %c0_i32_1 = arith.constant 0 : i32
    return %c0_i32, %c0_i32_0 : i32, i32
  }
  func.func @transform_3(%arg0: i32) -> (i32, i32) {
    %c0_i32 = arith.constant 0 : i32
    %c0_i32_0 = arith.constant 0 : i32
    %c0_i32_1 = arith.constant 0 : i32
    return %c0_i32, %c0_i32_0 : i32, i32
  }
  func.func @transform_4(%arg0: i32) -> (i32, i32, i32, i32) {
    %c0_i32 = arith.constant 0 : i32
    %c0_i32_0 = arith.constant 0 : i32
    %c0_i32_1 = arith.constant 0 : i32
    %c0_i32_2 = arith.constant 0 : i32
    return %arg0, %c0_i32, %c0_i32_0, %c0_i32_1 : i32, i32, i32, i32
  }
  func.func @transform_5(%arg0: i32) -> (i32, i32, i32) {
    %c0_i32 = arith.constant 0 : i32
    %c0_i32_0 = arith.constant 0 : i32
    %c0_i32_1 = arith.constant 0 : i32
    return %arg0, %c0_i32, %c0_i32_0 : i32, i32, i32
  }
}

module attributes {stable_mosaic.version = 11 : i64} {
  func.func @_conv1x1_stats_kernel(%arg0: i32, %arg1: memref<256x128xf32, #tpu.memory_space<vmem>>, %arg2: memref<1x128xf32, #tpu.memory_space<vmem>>, %arg3: memref<1x128xf32, #tpu.memory_space<vmem>>, %arg4: memref<128x128xbf16, #tpu.memory_space<vmem>>, %arg5: memref<256x128xf32, #tpu.memory_space<vmem>>, %arg6: memref<1x2x128xf32, #tpu.memory_space<vmem>>) attributes {dimension_semantics = [#tpu.dimension_semantics<parallel>], iteration_bounds = array<i64: 2>, scalar_prefetch = 0 : i64, scratch_operands = 0 : i64, tpu.core_type = #tpu.core_type<tc>, window_params = [{transform_indices = @transform_0, window_bounds = array<i64: 256, 128>}, {pipeline_mode = #tpu.pipeline_mode<synchronous>, transform_indices = @transform_1, window_bounds = array<i64: 1, 128>}, {pipeline_mode = #tpu.pipeline_mode<synchronous>, transform_indices = @transform_2, window_bounds = array<i64: 1, 128>}, {pipeline_mode = #tpu.pipeline_mode<synchronous>, transform_indices = @transform_3, window_bounds = array<i64: 128, 128>}, {transform_indices = @transform_4, window_bounds = array<i64: 256, 128>}, {transform_indices = @transform_5, window_bounds = array<i64: 1, 2, 128>}]} {
    %c0 = arith.constant 0 : index
    %c0_0 = arith.constant 0 : index
    %0 = vector.load %arg1[%c0, %c0_0] : memref<256x128xf32, #tpu.memory_space<vmem>>, vector<256x128xf32>
    %c0_1 = arith.constant 0 : index
    %c0_2 = arith.constant 0 : index
    %1 = vector.load %arg2[%c0_1, %c0_2] : memref<1x128xf32, #tpu.memory_space<vmem>>, vector<1x128xf32>
    %2 = vector.broadcast %1 : vector<1x128xf32> to vector<256x128xf32>
    %3 = arith.mulf %0, %2 : vector<256x128xf32>
    %c0_3 = arith.constant 0 : index
    %c0_4 = arith.constant 0 : index
    %4 = vector.load %arg3[%c0_3, %c0_4] : memref<1x128xf32, #tpu.memory_space<vmem>>, vector<1x128xf32>
    %5 = vector.broadcast %4 : vector<1x128xf32> to vector<256x128xf32>
    %6 = arith.addf %3, %5 : vector<256x128xf32>
    %cst = arith.constant 0.000000e+00 : f32
    %7 = vector.broadcast %cst : f32 to vector<256x128xf32>
    %8 = arith.maximumf %6, %7 : vector<256x128xf32>
    %9 = arith.truncf %8 : vector<256x128xf32> to vector<256x128xbf16>
    %c0_5 = arith.constant 0 : index
    %c0_6 = arith.constant 0 : index
    %10 = vector.load %arg4[%c0_5, %c0_6] : memref<128x128xbf16, #tpu.memory_space<vmem>>, vector<128x128xbf16>
    %cst_7 = arith.constant dense<0.000000e+00> : vector<256x128xf32>
    %11 = tpu.matmul %9, %10, %cst_7 {dimension_numbers = #tpu.dot_dimension_numbers<[1], [0], [0], [1], [0, 0, 1, 1], [], []>} : vector<256x128xbf16>, vector<128x128xbf16>, vector<256x128xf32> -> vector<256x128xf32>
    %c0_8 = arith.constant 0 : index
    %c0_9 = arith.constant 0 : index
    %12 = vector.load %arg5[%c0_8, %c0_9] : memref<256x128xf32, #tpu.memory_space<vmem>>, vector<256x128xf32>
    tpu.vector_store %arg5[%c0_8, %c0_9], %11 {strides = array<i32>} : memref<256x128xf32, #tpu.memory_space<vmem>>, vector<256x128xf32>,
    %cst_10 = arith.constant dense<0.000000e+00> : vector<128xf32>
    %13 = vector.multi_reduction <add>, %11, %cst_10 [0] : vector<256x128xf32> to vector<128xf32>
    %14 = vector.shape_cast %13 : vector<128xf32> to vector<1x128xf32>
    %cst_11 = arith.constant 3.906250e-03 : f32
    %15 = vector.broadcast %cst_11 : f32 to vector<1x128xf32>
    %16 = arith.mulf %14, %15 : vector<1x128xf32>
    %17 = vector.broadcast %16 : vector<1x128xf32> to vector<256x128xf32>
    %18 = arith.subf %11, %17 : vector<256x128xf32>
    %19 = arith.mulf %18, %18 : vector<256x128xf32>
    %cst_12 = arith.constant dense<0.000000e+00> : vector<128xf32>
    %20 = vector.multi_reduction <add>, %19, %cst_12 [0] : vector<256x128xf32> to vector<128xf32>
    %21 = vector.shape_cast %20 : vector<128xf32> to vector<1x128xf32>
    %22 = tpu.concatenate %14, %21 in 0 : vector<1x128xf32>, vector<1x128xf32> -> vector<2x128xf32>
    %23 = vector.shape_cast %22 : vector<2x128xf32> to vector<1x2x128xf32>
    %c0_13 = arith.constant 0 : index
    %c0_14 = arith.constant 0 : index
    %c0_15 = arith.constant 0 : index
    %24 = vector.load %arg6[%c0_13, %c0_14, %c0_15] : memref<1x2x128xf32, #tpu.memory_space<vmem>>, vector<1x2x128xf32>
    tpu.vector_store %arg6[%c0_13, %c0_14, %c0_15], %23 {strides = array<i32>} : memref<1x2x128xf32, #tpu.memory_space<vmem>>, vector<1x2x128xf32>,
    return
  }
  func.func @transform_0(%arg0: i32) -> (i32, i32) {
    %c0_i32 = arith.constant 0 : i32
    %c0_i32_0 = arith.constant 0 : i32
    return %arg0, %c0_i32 : i32, i32
  }
  func.func @transform_1(%arg0: i32) -> (i32, i32) {
    %c0_i32 = arith.constant 0 : i32
    %c0_i32_0 = arith.constant 0 : i32
    %c0_i32_1 = arith.constant 0 : i32
    return %c0_i32, %c0_i32_0 : i32, i32
  }
  func.func @transform_2(%arg0: i32) -> (i32, i32) {
    %c0_i32 = arith.constant 0 : i32
    %c0_i32_0 = arith.constant 0 : i32
    %c0_i32_1 = arith.constant 0 : i32
    return %c0_i32, %c0_i32_0 : i32, i32
  }
  func.func @transform_3(%arg0: i32) -> (i32, i32) {
    %c0_i32 = arith.constant 0 : i32
    %c0_i32_0 = arith.constant 0 : i32
    %c0_i32_1 = arith.constant 0 : i32
    return %c0_i32, %c0_i32_0 : i32, i32
  }
  func.func @transform_4(%arg0: i32) -> (i32, i32) {
    %c0_i32 = arith.constant 0 : i32
    %c0_i32_0 = arith.constant 0 : i32
    return %arg0, %c0_i32 : i32, i32
  }
  func.func @transform_5(%arg0: i32) -> (i32, i32, i32) {
    %c0_i32 = arith.constant 0 : i32
    %c0_i32_0 = arith.constant 0 : i32
    %c0_i32_1 = arith.constant 0 : i32
    return %arg0, %c0_i32, %c0_i32_0 : i32, i32, i32
  }
}

module attributes {stable_mosaic.version = 11 : i64} {
  func.func @_bn_residual_relu_kernel(%arg0: i32, %arg1: memref<256x128xf32, #tpu.memory_space<vmem>>, %arg2: memref<1x128xf32, #tpu.memory_space<vmem>>, %arg3: memref<1x128xf32, #tpu.memory_space<vmem>>, %arg4: memref<256x128xf32, #tpu.memory_space<vmem>>, %arg5: memref<256x128xf32, #tpu.memory_space<vmem>>) attributes {dimension_semantics = [#tpu.dimension_semantics<parallel>], iteration_bounds = array<i64: 2>, scalar_prefetch = 0 : i64, scratch_operands = 0 : i64, tpu.core_type = #tpu.core_type<tc>, window_params = [{transform_indices = @transform_0, window_bounds = array<i64: 256, 128>}, {pipeline_mode = #tpu.pipeline_mode<synchronous>, transform_indices = @transform_1, window_bounds = array<i64: 1, 128>}, {pipeline_mode = #tpu.pipeline_mode<synchronous>, transform_indices = @transform_2, window_bounds = array<i64: 1, 128>}, {transform_indices = @transform_3, window_bounds = array<i64: 256, 128>}, {transform_indices = @transform_4, window_bounds = array<i64: 256, 128>}]} {
    %c0 = arith.constant 0 : index
    %c0_0 = arith.constant 0 : index
    %0 = vector.load %arg1[%c0, %c0_0] : memref<256x128xf32, #tpu.memory_space<vmem>>, vector<256x128xf32>
    %c0_1 = arith.constant 0 : index
    %c0_2 = arith.constant 0 : index
    %1 = vector.load %arg2[%c0_1, %c0_2] : memref<1x128xf32, #tpu.memory_space<vmem>>, vector<1x128xf32>
    %2 = vector.broadcast %1 : vector<1x128xf32> to vector<256x128xf32>
    %3 = arith.mulf %0, %2 : vector<256x128xf32>
    %c0_3 = arith.constant 0 : index
    %c0_4 = arith.constant 0 : index
    %4 = vector.load %arg3[%c0_3, %c0_4] : memref<1x128xf32, #tpu.memory_space<vmem>>, vector<1x128xf32>
    %5 = vector.broadcast %4 : vector<1x128xf32> to vector<256x128xf32>
    %6 = arith.addf %3, %5 : vector<256x128xf32>
    %c0_5 = arith.constant 0 : index
    %c0_6 = arith.constant 0 : index
    %7 = vector.load %arg4[%c0_5, %c0_6] : memref<256x128xf32, #tpu.memory_space<vmem>>, vector<256x128xf32>
    %8 = arith.addf %6, %7 : vector<256x128xf32>
    %cst = arith.constant 0.000000e+00 : f32
    %9 = vector.broadcast %cst : f32 to vector<256x128xf32>
    %10 = arith.maximumf %8, %9 : vector<256x128xf32>
    %c0_7 = arith.constant 0 : index
    %c0_8 = arith.constant 0 : index
    %11 = vector.load %arg5[%c0_7, %c0_8] : memref<256x128xf32, #tpu.memory_space<vmem>>, vector<256x128xf32>
    tpu.vector_store %arg5[%c0_7, %c0_8], %10 {strides = array<i32>} : memref<256x128xf32, #tpu.memory_space<vmem>>, vector<256x128xf32>,
    return
  }
  func.func @transform_0(%arg0: i32) -> (i32, i32) {
    %c0_i32 = arith.constant 0 : i32
    %c0_i32_0 = arith.constant 0 : i32
    return %arg0, %c0_i32 : i32, i32
  }
  func.func @transform_1(%arg0: i32) -> (i32, i32) {
    %c0_i32 = arith.constant 0 : i32
    %c0_i32_0 = arith.constant 0 : i32
    %c0_i32_1 = arith.constant 0 : i32
    return %c0_i32, %c0_i32_0 : i32, i32
  }
  func.func @transform_2(%arg0: i32) -> (i32, i32) {
    %c0_i32 = arith.constant 0 : i32
    %c0_i32_0 = arith.constant 0 : i32
    %c0_i32_1 = arith.constant 0 : i32
    return %c0_i32, %c0_i32_0 : i32, i32
  }
  func.func @transform_3(%arg0: i32) -> (i32, i32) {
    %c0_i32 = arith.constant 0 : i32
    %c0_i32_0 = arith.constant 0 : i32
    return %arg0, %c0_i32 : i32, i32
  }
  func.func @transform_4(%arg0: i32) -> (i32, i32) {
    %c0_i32 = arith.constant 0 : i32
    %c0_i32_0 = arith.constant 0 : i32
    return %arg0, %c0_i32 : i32, i32
  }
}

</mosaic_0001>

<llo_original>
// kernel: _bottleneck_impl.4
$region0: #{_bottleneck_impl.4}
  #allocation0 [shape = 'u32[]', space=smem, size = 0x4, offset = 0x4, fixed_abs, tag = 'smem constant byte address 0x4 - core index']
  #allocation1 [shape = 'u32[144,128]{1,0:T(1,128)}', space=vmem, size = 0x12000, scoped, tag = 'internal scratch']
  %s0 = inlined_call_operand.vmem [shape: f32[512,128], index: 0, kind: input, shape index: {}]
  %s1 = inlined_call_operand.vmem [shape: f32[1,128], index: 1, kind: input, shape index: {}]
  %s2 = inlined_call_operand.vmem [shape: f32[1,128], index: 2, kind: input, shape index: {}]
  %s3 = inlined_call_operand.vmem [shape: bf16[128,128], index: 3, kind: input, shape index: {}]
  %s4 = inlined_call_operand.vmem [shape: f32[512,128], index: 4, kind: output, shape index: {0}]
  %s5 = inlined_call_operand.vmem [shape: f32[2,2,128], index: 5, kind: output, shape index: {1}]
  %6 = xla_tuple %s4, %s5
  %s7 = sld [smem:[#allocation0]]
  $region57: #{_bottleneck_impl.4} parent=0
    _
  %s9 = ssub.s32 1, %s7
  %s10 = scalar_select 0, %s9, %s7
  loop: start=0, step=1, limit=4
  $region2: #{_bottleneck_impl.4} parent=0 // loop_pre_header
    _
  $region3: #{_bottleneck_impl.4} parent=0 // loop_header
    %s12 = sphi 0, %s16
    %p13 = scmp.ge.s32.totalorder %s12, 4
    %s22 = sphi 0, %s24
    %s25 = sphi 0, %s22
    %s26 = sphi 0, %s25
    %s42 = sphi 0, %s26
    %s46 = sphi 0, %s46
    %s48 = sphi 0, %s46
    %s49 = sphi 0, %s48
    %s63 = sphi 0, %s49
    %s67 = sphi 0, %s67
    %s69 = sphi 0, %s67
    %s70 = sphi 0, %s69
    %s84 = sphi 0, %s70
    %s88 = sphi 0, %s88
    %s90 = sphi 0, %s88
    %s91 = sphi 0, %s90
    %s105 = sphi 0, %s91
    %s111 = sphi 0, %s113
    %s114 = sphi 0, %s111
    %s115 = sphi 0, %s114
    %s131 = sphi 0, %s115
    %s137 = sphi 0, %s139
    %s140 = sphi 0, %s137
    %s141 = sphi 0, %s140
    %s157 = sphi 0, %s141
  $region4: #{_bottleneck_impl.4} parent=0 // loop_header_branch
    %15 = sbr.rel (%p13) target = $region8
  $region5: #{_bottleneck_impl.4} parent=0 // loop_body
    %s17 = ssub.s32 %s12, 1
    %s18 = ssub.s32 %s12, 2
    %s19 = sadd.s32 %s12, 1
    %s20 = ssub.s32 %s12, %s19
    %p21 = scmp.eq.s32.totalorder %s20, 0
    %s23 = sadd.s32 %s22, 1
    %s24 = scalar_select %p21, %s22, %s23
    %p27 = pneg %p21
    %p28 = scmp.eq.s32.totalorder %s12, 1
    %p29 = por %p27, %p28
    %p30 = scmp.ne.s32.totalorder %s22, %s25
    %p31 = scmp.eq.s32.totalorder %s12, 0
    %p32 = por %p30, %p31
    %p33 = scmp.ne.s32.totalorder %s22, %s25
    %p34 = scmp.eq.s32.totalorder %s17, 1
    %p35 = por %p33, %p34
    %p36 = scmp.ne.s32.totalorder %s25, %s26
    %p37 = scmp.eq.s32.totalorder %s17, 0
    %p38 = por %p36, %p37
    %p39 = scmp.ne.s32.totalorder %s25, %s26
    %p40 = scmp.eq.s32.totalorder %s18, 1
    %p41 = por %p39, %p40
    %p43 = scmp.ne.s32.totalorder %s26, %s42
    %p44 = scmp.eq.s32.totalorder %s18, 0
    %p45 = por %p43, %p44
    %s47 = sadd.s32 %s46, 1
    %p50 = scmp.eq.s32.totalorder %s12, 1
    %p51 = scmp.ne.s32.totalorder %s46, %s48
    %p52 = scmp.eq.s32.totalorder %s12, 0
    %p53 = por %p51, %p52
    %p54 = scmp.ne.s32.totalorder %s46, %s48
    %p55 = scmp.eq.s32.totalorder %s17, 1
    %p56 = por %p54, %p55
    %p57 = scmp.ne.s32.totalorder %s48, %s49
    %p58 = scmp.eq.s32.totalorder %s17, 0
    %p59 = por %p57, %p58
    %p60 = scmp.ne.s32.totalorder %s48, %s49
    %p61 = scmp.eq.s32.totalorder %s18, 1
    %p62 = por %p60, %p61
    %p64 = scmp.ne.s32.totalorder %s49, %s63
    %p65 = scmp.eq.s32.totalorder %s18, 0
    %p66 = por %p64, %p65
    %s68 = sadd.s32 %s67, 1
    %p71 = scmp.eq.s32.totalorder %s12, 1
    %p72 = scmp.ne.s32.totalorder %s67, %s69
    %p73 = scmp.eq.s32.totalorder %s12, 0
    %p74 = por %p72, %p73
    %p75 = scmp.ne.s32.totalorder %s67, %s69
    %p76 = scmp.eq.s32.totalorder %s17, 1
    %p77 = por %p75, %p76
    %p78 = scmp.ne.s32.totalorder %s69, %s70
    %p79 = scmp.eq.s32.totalorder %s17, 0
    %p80 = por %p78, %p79
    %p81 = scmp.ne.s32.totalorder %s69, %s70
    %p82 = scmp.eq.s32.totalorder %s18, 1
    %p83 = por %p81, %p82
    %p85 = scmp.ne.s32.totalorder %s70, %s84
    %p86 = scmp.eq.s32.totalorder %s18, 0
    %p87 = por %p85, %p86
    %s89 = sadd.s32 %s88, 1
    %p92 = scmp.eq.s32.totalorder %s12, 1
    %p93 = scmp.ne.s32.totalorder %s88, %s90
    %p94 = scmp.eq.s32.totalorder %s12, 0
    %p95 = por %p93, %p94
    %p96 = scmp.ne.s32.totalorder %s88, %s90
    %p97 = scmp.eq.s32.totalorder %s17, 1
    %p98 = por %p96, %p97
    %p99 = scmp.ne.s32.totalorder %s90, %s91
    %p100 = scmp.eq.s32.totalorder %s17, 0
    %p101 = por %p99, %p100
    %p102 = scmp.ne.s32.totalorder %s90, %s91
    %p103 = scmp.eq.s32.totalorder %s18, 1
    %p104 = por %p102, %p103
    %p106 = scmp.ne.s32.totalorder %s91, %s105
    %p107 = scmp.eq.s32.totalorder %s18, 0
    %p108 = por %p106, %p107
    %s109 = ssub.s32 %s12, %s19
    %p110 = scmp.eq.s32.totalorder %s109, 0
    %s112 = sadd.s32 %s111, 1
    %s113 = scalar_select %p110, %s111, %s112
    %p116 = pneg %p110
    %p117 = scmp.eq.s32.totalorder %s12, 1
    %p118 = por %p116, %p117
    %p119 = scmp.ne.s32.totalorder %s111, %s114
    %p120 = scmp.eq.s32.totalorder %s12, 0
    %p121 = por %p119, %p120
    %p122 = scmp.ne.s32.totalorder %s111, %s114
    %p123 = scmp.eq.s32.totalorder %s17, 1
    %p124 = por %p122, %p123
    %p125 = scmp.ne.s32.totalorder %s114, %s115
    %p126 = scmp.eq.s32.totalorder %s17, 0
    %p127 = por %p125, %p126
    %p128 = scmp.ne.s32.totalorder %s114, %s115
    %p129 = scmp.eq.s32.totalorder %s18, 1
    %p130 = por %p128, %p129
    %p132 = scmp.ne.s32.totalorder %s115, %s131
    %p133 = scmp.eq.s32.totalorder %s18, 0
    %p134 = por %p132, %p133
    %s135 = ssub.s32 %s12, %s19
    %p136 = scmp.eq.s32.totalorder %s135, 0
    %s138 = sadd.s32 %s137, 1
    %s139 = scalar_select %p136, %s137, %s138
    %p142 = pneg %p136
    %p143 = scmp.eq.s32.totalorder %s12, 1
    %p144 = por %p142, %p143
    %p145 = scmp.ne.s32.totalorder %s137, %s140
    %p146 = scmp.eq.s32.totalorder %s12, 0
    %p147 = por %p145, %p146
    %p148 = scmp.ne.s32.totalorder %s137, %s140
    %p149 = scmp.eq.s32.totalorder %s17, 1
    %p150 = por %p148, %p149
    %p151 = scmp.ne.s32.totalorder %s140, %s141
    %p152 = scmp.eq.s32.totalorder %s17, 0
    %p153 = por %p151, %p152
    %p154 = scmp.ne.s32.totalorder %s140, %s141
    %p155 = scmp.eq.s32.totalorder %s18, 1
    %p156 = por %p154, %p155
    %p158 = scmp.ne.s32.totalorder %s141, %s157
    %p159 = scmp.eq.s32.totalorder %s18, 0
    %p160 = por %p158, %p159
    %p161 = scmp.le.s32.totalorder 1, %s12
    %p162 = scmp.lt.s32.totalorder %s12, 3
    %p163 = pnand %p161, %p162
    %p164 = pneg %p163
    // Predicated region
    $region9: #{_bottleneck_impl.4} parent=5 // pred_check
      _
    $region10: #{_bottleneck_impl.4} parent=5 // pred_check_branch
      %166 = sbr.rel (%p163) target = $region12
    $region11: #{_bottleneck_impl.4} parent=5 // pred_region
      %s167 = ssub.s32 %s12, 1
      // Predicated region
      $region13: #{_bottleneck_impl.4} parent=11 // pred_check
        %p168 = pneg %p59
      $region14: #{_bottleneck_impl.4} parent=11 // pred_check_branch
        %170 = sbr.rel (%p168) target = $region16
      $region15: #{_bottleneck_impl.4} parent=11 // pred_region
        _
      $region16: #{_bottleneck_impl.4} parent=11 // pred_fallthru
        _
      // Predicated region
      $region17: #{_bottleneck_impl.4} parent=11 // pred_check
        %p171 = pneg %p80
      $region18: #{_bottleneck_impl.4} parent=11 // pred_check_branch
        %173 = sbr.rel (%p171) target = $region20
      $region19: #{_bottleneck_impl.4} parent=11 // pred_region
        _
      $region20: #{_bottleneck_impl.4} parent=11 // pred_fallthru
        _
      // Predicated region
      $region21: #{_bottleneck_impl.4} parent=11 // pred_check
        %p174 = pneg %p101
      $region22: #{_bottleneck_impl.4} parent=11 // pred_check_branch
        %176 = sbr.rel (%p174) target = $region24
      $region23: #{_bottleneck_impl.4} parent=11 // pred_region
        _
      $region24: #{_bottleneck_impl.4} parent=11 // pred_fallthru
        _
    $region12: #{_bottleneck_impl.4} parent=5 // pred_fallthru
      _
    %p177 = scmp.lt.s32.totalorder %s12, 2
    // Predicated region
    $region25: #{_bottleneck_impl.4} parent=5 // pred_check
      %p178 = pneg %p177
    $region26: #{_bottleneck_impl.4} parent=5 // pred_check_branch
      %180 = sbr.rel (%p178) target = $region28
    $region27: #{_bottleneck_impl.4} parent=5 // pred_region
      // Predicated region
      $region29: #{_bottleneck_impl.4} parent=27 // pred_check
        %p181 = pneg %p32
      $region30: #{_bottleneck_impl.4} parent=27 // pred_check_branch
        %183 = sbr.rel (%p181) target = $region32
      $region31: #{_bottleneck_impl.4} parent=27 // pred_region
        %s184 = smul.u32 32, %s12
        %p185 = scmp.lt.s32.totalorder %s184, 63
        %s186 = scalar_select %p185, %s184, 63
        %s187 = smul.addr %s186, 8
        %s188 = scalar_lea.vmem %s0, %s187
        %s189 = smul.u32 32, %s12
      $region32: #{_bottleneck_impl.4} parent=27 // pred_fallthru
        _
    $region28: #{_bottleneck_impl.4} parent=5 // pred_fallthru
      _
    %p190 = scmp.le.s32.totalorder 1, %s12
    %p191 = scmp.lt.s32.totalorder %s12, 3
    %p192 = pnand %p190, %p191
    %p193 = pneg %p192
    // Predicated region
    $region33: #{_bottleneck_impl.4} parent=5 // pred_check
      _
    $region34: #{_bottleneck_impl.4} parent=5 // pred_check_branch
      %195 = sbr.rel (%p192) target = $region36
    $region35: #{_bottleneck_impl.4} parent=5 // pred_region
      %s196 = ssub.s32 %s12, 1
      %s197 = smul.u32 32, %s17
      %p198 = scmp.lt.s32.totalorder %s197, 63
      %s199 = scalar_select %p198, %s197, 63
      %s200 = smul.addr %s199, 8
      %s201 = scalar_lea.vmem %s0, %s200
      %p202 = pneg %p38
      %p203 = pneg %p35
      %p204 = pneg %p59
      %p205 = pneg %p56
      %p206 = pneg %p80
      %p207 = pneg %p77
      %p208 = pneg %p101
      %p209 = pneg %p98
      %p210 = pneg %p127
      %p211 = pneg %p124
      %s212 = smul.u32 32, %s17
      %p213 = scmp.lt.s32.totalorder %s212, 63
      %s214 = scalar_select %p213, %s212, 63
      %s215 = smul.addr %s214, 8
      %s216 = scalar_lea.vmem %s4, %s215
      %p217 = pneg %p153
      %p218 = pneg %p150
      %p219 = scmp.lt.s32.totalorder %s17, 1
      %s220 = scalar_select %p219, %s17, 1
      %s221 = smul.addr %s220, 2
      %s222 = scalar_lea.vmem %s5, %s221
      %s223 = smul.u32 32, %s17
      %p224 = scmp.lt.s32.totalorder %s223, 63
      %s225 = scalar_select %p224, %s223, 63
      %s226 = smul.addr %s225, 8
      %s227 = scalar_lea.vmem %s0, %s226
      %s228 = smul.u32 32, %s17
      %s229 = smul.u32 32, %s17
      %p230 = scmp.lt.s32.totalorder %s229, 63
      %s231 = scalar_select %p230, %s229, 63
      %s232 = smul.addr %s231, 8
      %s233 = scalar_lea.vmem %s4, %s232
      %s234 = smul.u32 32, %s17
      %p235 = scmp.lt.s32.totalorder %s17, 1
      %s236 = scalar_select %p235, %s17, 1
      %s237 = smul.addr %s236, 2
      %s238 = scalar_lea.vmem %s5, %s237
      %v240 = vld [vmem:[%s227] sm:$0xff]
      %v241 = vld [vmem:[%s227 + $0x8] sm:$0xff]
      %v242 = vld [vmem:[%s227 + $0x10] sm:$0xff]
      %v243 = vld [vmem:[%s227 + $0x18] sm:$0xff]
      %v244 = vld [vmem:[%s227 + $0x20] sm:$0xff]
      %v245 = vld [vmem:[%s227 + $0x28] sm:$0xff]
      %v246 = vld [vmem:[%s227 + $0x30] sm:$0xff]
      %v247 = vld [vmem:[%s227 + $0x38] sm:$0xff]
      %v248 = vld [vmem:[%s227 + $0x40] sm:$0xff]
      %v249 = vld [vmem:[%s227 + $0x48] sm:$0xff]
      %v250 = vld [vmem:[%s227 + $0x50] sm:$0xff]
      %v251 = vld [vmem:[%s227 + $0x58] sm:$0xff]
      %v252 = vld [vmem:[%s227 + $0x60] sm:$0xff]
      %v253 = vld [vmem:[%s227 + $0x68] sm:$0xff]
      %v254 = vld [vmem:[%s227 + $0x70] sm:$0xff]
      %v255 = vld [vmem:[%s227 + $0x78] sm:$0xff]
      %v256 = vld [vmem:[%s227 + $0x80] sm:$0xff]
      %v257 = vld [vmem:[%s227 + $0x88] sm:$0xff]
      %v258 = vld [vmem:[%s227 + $0x90] sm:$0xff]
      %v259 = vld [vmem:[%s227 + $0x98] sm:$0xff]
      %v260 = vld [vmem:[%s227 + $0xa0] sm:$0xff]
      %v261 = vld [vmem:[%s227 + $0xa8] sm:$0xff]
      %v262 = vld [vmem:[%s227 + $0xb0] sm:$0xff]
      %v263 = vld [vmem:[%s227 + $0xb8] sm:$0xff]
      %v264 = vld [vmem:[%s227 + $0xc0] sm:$0xff]
      %v265 = vld [vmem:[%s227 + $0xc8] sm:$0xff]
      %v266 = vld [vmem:[%s227 + $0xd0] sm:$0xff]
      %v267 = vld [vmem:[%s227 + $0xd8] sm:$0xff]
      %v268 = vld [vmem:[%s227 + $0xe0] sm:$0xff]
      %v269 = vld [vmem:[%s227 + $0xe8] sm:$0xff]
      %v270 = vld [vmem:[%s227 + $0xf0] sm:$0xff]
      %v271 = vld [vmem:[%s227 + $0xf8] sm:$0xff]
      %v272 = vpack.c.bf16 %v241, %v240
      %v273 = vpack.c.bf16 %v243, %v242
      %v274 = vpack.c.bf16 %v245, %v244
      %v275 = vpack.c.bf16 %v247, %v246
      %v276 = vpack.c.bf16 %v249, %v248
      %v277 = vpack.c.bf16 %v251, %v250
      %v278 = vpack.c.bf16 %v253, %v252
      %v279 = vpack.c.bf16 %v255, %v254
      %v280 = vpack.c.bf16 %v257, %v256
      %v281 = vpack.c.bf16 %v259, %v258
      %v282 = vpack.c.bf16 %v261, %v260
      %v283 = vpack.c.bf16 %v263, %v262
      %v284 = vpack.c.bf16 %v265, %v264
      %v285 = vpack.c.bf16 %v267, %v266
      %v286 = vpack.c.bf16 %v269, %v268
      %v287 = vpack.c.bf16 %v271, %v270
      %v288 = vld [vmem:[%s3] sm:$0xf]
      %v289 = vld [vmem:[%s3 + $0x4] sm:$0xf]
      %v290 = vld [vmem:[%s3 + $0x8] sm:$0xf]
      %v291 = vld [vmem:[%s3 + $0xc] sm:$0xf]
      %v292 = vld [vmem:[%s3 + $0x10] sm:$0xf]
      %v293 = vld [vmem:[%s3 + $0x14] sm:$0xf]
      %v294 = vld [vmem:[%s3 + $0x18] sm:$0xf]
      %v295 = vld [vmem:[%s3 + $0x1c] sm:$0xf]
      %v296 = vld [vmem:[%s3 + $0x20] sm:$0xf]
      %v297 = vld [vmem:[%s3 + $0x24] sm:$0xf]
      %v298 = vld [vmem:[%s3 + $0x28] sm:$0xf]
      %v299 = vld [vmem:[%s3 + $0x2c] sm:$0xf]
      %v300 = vld [vmem:[%s3 + $0x30] sm:$0xf]
      %v301 = vld [vmem:[%s3 + $0x34] sm:$0xf]
      %v302 = vld [vmem:[%s3 + $0x38] sm:$0xf]
      %v303 = vld [vmem:[%s3 + $0x3c] sm:$0xf]
      %v320 = vunpack.c.l.b16 %v288
      %v321 = vunpack.c.l.b16 %v289
      %v322 = vunpack.c.l.b16 %v290
      %v323 = vunpack.c.l.b16 %v291
      %v324 = vunpack.c.l.b16 %v292
      %v325 = vunpack.c.l.b16 %v293
      %v326 = vunpack.c.l.b16 %v294
      %v327 = vunpack.c.l.b16 %v295
      %v328 = vunpack.c.l.b16 %v296
      %v329 = vunpack.c.l.b16 %v297
      %v330 = vunpack.c.l.b16 %v298
      %v331 = vunpack.c.l.b16 %v299
      %v332 = vunpack.c.l.b16 %v300
      %v333 = vunpack.c.l.b16 %v301
      %v334 = vunpack.c.l.b16 %v302
      %v335 = vunpack.c.l.b16 %v303
      %v336 = vpack.c.b16 %v321, %v320
      %v337 = vpack.c.b16 %v323, %v322
      %v338 = vpack.c.b16 %v325, %v324
      %v339 = vpack.c.b16 %v327, %v326
      %v340 = vpack.c.b16 %v329, %v328
      %v341 = vpack.c.b16 %v331, %v330
      %v342 = vpack.c.b16 %v333, %v332
      %v343 = vpack.c.b16 %v335, %v334
      %352 = vmatprep.subr.bf16.mxu0 0
      %353 = vmatpush1.bf16.msra.mxu0 %v336
      %354 = vmatprep.subr.bf16.mxu0 0
      %355 = vmatpush1.bf16.msra.mxu0 %v337
      %356 = vmatprep.subr.bf16.mxu0 0
      %357 = vmatpush1.bf16.msra.mxu0 %v338
      %358 = vmatprep.subr.bf16.mxu0 0
      %359 = vmatpush1.bf16.msra.mxu0 %v339
      %360 = vmatprep.subr.bf16.mxu0 0
      %361 = vmatpush1.bf16.msra.mxu0 %v340
      %362 = vmatprep.subr.bf16.mxu0 0
      %363 = vmatpush1.bf16.msra.mxu0 %v341
      %364 = vmatprep.subr.bf16.mxu0 0
      %365 = vmatpush1.bf16.msra.mxu0 %v342
      %366 = vmatprep.subr.bf16.mxu0 0
      %367 = vmatpush1.bf16.msra.mxu0 %v343
      %368 = vmatprep.subr.bf16.mxu0 0
      %369 = vmatpush1.bf16.msra.mxu0 0
      %370 = vmatprep.subr.bf16.mxu0 0
      %371 = vmatpush1.bf16.msra.mxu0 0
      %372 = vmatprep.subr.bf16.mxu0 0
      %373 = vmatpush1.bf16.msra.mxu0 0
      %374 = vmatprep.subr.bf16.mxu0 0
      %375 = vmatpush1.bf16.msra.mxu0 0
      %376 = vmatprep.subr.bf16.mxu0 0
      %377 = vmatpush1.bf16.msra.mxu0 0
      %378 = vmatprep.subr.bf16.mxu0 0
      %379 = vmatpush1.bf16.msra.mxu0 0
      %380 = vmatprep.subr.bf16.mxu0 0
      %381 = vmatpush1.bf16.msra.mxu0 0
      %382 = vmatprep.subr.bf16.mxu0 0
      %383 = vmatpush1.bf16.msra.mxu0 0
      %384 = vmatprep.mubr.bf16.mxu0 0
      %385 = vmatmul.mubr.bf16.gmra.mrb[0].mxu0 %v272
      %v386 = vpop.f32.mrb[0].mxu0
      %v387 = vadd.f32 0.0, %v386
      %v388 = vpop.f32.mrb[0].mxu0
      %v389 = vpop.f32.mrb[0].mxu0
      %v390 = vadd.f32 0.0, %v389
      %v391 = vpop.f32.mrb[0].mxu0
      %392 = vmatprep.mubr.bf16.mxu0 0
      %393 = vmatmul.mubr.bf16.gmra.mrb[0].mxu0 %v273
      %v394 = vpop.f32.mrb[0].mxu0
      %v395 = vadd.f32 0.0, %v394
      %v396 = vpop.f32.mrb[0].mxu0
      %v397 = vpop.f32.mrb[0].mxu0
      %v398 = vadd.f32 0.0, %v397
      %v399 = vpop.f32.mrb[0].mxu0
      %400 = vmatprep.mubr.bf16.mxu0 0
      %401 = vmatmul.mubr.bf16.gmra.mrb[0].mxu0 %v274
      %v402 = vpop.f32.mrb[0].mxu0
      %v403 = vadd.f32 0.0, %v402
      %v404 = vpop.f32.mrb[0].mxu0
      %v405 = vpop.f32.mrb[0].mxu0
      %v406 = vadd.f32 0.0, %v405
      %v407 = vpop.f32.mrb[0].mxu0
      %408 = vmatprep.mubr.bf16.mxu0 0
      %409 = vmatmul.mubr.bf16.gmra.mrb[0].mxu0 %v275
      %v410 = vpop.f32.mrb[0].mxu0
      %v411 = vadd.f32 0.0, %v410
      %v412 = vpop.f32.mrb[0].mxu0
      %v413 = vpop.f32.mrb[0].mxu0
      %v414 = vadd.f32 0.0, %v413
      %v415 = vpop.f32.mrb[0].mxu0
      %416 = vmatprep.mubr.bf16.mxu0 0
      %417 = vmatmul.mubr.bf16.gmra.mrb[0].mxu0 %v276
      %v418 = vpop.f32.mrb[0].mxu0
      %v419 = vadd.f32 0.0, %v418
      %v420 = vpop.f32.mrb[0].mxu0
      %v421 = vpop.f32.mrb[0].mxu0
      %v422 = vadd.f32 0.0, %v421
      %v423 = vpop.f32.mrb[0].mxu0
      %424 = vmatprep.mubr.bf16.mxu0 0
      %425 = vmatmul.mubr.bf16.gmra.mrb[0].mxu0 %v277
      %v426 = vpop.f32.mrb[0].mxu0
      %v427 = vadd.f32 0.0, %v426
      %v428 = vpop.f32.mrb[0].mxu0
      %v429 = vpop.f32.mrb[0].mxu0
      %v430 = vadd.f32 0.0, %v429
      %v431 = vpop.f32.mrb[0].mxu0
      %432 = vmatprep.mubr.bf16.mxu0 0
      %433 = vmatmul.mubr.bf16.gmra.mrb[0].mxu0 %v278
      %v434 = vpop.f32.mrb[0].mxu0
      %v435 = vadd.f32 0.0, %v434
      %v436 = vpop.f32.mrb[0].mxu0
      %v437 = vpop.f32.mrb[0].mxu0
      %v438 = vadd.f32 0.0, %v437
      %v439 = vpop.f32.mrb[0].mxu0
      %440 = vmatprep.mubr.bf16.mxu0 0
      %441 = vmatmul.mubr.bf16.gmra.mrb[0].mxu0 %v279
      %v442 = vpop.f32.mrb[0].mxu0
      %v443 = vadd.f32 0.0, %v442
      %v444 = vpop.f32.mrb[0].mxu0
      %v445 = vpop.f32.mrb[0].mxu0
      %v446 = vadd.f32 0.0, %v445
      %v447 = vpop.f32.mrb[0].mxu0
      %448 = vmatprep.mubr.bf16.mxu0 0
      %449 = vmatmul.mubr.bf16.gmra.mrb[0].mxu0 %v280
      %v450 = vpop.f32.mrb[0].mxu0
      %v451 = vadd.f32 0.0, %v450
      %v452 = vpop.f32.mrb[0].mxu0
      %v453 = vpop.f32.mrb[0].mxu0
      %v454 = vadd.f32 0.0, %v453
      %v455 = vpop.f32.mrb[0].mxu0
      %456 = vmatprep.mubr.bf16.mxu0 0
      %457 = vmatmul.mubr.bf16.gmra.mrb[0].mxu0 %v281
      %v458 = vpop.f32.mrb[0].mxu0
      %v459 = vadd.f32 0.0, %v458
      %v460 = vpop.f32.mrb[0].mxu0
      %v461 = vpop.f32.mrb[0].mxu0
      %v462 = vadd.f32 0.0, %v461
      %v463 = vpop.f32.mrb[0].mxu0
      %464 = vmatprep.mubr.bf16.mxu0 0
      %465 = vmatmul.mubr.bf16.gmra.mrb[0].mxu0 %v282
      %v466 = vpop.f32.mrb[0].mxu0
      %v467 = vadd.f32 0.0, %v466
      %v468 = vpop.f32.mrb[0].mxu0
      %v469 = vpop.f32.mrb[0].mxu0
      %v470 = vadd.f32 0.0, %v469
      %v471 = vpop.f32.mrb[0].mxu0
      %472 = vmatprep.mubr.bf16.mxu0 0
      %473 = vmatmul.mubr.bf16.gmra.mrb[0].mxu0 %v283
      %v474 = vpop.f32.mrb[0].mxu0
      %v475 = vadd.f32 0.0, %v474
      %v476 = vpop.f32.mrb[0].mxu0
      %v477 = vpop.f32.mrb[0].mxu0
      %v478 = vadd.f32 0.0, %v477
      %v479 = vpop.f32.mrb[0].mxu0
      %480 = vmatprep.mubr.bf16.mxu0 0
      %481 = vmatmul.mubr.bf16.gmra.mrb[0].mxu0 %v284
      %v482 = vpop.f32.mrb[0].mxu0
      %v483 = vadd.f32 0.0, %v482
      %v484 = vpop.f32.mrb[0].mxu0
      %v485 = vpop.f32.mrb[0].mxu0
      %v486 = vadd.f32 0.0, %v485
      %v487 = vpop.f32.mrb[0].mxu0
      %488 = vmatprep.mubr.bf16.mxu0 0
      %489 = vmatmul.mubr.bf16.gmra.mrb[0].mxu0 %v285
      %v490 = vpop.f32.mrb[0].mxu0
      %v491 = vadd.f32 0.0, %v490
      %v492 = vpop.f32.mrb[0].mxu0
      %v493 = vpop.f32.mrb[0].mxu0
      %v494 = vadd.f32 0.0, %v493
      %v495 = vpop.f32.mrb[0].mxu0
      %496 = vmatprep.mubr.bf16.mxu0 0
      %497 = vmatmul.mubr.bf16.gmra.mrb[0].mxu0 %v286
      %v498 = vpop.f32.mrb[0].mxu0
      %v499 = vadd.f32 0.0, %v498
      %v500 = vpop.f32.mrb[0].mxu0
      %v501 = vpop.f32.mrb[0].mxu0
      %v502 = vadd.f32 0.0, %v501
      %v503 = vpop.f32.mrb[0].mxu0
      %504 = vmatprep.mubr.bf16.mxu0 0
      %505 = vmatmul.mubr.bf16.gmra.mrb[0].mxu0 %v287
      %v506 = vpop.f32.mrb[0].mxu0
      %v507 = vadd.f32 0.0, %v506
      %v508 = vpop.f32.mrb[0].mxu0
      %v509 = vpop.f32.mrb[0].mxu0
      %v510 = vadd.f32 0.0, %v509
      %v511 = vpop.f32.mrb[0].mxu0
      %512 = vdwg.mxu0
      %513 = vst [vmem:[%s233] sm:$0xff] %v387
      %514 = vst [vmem:[%s233 + $0x8] sm:$0xff] %v390
      %515 = vst [vmem:[%s233 + $0x10] sm:$0xff] %v395
      %516 = vst [vmem:[%s233 + $0x18] sm:$0xff] %v398
      %517 = vst [vmem:[%s233 + $0x20] sm:$0xff] %v403
      %518 = vst [vmem:[%s233 + $0x28] sm:$0xff] %v406
      %519 = vst [vmem:[%s233 + $0x30] sm:$0xff] %v411
      %520 = vst [vmem:[%s233 + $0x38] sm:$0xff] %v414
      %521 = vst [vmem:[%s233 + $0x40] sm:$0xff] %v419
      %522 = vst [vmem:[%s233 + $0x48] sm:$0xff] %v422
      %523 = vst [vmem:[%s233 + $0x50] sm:$0xff] %v427
      %524 = vst [vmem:[%s233 + $0x58] sm:$0xff] %v430
      %525 = vst [vmem:[%s233 + $0x60] sm:$0xff] %v435
      %526 = vst [vmem:[%s233 + $0x68] sm:$0xff] %v438
      %527 = vst [vmem:[%s233 + $0x70] sm:$0xff] %v443
      %528 = vst [vmem:[%s233 + $0x78] sm:$0xff] %v446
      %529 = vst [vmem:[%s233 + $0x80] sm:$0xff] %v451
      %530 = vst [vmem:[%s233 + $0x88] sm:$0xff] %v454
      %531 = vst [vmem:[%s233 + $0x90] sm:$0xff] %v459
      %532 = vst [vmem:[%s233 + $0x98] sm:$0xff] %v462
      %533 = vst [vmem:[%s233 + $0xa0] sm:$0xff] %v467
      %534 = vst [vmem:[%s233 + $0xa8] sm:$0xff] %v470
      %535 = vst [vmem:[%s233 + $0xb0] sm:$0xff] %v475
      %536 = vst [vmem:[%s233 + $0xb8] sm:$0xff] %v478
      %537 = vst [vmem:[%s233 + $0xc0] sm:$0xff] %v483
      %538 = vst [vmem:[%s233 + $0xc8] sm:$0xff] %v486
      %539 = vst [vmem:[%s233 + $0xd0] sm:$0xff] %v491
      %540 = vst [vmem:[%s233 + $0xd8] sm:$0xff] %v494
      %541 = vst [vmem:[%s233 + $0xe0] sm:$0xff] %v499
      %542 = vst [vmem:[%s233 + $0xe8] sm:$0xff] %v502
      %543 = vst [vmem:[%s233 + $0xf0] sm:$0xff] %v507
      %544 = vst [vmem:[%s233 + $0xf8] sm:$0xff] %v510
      %v545 = vadd.f32 %v387, %v390
      %v546 = vadd.f32 %v545, %v395
      %v547 = vadd.f32 %v546, %v398
      %v548 = vadd.f32 %v547, %v403
      %v549 = vadd.f32 %v548, %v406
      %v550 = vadd.f32 %v549, %v411
      %v551 = vadd.f32 %v550, %v414
      %v552 = vadd.f32 %v551, %v419
      %v553 = vadd.f32 %v552, %v422
      %v554 = vadd.f32 %v553, %v427
      %v555 = vadd.f32 %v554, %v430
      %v556 = vadd.f32 %v555, %v435
      %v557 = vadd.f32 %v556, %v438
      %v558 = vadd.f32 %v557, %v443
      %v559 = vadd.f32 %v558, %v446
      %v560 = vadd.f32 %v559, %v451
      %v561 = vadd.f32 %v560, %v454
      %v562 = vadd.f32 %v561, %v459
      %v563 = vadd.f32 %v562, %v462
      %v564 = vadd.f32 %v563, %v467
      %v565 = vadd.f32 %v564, %v470
      %v566 = vadd.f32 %v565, %v475
      %v567 = vadd.f32 %v566, %v478
      %v568 = vadd.f32 %v567, %v483
      %v569 = vadd.f32 %v568, %v486
      %v570 = vadd.f32 %v569, %v491
      %v571 = vadd.f32 %v570, %v494
      %v572 = vadd.f32 %v571, %v499
      %v573 = vadd.f32 %v572, %v502
      %v574 = vadd.f32 %v573, %v507
      %v575 = vadd.f32 %v574, %v510
      %v576 = vrot.slane %v575, 4
      %v577 = vadd.f32 %v575, %v576
      %v578 = vrot.slane %v577, 2
      %v579 = vadd.f32 %v577, %v578
      %v580 = vrot.slane %v579, 1
      %v581 = vadd.f32 %v579, %v580
      %v582 = vmul.f32 %v581, 0.00390625
      %v583 = vsub.f32 %v387, %v582
      %v584 = vsub.f32 %v390, %v582
      %v585 = vsub.f32 %v395, %v582
      %v586 = vsub.f32 %v398, %v582
      %v587 = vsub.f32 %v403, %v582
      %v588 = vsub.f32 %v406, %v582
      %v589 = vsub.f32 %v411, %v582
      %v590 = vsub.f32 %v414, %v582
      %v591 = vsub.f32 %v419, %v582
      %v592 = vsub.f32 %v422, %v582
      %v593 = vsub.f32 %v427, %v582
      %v594 = vsub.f32 %v430, %v582
      %v595 = vsub.f32 %v435, %v582
      %v596 = vsub.f32 %v438, %v582
      %v597 = vsub.f32 %v443, %v582
      %v598 = vsub.f32 %v446, %v582
      %v599 = vsub.f32 %v451, %v582
      %v600 = vsub.f32 %v454, %v582
      %v601 = vsub.f32 %v459, %v582
      %v602 = vsub.f32 %v462, %v582
      %v603 = vsub.f32 %v467, %v582
      %v604 = vsub.f32 %v470, %v582
      %v605 = vsub.f32 %v475, %v582
      %v606 = vsub.f32 %v478, %v582
      %v607 = vsub.f32 %v483, %v582
      %v608 = vsub.f32 %v486, %v582
      %v609 = vsub.f32 %v491, %v582
      %v610 = vsub.f32 %v494, %v582
      %v611 = vsub.f32 %v499, %v582
      %v612 = vsub.f32 %v502, %v582
      %v613 = vsub.f32 %v507, %v582
      %v614 = vsub.f32 %v510, %v582
      %v615 = vmul.f32 %v583, %v583
      %v616 = vmul.f32 %v584, %v584
      %v617 = vmul.f32 %v585, %v585
      %v618 = vmul.f32 %v586, %v586
      %v619 = vmul.f32 %v587, %v587
      %v620 = vmul.f32 %v588, %v588
      %v621 = vmul.f32 %v589, %v589
      %v622 = vmul.f32 %v590, %v590
      %v623 = vmul.f32 %v591, %v591
      %v624 = vmul.f32 %v592, %v592
      %v625 = vmul.f32 %v593, %v593
      %v626 = vmul.f32 %v594, %v594
      %v627 = vmul.f32 %v595, %v595
      %v628 = vmul.f32 %v596, %v596
      %v629 = vmul.f32 %v597, %v597
      %v630 = vmul.f32 %v598, %v598
      %v631 = vmul.f32 %v599, %v599
      %v632 = vmul.f32 %v600, %v600
      %v633 = vmul.f32 %v601, %v601
      %v634 = vmul.f32 %v602, %v602
      %v635 = vmul.f32 %v603, %v603
      %v636 = vmul.f32 %v604, %v604
      %v637 = vmul.f32 %v605, %v605
      %v638 = vmul.f32 %v606, %v606
      %v639 = vmul.f32 %v607, %v607
      %v640 = vmul.f32 %v608, %v608
      %v641 = vmul.f32 %v609, %v609
      %v642 = vmul.f32 %v610, %v610
      %v643 = vmul.f32 %v611, %v611
      %v644 = vmul.f32 %v612, %v612
      %v645 = vmul.f32 %v613, %v613
      %v646 = vmul.f32 %v614, %v614
      %v647 = vadd.f32 %v615, %v616
      %v648 = vadd.f32 %v647, %v617
      %v649 = vadd.f32 %v648, %v618
      %v650 = vadd.f32 %v649, %v619
      %v651 = vadd.f32 %v650, %v620
      %v652 = vadd.f32 %v651, %v621
      %v653 = vadd.f32 %v652, %v622
      %v654 = vadd.f32 %v653, %v623
      %v655 = vadd.f32 %v654, %v624
      %v656 = vadd.f32 %v655, %v625
      %v657 = vadd.f32 %v656, %v626
      %v658 = vadd.f32 %v657, %v627
      %v659 = vadd.f32 %v658, %v628
      %v660 = vadd.f32 %v659, %v629
      %v661 = vadd.f32 %v660, %v630
      %v662 = vadd.f32 %v661, %v631
      %v663 = vadd.f32 %v662, %v632
      %v664 = vadd.f32 %v663, %v633
      %v665 = vadd.f32 %v664, %v634
      %v666 = vadd.f32 %v665, %v635
      %v667 = vadd.f32 %v666, %v636
      %v668 = vadd.f32 %v667, %v637
      %v669 = vadd.f32 %v668, %v638
      %v670 = vadd.f32 %v669, %v639
      %v671 = vadd.f32 %v670, %v640
      %v672 = vadd.f32 %v671, %v641
      %v673 = vadd.f32 %v672, %v642
      %v674 = vadd.f32 %v673, %v643
      %v675 = vadd.f32 %v674, %v644
      %v676 = vadd.f32 %v675, %v645
      %v677 = vadd.f32 %v676, %v646
      %v678 = vrot.slane %v677, 4
      %v679 = vadd.f32 %v677, %v678
      %v680 = vrot.slane %v679, 2
      %v681 = vadd.f32 %v679, %v680
      %v682 = vrot.slane %v681, 1
      %v683 = vadd.f32 %v681, %v682
      %vm684 = vcmask 1040384
      %v685 = vsel %vm684, %v581, %v683
      %686 = vst [vmem:[%s238] sm:$0x3] %v685
      %s687 = smul.u32 32, %s17
      %p688 = scmp.lt.s32.totalorder %s687, 63
      %s689 = scalar_select %p688, %s687, 63
      %s690 = smul.addr %s689, 8
      %s691 = scalar_lea.vmem %s4, %s690
      %p692 = scmp.lt.s32.totalorder %s17, 1
      %s693 = scalar_select %p692, %s17, 1
      %s694 = smul.addr %s693, 2
      %s695 = scalar_lea.vmem %s5, %s694
      // Predicated region
      $region37: #{_bottleneck_impl.4} parent=35 // pred_check
        %p696 = pneg %p124
      $region38: #{_bottleneck_impl.4} parent=35 // pred_check_branch
        %698 = sbr.rel (%p696) target = $region40
      $region39: #{_bottleneck_impl.4} parent=35 // pred_region
        %s699 = smul.u32 32, %s17
      $region40: #{_bottleneck_impl.4} parent=35 // pred_fallthru
        _
      // Predicated region
      $region41: #{_bottleneck_impl.4} parent=35 // pred_check
        %p700 = pneg %p150
      $region42: #{_bottleneck_impl.4} parent=35 // pred_check_branch
        %702 = sbr.rel (%p700) target = $region44
      $region43: #{_bottleneck_impl.4} parent=35 // pred_region
        _
      $region44: #{_bottleneck_impl.4} parent=35 // pred_fallthru
        _
    $region36: #{_bottleneck_impl.4} parent=5 // pred_fallthru
      _
    %p703 = scmp.le.s32.totalorder 2, %s12
    // Predicated region
    $region45: #{_bottleneck_impl.4} parent=5 // pred_check
      %p704 = pneg %p703
    $region46: #{_bottleneck_impl.4} parent=5 // pred_check_branch
      %706 = sbr.rel (%p704) target = $region48
    $region47: #{_bottleneck_impl.4} parent=5 // pred_region
      %s707 = ssub.s32 %s12, 2
      // Predicated region
      $region49: #{_bottleneck_impl.4} parent=47 // pred_check
        %p708 = pneg %p130
      $region50: #{_bottleneck_impl.4} parent=47 // pred_check_branch
        %710 = sbr.rel (%p708) target = $region52
      $region51: #{_bottleneck_impl.4} parent=47 // pred_region
        %s711 = smul.u32 32, %s18
        %p712 = scmp.lt.s32.totalorder %s711, 63
        %s713 = scalar_select %p712, %s711, 63
        %s714 = smul.addr %s713, 8
        %s715 = scalar_lea.vmem %s4, %s714
      $region52: #{_bottleneck_impl.4} parent=47 // pred_fallthru
        _
      // Predicated region
      $region53: #{_bottleneck_impl.4} parent=47 // pred_check
        %p716 = pneg %p156
      $region54: #{_bottleneck_impl.4} parent=47 // pred_check_branch
        %718 = sbr.rel (%p716) target = $region56
      $region55: #{_bottleneck_impl.4} parent=47 // pred_region
        %p719 = scmp.lt.s32.totalorder %s18, 1
        %s720 = scalar_select %p719, %s18, 1
        %s721 = smul.addr %s720, 2
        %s722 = scalar_lea.vmem %s5, %s721
      $region56: #{_bottleneck_impl.4} parent=47 // pred_fallthru
        _
    $region48: #{_bottleneck_impl.4} parent=5 // pred_fallthru
      _
  $region6: #{_bottleneck_impl.4} parent=0 // loop_footer
    %s16 = sadd.s32 1, %s12
  $region7: #{_bottleneck_impl.4} parent=0 // loop_footer_branch
    %11 = sbr.rel target = $region3
  $region8: #{_bottleneck_impl.4} parent=0 // loop_exit
    _

// kernel: _bottleneck_impl.7
$region0: #{_bottleneck_impl.7}
  #allocation0 [shape = 'u32[]', space=smem, size = 0x4, offset = 0x4, fixed_abs, tag = 'smem constant byte address 0x4 - core index']
  #allocation1 [shape = 'u32[144,128]{1,0:T(1,128)}', space=vmem, size = 0x12000, scoped, tag = 'internal scratch']
  %s0 = inlined_call_operand.vmem [shape: f32[512,128], index: 0, kind: input, shape index: {}]
  %s1 = inlined_call_operand.vmem [shape: f32[1,128], index: 1, kind: input, shape index: {}]
  %s2 = inlined_call_operand.vmem [shape: f32[1,128], index: 2, kind: input, shape index: {}]
  %s3 = inlined_call_operand.vmem [shape: f32[512,128], index: 3, kind: input, shape index: {}]
  %s4 = inlined_call_operand.vmem [shape: f32[512,128], index: 4, kind: output, shape index: {}]
  %s5 = sld [smem:[#allocation0]]
  $region49: #{_bottleneck_impl.7} parent=0
    _
  %s7 = ssub.s32 1, %s5
  %s8 = scalar_select 0, %s7, %s5
  loop: start=0, step=1, limit=4
  $region2: #{_bottleneck_impl.7} parent=0 // loop_pre_header
    _
  $region3: #{_bottleneck_impl.7} parent=0 // loop_header
    %s10 = sphi 0, %s14
    %p11 = scmp.ge.s32.totalorder %s10, 4
    %s20 = sphi 0, %s22
    %s23 = sphi 0, %s20
    %s24 = sphi 0, %s23
    %s40 = sphi 0, %s24
    %s44 = sphi 0, %s44
    %s46 = sphi 0, %s44
    %s47 = sphi 0, %s46
    %s61 = sphi 0, %s47
    %s65 = sphi 0, %s65
    %s67 = sphi 0, %s65
    %s68 = sphi 0, %s67
    %s82 = sphi 0, %s68
    %s88 = sphi 0, %s90
    %s91 = sphi 0, %s88
    %s92 = sphi 0, %s91
    %s108 = sphi 0, %s92
    %s114 = sphi 0, %s116
    %s117 = sphi 0, %s114
    %s118 = sphi 0, %s117
    %s134 = sphi 0, %s118
  $region4: #{_bottleneck_impl.7} parent=0 // loop_header_branch
    %13 = sbr.rel (%p11) target = $region8
  $region5: #{_bottleneck_impl.7} parent=0 // loop_body
    %s15 = ssub.s32 %s10, 1
    %s16 = ssub.s32 %s10, 2
    %s17 = sadd.s32 %s10, 1
    %s18 = ssub.s32 %s10, %s17
    %p19 = scmp.eq.s32.totalorder %s18, 0
    %s21 = sadd.s32 %s20, 1
    %s22 = scalar_select %p19, %s20, %s21
    %p25 = pneg %p19
    %p26 = scmp.eq.s32.totalorder %s10, 1
    %p27 = por %p25, %p26
    %p28 = scmp.ne.s32.totalorder %s20, %s23
    %p29 = scmp.eq.s32.totalorder %s10, 0
    %p30 = por %p28, %p29
    %p31 = scmp.ne.s32.totalorder %s20, %s23
    %p32 = scmp.eq.s32.totalorder %s15, 1
    %p33 = por %p31, %p32
    %p34 = scmp.ne.s32.totalorder %s23, %s24
    %p35 = scmp.eq.s32.totalorder %s15, 0
    %p36 = por %p34, %p35
    %p37 = scmp.ne.s32.totalorder %s23, %s24
    %p38 = scmp.eq.s32.totalorder %s16, 1
    %p39 = por %p37, %p38
    %p41 = scmp.ne.s32.totalorder %s24, %s40
    %p42 = scmp.eq.s32.totalorder %s16, 0
    %p43 = por %p41, %p42
    %s45 = sadd.s32 %s44, 1
    %p48 = scmp.eq.s32.totalorder %s10, 1
    %p49 = scmp.ne.s32.totalorder %s44, %s46
    %p50 = scmp.eq.s32.totalorder %s10, 0
    %p51 = por %p49, %p50
    %p52 = scmp.ne.s32.totalorder %s44, %s46
    %p53 = scmp.eq.s32.totalorder %s15, 1
    %p54 = por %p52, %p53
    %p55 = scmp.ne.s32.totalorder %s46, %s47
    %p56 = scmp.eq.s32.totalorder %s15, 0
    %p57 = por %p55, %p56
    %p58 = scmp.ne.s32.totalorder %s46, %s47
    %p59 = scmp.eq.s32.totalorder %s16, 1
    %p60 = por %p58, %p59
    %p62 = scmp.ne.s32.totalorder %s47, %s61
    %p63 = scmp.eq.s32.totalorder %s16, 0
    %p64 = por %p62, %p63
    %s66 = sadd.s32 %s65, 1
    %p69 = scmp.eq.s32.totalorder %s10, 1
    %p70 = scmp.ne.s32.totalorder %s65, %s67
    %p71 = scmp.eq.s32.totalorder %s10, 0
    %p72 = por %p70, %p71
    %p73 = scmp.ne.s32.totalorder %s65, %s67
    %p74 = scmp.eq.s32.totalorder %s15, 1
    %p75 = por %p73, %p74
    %p76 = scmp.ne.s32.totalorder %s67, %s68
    %p77 = scmp.eq.s32.totalorder %s15, 0
    %p78 = por %p76, %p77
    %p79 = scmp.ne.s32.totalorder %s67, %s68
    %p80 = scmp.eq.s32.totalorder %s16, 1
    %p81 = por %p79, %p80
    %p83 = scmp.ne.s32.totalorder %s68, %s82
    %p84 = scmp.eq.s32.totalorder %s16, 0
    %p85 = por %p83, %p84
    %s86 = ssub.s32 %s10, %s17
    %p87 = scmp.eq.s32.totalorder %s86, 0
    %s89 = sadd.s32 %s88, 1
    %s90 = scalar_select %p87, %s88, %s89
    %p93 = pneg %p87
    %p94 = scmp.eq.s32.totalorder %s10, 1
    %p95 = por %p93, %p94
    %p96 = scmp.ne.s32.totalorder %s88, %s91
    %p97 = scmp.eq.s32.totalorder %s10, 0
    %p98 = por %p96, %p97
    %p99 = scmp.ne.s32.totalorder %s88, %s91
    %p100 = scmp.eq.s32.totalorder %s15, 1
    %p101 = por %p99, %p100
    %p102 = scmp.ne.s32.totalorder %s91, %s92
    %p103 = scmp.eq.s32.totalorder %s15, 0
    %p104 = por %p102, %p103
    %p105 = scmp.ne.s32.totalorder %s91, %s92
    %p106 = scmp.eq.s32.totalorder %s16, 1
    %p107 = por %p105, %p106
    %p109 = scmp.ne.s32.totalorder %s92, %s108
    %p110 = scmp.eq.s32.totalorder %s16, 0
    %p111 = por %p109, %p110
    %s112 = ssub.s32 %s10, %s17
    %p113 = scmp.eq.s32.totalorder %s112, 0
    %s115 = sadd.s32 %s114, 1
    %s116 = scalar_select %p113, %s114, %s115
    %p119 = pneg %p113
    %p120 = scmp.eq.s32.totalorder %s10, 1
    %p121 = por %p119, %p120
    %p122 = scmp.ne.s32.totalorder %s114, %s117
    %p123 = scmp.eq.s32.totalorder %s10, 0
    %p124 = por %p122, %p123
    %p125 = scmp.ne.s32.totalorder %s114, %s117
    %p126 = scmp.eq.s32.totalorder %s15, 1
    %p127 = por %p125, %p126
    %p128 = scmp.ne.s32.totalorder %s117, %s118
    %p129 = scmp.eq.s32.totalorder %s15, 0
    %p130 = por %p128, %p129
    %p131 = scmp.ne.s32.totalorder %s117, %s118
    %p132 = scmp.eq.s32.totalorder %s16, 1
    %p133 = por %p131, %p132
    %p135 = scmp.ne.s32.totalorder %s118, %s134
    %p136 = scmp.eq.s32.totalorder %s16, 0
    %p137 = por %p135, %p136
    %p138 = scmp.le.s32.totalorder 1, %s10
    %p139 = scmp.lt.s32.totalorder %s10, 3
    %p140 = pnand %p138, %p139
    %p141 = pneg %p140
    // Predicated region
    $region9: #{_bottleneck_impl.7} parent=5 // pred_check
      _
    $region10: #{_bottleneck_impl.7} parent=5 // pred_check_branch
      %143 = sbr.rel (%p140) target = $region12
    $region11: #{_bottleneck_impl.7} parent=5 // pred_region
      %s144 = ssub.s32 %s10, 1
      // Predicated region
      $region13: #{_bottleneck_impl.7} parent=11 // pred_check
        %p145 = pneg %p57
      $region14: #{_bottleneck_impl.7} parent=11 // pred_check_branch
        %147 = sbr.rel (%p145) target = $region16
      $region15: #{_bottleneck_impl.7} parent=11 // pred_region
        _
      $region16: #{_bottleneck_impl.7} parent=11 // pred_fallthru
        _
      // Predicated region
      $region17: #{_bottleneck_impl.7} parent=11 // pred_check
        %p148 = pneg %p78
      $region18: #{_bottleneck_impl.7} parent=11 // pred_check_branch
        %150 = sbr.rel (%p148) target = $region20
      $region19: #{_bottleneck_impl.7} parent=11 // pred_region
        _
      $region20: #{_bottleneck_impl.7} parent=11 // pred_fallthru
        _
    $region12: #{_bottleneck_impl.7} parent=5 // pred_fallthru
      _
    %p151 = scmp.lt.s32.totalorder %s10, 2
    // Predicated region
    $region21: #{_bottleneck_impl.7} parent=5 // pred_check
      %p152 = pneg %p151
    $region22: #{_bottleneck_impl.7} parent=5 // pred_check_branch
      %154 = sbr.rel (%p152) target = $region24
    $region23: #{_bottleneck_impl.7} parent=5 // pred_region
      // Predicated region
      $region25: #{_bottleneck_impl.7} parent=23 // pred_check
        %p155 = pneg %p30
      $region26: #{_bottleneck_impl.7} parent=23 // pred_check_branch
        %157 = sbr.rel (%p155) target = $region28
      $region27: #{_bottleneck_impl.7} parent=23 // pred_region
        %s158 = smul.u32 32, %s10
        %p159 = scmp.lt.s32.totalorder %s158, 63
        %s160 = scalar_select %p159, %s158, 63
        %s161 = smul.addr %s160, 8
        %s162 = scalar_lea.vmem %s0, %s161
        %s163 = smul.u32 32, %s10
      $region28: #{_bottleneck_impl.7} parent=23 // pred_fallthru
        _
      // Predicated region
      $region29: #{_bottleneck_impl.7} parent=23 // pred_check
        %p164 = pneg %p98
      $region30: #{_bottleneck_impl.7} parent=23 // pred_check_branch
        %166 = sbr.rel (%p164) target = $region32
      $region31: #{_bottleneck_impl.7} parent=23 // pred_region
        %s167 = smul.u32 32, %s10
        %p168 = scmp.lt.s32.totalorder %s167, 63
        %s169 = scalar_select %p168, %s167, 63
        %s170 = smul.addr %s169, 8
        %s171 = scalar_lea.vmem %s3, %s170
        %s172 = smul.u32 32, %s10
      $region32: #{_bottleneck_impl.7} parent=23 // pred_fallthru
        _
    $region24: #{_bottleneck_impl.7} parent=5 // pred_fallthru
      _
    %p173 = scmp.le.s32.totalorder 1, %s10
    %p174 = scmp.lt.s32.totalorder %s10, 3
    %p175 = pnand %p173, %p174
    %p176 = pneg %p175
    // Predicated region
    $region33: #{_bottleneck_impl.7} parent=5 // pred_check
      _
    $region34: #{_bottleneck_impl.7} parent=5 // pred_check_branch
      %178 = sbr.rel (%p175) target = $region36
    $region35: #{_bottleneck_impl.7} parent=5 // pred_region
      %s179 = ssub.s32 %s10, 1
      %s180 = smul.u32 32, %s15
      %p181 = scmp.lt.s32.totalorder %s180, 63
      %s182 = scalar_select %p181, %s180, 63
      %s183 = smul.addr %s182, 8
      %s184 = scalar_lea.vmem %s0, %s183
      %p185 = pneg %p36
      %p186 = pneg %p33
      %p187 = pneg %p57
      %p188 = pneg %p54
      %p189 = pneg %p78
      %p190 = pneg %p75
      %s191 = smul.u32 32, %s15
      %p192 = scmp.lt.s32.totalorder %s191, 63
      %s193 = scalar_select %p192, %s191, 63
      %s194 = smul.addr %s193, 8
      %s195 = scalar_lea.vmem %s3, %s194
      %p196 = pneg %p104
      %p197 = pneg %p101
      %p198 = pneg %p130
      %p199 = pneg %p127
      %s200 = smul.u32 32, %s15
      %p201 = scmp.lt.s32.totalorder %s200, 63
      %s202 = scalar_select %p201, %s200, 63
      %s203 = smul.addr %s202, 8
      %s204 = scalar_lea.vmem %s4, %s203
      %s205 = smul.u32 32, %s15
      %p206 = scmp.lt.s32.totalorder %s205, 63
      %s207 = scalar_select %p206, %s205, 63
      %s208 = smul.addr %s207, 8
      %s209 = scalar_lea.vmem %s0, %s208
      %s210 = smul.u32 32, %s15
      %s211 = smul.u32 32, %s15
      %p212 = scmp.lt.s32.totalorder %s211, 63
      %s213 = scalar_select %p212, %s211, 63
      %s214 = smul.addr %s213, 8
      %s215 = scalar_lea.vmem %s3, %s214
      %s216 = smul.u32 32, %s15
      %s217 = smul.u32 32, %s15
      %p218 = scmp.lt.s32.totalorder %s217, 63
      %s219 = scalar_select %p218, %s217, 63
      %s220 = smul.addr %s219, 8
      %s221 = scalar_lea.vmem %s4, %s220
      %s222 = smul.u32 32, %s15
      %v223 = vld [vmem:[%s209] sm:$0xff]
      %v224 = vld [vmem:[%s209 + $0x8] sm:$0xff]
      %v225 = vld [vmem:[%s209 + $0x10] sm:$0xff]
      %v226 = vld [vmem:[%s209 + $0x18] sm:$0xff]
      %v227 = vld [vmem:[%s209 + $0x20] sm:$0xff]
      %v228 = vld [vmem:[%s209 + $0x28] sm:$0xff]
      %v229 = vld [vmem:[%s209 + $0x30] sm:$0xff]
      %v230 = vld [vmem:[%s209 + $0x38] sm:$0xff]
      %v231 = vld [vmem:[%s209 + $0x40] sm:$0xff]
      %v232 = vld [vmem:[%s209 + $0x48] sm:$0xff]
      %v233 = vld [vmem:[%s209 + $0x50] sm:$0xff]
      %v234 = vld [vmem:[%s209 + $0x58] sm:$0xff]
      %v235 = vld [vmem:[%s209 + $0x60] sm:$0xff]
      %v236 = vld [vmem:[%s209 + $0x68] sm:$0xff]
      %v237 = vld [vmem:[%s209 + $0x70] sm:$0xff]
      %v238 = vld [vmem:[%s209 + $0x78] sm:$0xff]
      %v239 = vld [vmem:[%s209 + $0x80] sm:$0xff]
      %v240 = vld [vmem:[%s209 + $0x88] sm:$0xff]
      %v241 = vld [vmem:[%s209 + $0x90] sm:$0xff]
      %v242 = vld [vmem:[%s209 + $0x98] sm:$0xff]
      %v243 = vld [vmem:[%s209 + $0xa0] sm:$0xff]
      %v244 = vld [vmem:[%s209 + $0xa8] sm:$0xff]
      %v245 = vld [vmem:[%s209 + $0xb0] sm:$0xff]
      %v246 = vld [vmem:[%s209 + $0xb8] sm:$0xff]
      %v247 = vld [vmem:[%s209 + $0xc0] sm:$0xff]
      %v248 = vld [vmem:[%s209 + $0xc8] sm:$0xff]
      %v249 = vld [vmem:[%s209 + $0xd0] sm:$0xff]
      %v250 = vld [vmem:[%s209 + $0xd8] sm:$0xff]
      %v251 = vld [vmem:[%s209 + $0xe0] sm:$0xff]
      %v252 = vld [vmem:[%s209 + $0xe8] sm:$0xff]
      %v253 = vld [vmem:[%s209 + $0xf0] sm:$0xff]
      %v254 = vld [vmem:[%s209 + $0xf8] sm:$0xff]
      %v255 = vld [vmem:[%s1] sm:$0x1]
      %v257 = vlaneseq
      %v258 = vshrl.u32 %v257, 7
      %v259 = vsub.s32 0, %v258
      %v260 = vrot.slane %v255, %v259
      %v262 = vmul.f32 %v223, %v260
      %v263 = vmul.f32 %v224, %v260
      %v264 = vmul.f32 %v225, %v260
      %v265 = vmul.f32 %v226, %v260
      %v266 = vmul.f32 %v227, %v260
      %v267 = vmul.f32 %v228, %v260
      %v268 = vmul.f32 %v229, %v260
      %v269 = vmul.f32 %v230, %v260
      %v270 = vmul.f32 %v231, %v260
      %v271 = vmul.f32 %v232, %v260
      %v272 = vmul.f32 %v233, %v260
      %v273 = vmul.f32 %v234, %v260
      %v274 = vmul.f32 %v235, %v260
      %v275 = vmul.f32 %v236, %v260
      %v276 = vmul.f32 %v237, %v260
      %v277 = vmul.f32 %v238, %v260
      %v278 = vmul.f32 %v239, %v260
      %v279 = vmul.f32 %v240, %v260
      %v280 = vmul.f32 %v241, %v260
      %v281 = vmul.f32 %v242, %v260
      %v282 = vmul.f32 %v243, %v260
      %v283 = vmul.f32 %v244, %v260
      %v284 = vmul.f32 %v245, %v260
      %v285 = vmul.f32 %v246, %v260
      %v286 = vmul.f32 %v247, %v260
      %v287 = vmul.f32 %v248, %v260
      %v288 = vmul.f32 %v249, %v260
      %v289 = vmul.f32 %v250, %v260
      %v290 = vmul.f32 %v251, %v260
      %v291 = vmul.f32 %v252, %v260
      %v292 = vmul.f32 %v253, %v260
      %v293 = vmul.f32 %v254, %v260
      %v294 = vld [vmem:[%s2] sm:$0x1]
      %v296 = vlaneseq
      %v297 = vshrl.u32 %v296, 7
      %v298 = vsub.s32 0, %v297
      %v299 = vrot.slane %v294, %v298
      %v301 = vadd.f32 %v262, %v299
      %v302 = vadd.f32 %v263, %v299
      %v303 = vadd.f32 %v264, %v299
      %v304 = vadd.f32 %v265, %v299
      %v305 = vadd.f32 %v266, %v299
      %v306 = vadd.f32 %v267, %v299
      %v307 = vadd.f32 %v268, %v299
      %v308 = vadd.f32 %v269, %v299
      %v309 = vadd.f32 %v270, %v299
      %v310 = vadd.f32 %v271, %v299
      %v311 = vadd.f32 %v272, %v299
      %v312 = vadd.f32 %v273, %v299
      %v313 = vadd.f32 %v274, %v299
      %v314 = vadd.f32 %v275, %v299
      %v315 = vadd.f32 %v276, %v299
      %v316 = vadd.f32 %v277, %v299
      %v317 = vadd.f32 %v278, %v299
      %v318 = vadd.f32 %v279, %v299
      %v319 = vadd.f32 %v280, %v299
      %v320 = vadd.f32 %v281, %v299
      %v321 = vadd.f32 %v282, %v299
      %v322 = vadd.f32 %v283, %v299
      %v323 = vadd.f32 %v284, %v299
      %v324 = vadd.f32 %v285, %v299
      %v325 = vadd.f32 %v286, %v299
      %v326 = vadd.f32 %v287, %v299
      %v327 = vadd.f32 %v288, %v299
      %v328 = vadd.f32 %v289, %v299
      %v329 = vadd.f32 %v290, %v299
      %v330 = vadd.f32 %v291, %v299
      %v331 = vadd.f32 %v292, %v299
      %v332 = vadd.f32 %v293, %v299
      %v333 = vld [vmem:[%s215] sm:$0xff]
      %v334 = vld [vmem:[%s215 + $0x8] sm:$0xff]
      %v335 = vld [vmem:[%s215 + $0x10] sm:$0xff]
      %v336 = vld [vmem:[%s215 + $0x18] sm:$0xff]
      %v337 = vld [vmem:[%s215 + $0x20] sm:$0xff]
      %v338 = vld [vmem:[%s215 + $0x28] sm:$0xff]
      %v339 = vld [vmem:[%s215 + $0x30] sm:$0xff]
      %v340 = vld [vmem:[%s215 + $0x38] sm:$0xff]
      %v341 = vld [vmem:[%s215 + $0x40] sm:$0xff]
      %v342 = vld [vmem:[%s215 + $0x48] sm:$0xff]
      %v343 = vld [vmem:[%s215 + $0x50] sm:$0xff]
      %v344 = vld [vmem:[%s215 + $0x58] sm:$0xff]
      %v345 = vld [vmem:[%s215 + $0x60] sm:$0xff]
      %v346 = vld [vmem:[%s215 + $0x68] sm:$0xff]
      %v347 = vld [vmem:[%s215 + $0x70] sm:$0xff]
      %v348 = vld [vmem:[%s215 + $0x78] sm:$0xff]
      %v349 = vld [vmem:[%s215 + $0x80] sm:$0xff]
      %v350 = vld [vmem:[%s215 + $0x88] sm:$0xff]
      %v351 = vld [vmem:[%s215 + $0x90] sm:$0xff]
      %v352 = vld [vmem:[%s215 + $0x98] sm:$0xff]
      %v353 = vld [vmem:[%s215 + $0xa0] sm:$0xff]
      %v354 = vld [vmem:[%s215 + $0xa8] sm:$0xff]
      %v355 = vld [vmem:[%s215 + $0xb0] sm:$0xff]
      %v356 = vld [vmem:[%s215 + $0xb8] sm:$0xff]
      %v357 = vld [vmem:[%s215 + $0xc0] sm:$0xff]
      %v358 = vld [vmem:[%s215 + $0xc8] sm:$0xff]
      %v359 = vld [vmem:[%s215 + $0xd0] sm:$0xff]
      %v360 = vld [vmem:[%s215 + $0xd8] sm:$0xff]
      %v361 = vld [vmem:[%s215 + $0xe0] sm:$0xff]
      %v362 = vld [vmem:[%s215 + $0xe8] sm:$0xff]
      %v363 = vld [vmem:[%s215 + $0xf0] sm:$0xff]
      %v364 = vld [vmem:[%s215 + $0xf8] sm:$0xff]
      %v365 = vadd.f32 %v301, %v333
      %v366 = vadd.f32 %v302, %v334
      %v367 = vadd.f32 %v303, %v335
      %v368 = vadd.f32 %v304, %v336
      %v369 = vadd.f32 %v305, %v337
      %v370 = vadd.f32 %v306, %v338
      %v371 = vadd.f32 %v307, %v339
      %v372 = vadd.f32 %v308, %v340
      %v373 = vadd.f32 %v309, %v341
      %v374 = vadd.f32 %v310, %v342
      %v375 = vadd.f32 %v311, %v343
      %v376 = vadd.f32 %v312, %v344
      %v377 = vadd.f32 %v313, %v345
      %v378 = vadd.f32 %v314, %v346
      %v379 = vadd.f32 %v315, %v347
      %v380 = vadd.f32 %v316, %v348
      %v381 = vadd.f32 %v317, %v349
      %v382 = vadd.f32 %v318, %v350
      %v383 = vadd.f32 %v319, %v351
      %v384 = vadd.f32 %v320, %v352
      %v385 = vadd.f32 %v321, %v353
      %v386 = vadd.f32 %v322, %v354
      %v387 = vadd.f32 %v323, %v355
      %v388 = vadd.f32 %v324, %v356
      %v389 = vadd.f32 %v325, %v357
      %v390 = vadd.f32 %v326, %v358
      %v391 = vadd.f32 %v327, %v359
      %v392 = vadd.f32 %v328, %v360
      %v393 = vadd.f32 %v329, %v361
      %v394 = vadd.f32 %v330, %v362
      %v395 = vadd.f32 %v331, %v363
      %v396 = vadd.f32 %v332, %v364
      %v397 = vmax.f32 %v365, 0.0
      %v398 = vmax.f32 %v366, 0.0
      %v399 = vmax.f32 %v367, 0.0
      %v400 = vmax.f32 %v368, 0.0
      %v401 = vmax.f32 %v369, 0.0
      %v402 = vmax.f32 %v370, 0.0
      %v403 = vmax.f32 %v371, 0.0
      %v404 = vmax.f32 %v372, 0.0
      %v405 = vmax.f32 %v373, 0.0
      %v406 = vmax.f32 %v374, 0.0
      %v407 = vmax.f32 %v375, 0.0
      %v408 = vmax.f32 %v376, 0.0
      %v409 = vmax.f32 %v377, 0.0
      %v410 = vmax.f32 %v378, 0.0
      %v411 = vmax.f32 %v379, 0.0
      %v412 = vmax.f32 %v380, 0.0
      %v413 = vmax.f32 %v381, 0.0
      %v414 = vmax.f32 %v382, 0.0
      %v415 = vmax.f32 %v383, 0.0
      %v416 = vmax.f32 %v384, 0.0
      %v417 = vmax.f32 %v385, 0.0
      %v418 = vmax.f32 %v386, 0.0
      %v419 = vmax.f32 %v387, 0.0
      %v420 = vmax.f32 %v388, 0.0
      %v421 = vmax.f32 %v389, 0.0
      %v422 = vmax.f32 %v390, 0.0
      %v423 = vmax.f32 %v391, 0.0
      %v424 = vmax.f32 %v392, 0.0
      %v425 = vmax.f32 %v393, 0.0
      %v426 = vmax.f32 %v394, 0.0
      %v427 = vmax.f32 %v395, 0.0
      %v428 = vmax.f32 %v396, 0.0
      %429 = vst [vmem:[%s221] sm:$0xff] %v397
      %430 = vst [vmem:[%s221 + $0x8] sm:$0xff] %v398
      %431 = vst [vmem:[%s221 + $0x10] sm:$0xff] %v399
      %432 = vst [vmem:[%s221 + $0x18] sm:$0xff] %v400
      %433 = vst [vmem:[%s221 + $0x20] sm:$0xff] %v401
      %434 = vst [vmem:[%s221 + $0x28] sm:$0xff] %v402
      %435 = vst [vmem:[%s221 + $0x30] sm:$0xff] %v403
      %436 = vst [vmem:[%s221 + $0x38] sm:$0xff] %v404
      %437 = vst [vmem:[%s221 + $0x40] sm:$0xff] %v405
      %438 = vst [vmem:[%s221 + $0x48] sm:$0xff] %v406
      %439 = vst [vmem:[%s221 + $0x50] sm:$0xff] %v407
      %440 = vst [vmem:[%s221 + $0x58] sm:$0xff] %v408
      %441 = vst [vmem:[%s221 + $0x60] sm:$0xff] %v409
      %442 = vst [vmem:[%s221 + $0x68] sm:$0xff] %v410
      %443 = vst [vmem:[%s221 + $0x70] sm:$0xff] %v411
      %444 = vst [vmem:[%s221 + $0x78] sm:$0xff] %v412
      %445 = vst [vmem:[%s221 + $0x80] sm:$0xff] %v413
      %446 = vst [vmem:[%s221 + $0x88] sm:$0xff] %v414
      %447 = vst [vmem:[%s221 + $0x90] sm:$0xff] %v415
      %448 = vst [vmem:[%s221 + $0x98] sm:$0xff] %v416
      %449 = vst [vmem:[%s221 + $0xa0] sm:$0xff] %v417
      %450 = vst [vmem:[%s221 + $0xa8] sm:$0xff] %v418
      %451 = vst [vmem:[%s221 + $0xb0] sm:$0xff] %v419
      %452 = vst [vmem:[%s221 + $0xb8] sm:$0xff] %v420
      %453 = vst [vmem:[%s221 + $0xc0] sm:$0xff] %v421
      %454 = vst [vmem:[%s221 + $0xc8] sm:$0xff] %v422
      %455 = vst [vmem:[%s221 + $0xd0] sm:$0xff] %v423
      %456 = vst [vmem:[%s221 + $0xd8] sm:$0xff] %v424
      %457 = vst [vmem:[%s221 + $0xe0] sm:$0xff] %v425
      %458 = vst [vmem:[%s221 + $0xe8] sm:$0xff] %v426
      %459 = vst [vmem:[%s221 + $0xf0] sm:$0xff] %v427
      %460 = vst [vmem:[%s221 + $0xf8] sm:$0xff] %v428
      %s461 = smul.u32 32, %s15
      %p462 = scmp.lt.s32.totalorder %s461, 63
      %s463 = scalar_select %p462, %s461, 63
      %s464 = smul.addr %s463, 8
      %s465 = scalar_lea.vmem %s4, %s464
      // Predicated region
      $region37: #{_bottleneck_impl.7} parent=35 // pred_check
        %p466 = pneg %p127
      $region38: #{_bottleneck_impl.7} parent=35 // pred_check_branch
        %468 = sbr.rel (%p466) target = $region40
      $region39: #{_bottleneck_impl.7} parent=35 // pred_region
        %s469 = smul.u32 32, %s15
      $region40: #{_bottleneck_impl.7} parent=35 // pred_fallthru
        _
    $region36: #{_bottleneck_impl.7} parent=5 // pred_fallthru
      _
    %p470 = scmp.le.s32.totalorder 2, %s10
    // Predicated region
    $region41: #{_bottleneck_impl.7} parent=5 // pred_check
      %p471 = pneg %p470
    $region42: #{_bottleneck_impl.7} parent=5 // pred_check_branch
      %473 = sbr.rel (%p471) target = $region44
    $region43: #{_bottleneck_impl.7} parent=5 // pred_region
      %s474 = ssub.s32 %s10, 2
      // Predicated region
      $region45: #{_bottleneck_impl.7} parent=43 // pred_check
        %p475 = pneg %p133
      $region46: #{_bottleneck_impl.7} parent=43 // pred_check_branch
        %477 = sbr.rel (%p475) target = $region48
      $region47: #{_bottleneck_impl.7} parent=43 // pred_region
        %s478 = smul.u32 32, %s16
        %p479 = scmp.lt.s32.totalorder %s478, 63
        %s480 = scalar_select %p479, %s478, 63
        %s481 = smul.addr %s480, 8
        %s482 = scalar_lea.vmem %s4, %s481
      $region48: #{_bottleneck_impl.7} parent=43 // pred_fallthru
        _
    $region44: #{_bottleneck_impl.7} parent=5 // pred_fallthru
      _
  $region6: #{_bottleneck_impl.7} parent=0 // loop_footer
    %s14 = sadd.s32 1, %s10
  $region7: #{_bottleneck_impl.7} parent=0 // loop_footer_branch
    %9 = sbr.rel target = $region3
  $region8: #{_bottleneck_impl.7} parent=0 // loop_exit
    _

// kernel: _bottleneck_impl.6
$region0: #{_bottleneck_impl.6}
  #allocation0 [shape = 'u32[]', space=smem, size = 0x4, offset = 0x4, fixed_abs, tag = 'smem constant byte address 0x4 - core index']
  #allocation1 [shape = 'u32[144,128]{1,0:T(1,128)}', space=vmem, size = 0x12000, scoped, tag = 'internal scratch']
  %s0 = inlined_call_operand.vmem [shape: f32[512,128], index: 0, kind: input, shape index: {}]
  %s1 = inlined_call_operand.vmem [shape: f32[1,128], index: 1, kind: input, shape index: {}]
  %s2 = inlined_call_operand.vmem [shape: f32[1,128], index: 2, kind: input, shape index: {}]
  %s3 = inlined_call_operand.vmem [shape: bf16[128,128], index: 3, kind: input, shape index: {}]
  %s4 = inlined_call_operand.vmem [shape: f32[512,128], index: 4, kind: output, shape index: {0}]
  %s5 = inlined_call_operand.vmem [shape: f32[2,2,128], index: 5, kind: output, shape index: {1}]
  %6 = xla_tuple %s4, %s5
  %s7 = sld [smem:[#allocation0]]
  $region57: #{_bottleneck_impl.6} parent=0
    _
  %s9 = ssub.s32 1, %s7
  %s10 = scalar_select 0, %s9, %s7
  loop: start=0, step=1, limit=4
  $region2: #{_bottleneck_impl.6} parent=0 // loop_pre_header
    _
  $region3: #{_bottleneck_impl.6} parent=0 // loop_header
    %s12 = sphi 0, %s16
    %p13 = scmp.ge.s32.totalorder %s12, 4
    %s22 = sphi 0, %s24
    %s25 = sphi 0, %s22
    %s26 = sphi 0, %s25
    %s42 = sphi 0, %s26
    %s46 = sphi 0, %s46
    %s48 = sphi 0, %s46
    %s49 = sphi 0, %s48
    %s63 = sphi 0, %s49
    %s67 = sphi 0, %s67
    %s69 = sphi 0, %s67
    %s70 = sphi 0, %s69
    %s84 = sphi 0, %s70
    %s88 = sphi 0, %s88
    %s90 = sphi 0, %s88
    %s91 = sphi 0, %s90
    %s105 = sphi 0, %s91
    %s111 = sphi 0, %s113
    %s114 = sphi 0, %s111
    %s115 = sphi 0, %s114
    %s131 = sphi 0, %s115
    %s137 = sphi 0, %s139
    %s140 = sphi 0, %s137
    %s141 = sphi 0, %s140
    %s157 = sphi 0, %s141
  $region4: #{_bottleneck_impl.6} parent=0 // loop_header_branch
    %15 = sbr.rel (%p13) target = $region8
  $region5: #{_bottleneck_impl.6} parent=0 // loop_body
    %s17 = ssub.s32 %s12, 1
    %s18 = ssub.s32 %s12, 2
    %s19 = sadd.s32 %s12, 1
    %s20 = ssub.s32 %s12, %s19
    %p21 = scmp.eq.s32.totalorder %s20, 0
    %s23 = sadd.s32 %s22, 1
    %s24 = scalar_select %p21, %s22, %s23
    %p27 = pneg %p21
    %p28 = scmp.eq.s32.totalorder %s12, 1
    %p29 = por %p27, %p28
    %p30 = scmp.ne.s32.totalorder %s22, %s25
    %p31 = scmp.eq.s32.totalorder %s12, 0
    %p32 = por %p30, %p31
    %p33 = scmp.ne.s32.totalorder %s22, %s25
    %p34 = scmp.eq.s32.totalorder %s17, 1
    %p35 = por %p33, %p34
    %p36 = scmp.ne.s32.totalorder %s25, %s26
    %p37 = scmp.eq.s32.totalorder %s17, 0
    %p38 = por %p36, %p37
    %p39 = scmp.ne.s32.totalorder %s25, %s26
    %p40 = scmp.eq.s32.totalorder %s18, 1
    %p41 = por %p39, %p40
    %p43 = scmp.ne.s32.totalorder %s26, %s42
    %p44 = scmp.eq.s32.totalorder %s18, 0
    %p45 = por %p43, %p44
    %s47 = sadd.s32 %s46, 1
    %p50 = scmp.eq.s32.totalorder %s12, 1
    %p51 = scmp.ne.s32.totalorder %s46, %s48
    %p52 = scmp.eq.s32.totalorder %s12, 0
    %p53 = por %p51, %p52
    %p54 = scmp.ne.s32.totalorder %s46, %s48
    %p55 = scmp.eq.s32.totalorder %s17, 1
    %p56 = por %p54, %p55
    %p57 = scmp.ne.s32.totalorder %s48, %s49
    %p58 = scmp.eq.s32.totalorder %s17, 0
    %p59 = por %p57, %p58
    %p60 = scmp.ne.s32.totalorder %s48, %s49
    %p61 = scmp.eq.s32.totalorder %s18, 1
    %p62 = por %p60, %p61
    %p64 = scmp.ne.s32.totalorder %s49, %s63
    %p65 = scmp.eq.s32.totalorder %s18, 0
    %p66 = por %p64, %p65
    %s68 = sadd.s32 %s67, 1
    %p71 = scmp.eq.s32.totalorder %s12, 1
    %p72 = scmp.ne.s32.totalorder %s67, %s69
    %p73 = scmp.eq.s32.totalorder %s12, 0
    %p74 = por %p72, %p73
    %p75 = scmp.ne.s32.totalorder %s67, %s69
    %p76 = scmp.eq.s32.totalorder %s17, 1
    %p77 = por %p75, %p76
    %p78 = scmp.ne.s32.totalorder %s69, %s70
    %p79 = scmp.eq.s32.totalorder %s17, 0
    %p80 = por %p78, %p79
    %p81 = scmp.ne.s32.totalorder %s69, %s70
    %p82 = scmp.eq.s32.totalorder %s18, 1
    %p83 = por %p81, %p82
    %p85 = scmp.ne.s32.totalorder %s70, %s84
    %p86 = scmp.eq.s32.totalorder %s18, 0
    %p87 = por %p85, %p86
    %s89 = sadd.s32 %s88, 1
    %p92 = scmp.eq.s32.totalorder %s12, 1
    %p93 = scmp.ne.s32.totalorder %s88, %s90
    %p94 = scmp.eq.s32.totalorder %s12, 0
    %p95 = por %p93, %p94
    %p96 = scmp.ne.s32.totalorder %s88, %s90
    %p97 = scmp.eq.s32.totalorder %s17, 1
    %p98 = por %p96, %p97
    %p99 = scmp.ne.s32.totalorder %s90, %s91
    %p100 = scmp.eq.s32.totalorder %s17, 0
    %p101 = por %p99, %p100
    %p102 = scmp.ne.s32.totalorder %s90, %s91
    %p103 = scmp.eq.s32.totalorder %s18, 1
    %p104 = por %p102, %p103
    %p106 = scmp.ne.s32.totalorder %s91, %s105
    %p107 = scmp.eq.s32.totalorder %s18, 0
    %p108 = por %p106, %p107
    %s109 = ssub.s32 %s12, %s19
    %p110 = scmp.eq.s32.totalorder %s109, 0
    %s112 = sadd.s32 %s111, 1
    %s113 = scalar_select %p110, %s111, %s112
    %p116 = pneg %p110
    %p117 = scmp.eq.s32.totalorder %s12, 1
    %p118 = por %p116, %p117
    %p119 = scmp.ne.s32.totalorder %s111, %s114
    %p120 = scmp.eq.s32.totalorder %s12, 0
    %p121 = por %p119, %p120
    %p122 = scmp.ne.s32.totalorder %s111, %s114
    %p123 = scmp.eq.s32.totalorder %s17, 1
    %p124 = por %p122, %p123
    %p125 = scmp.ne.s32.totalorder %s114, %s115
    %p126 = scmp.eq.s32.totalorder %s17, 0
    %p127 = por %p125, %p126
    %p128 = scmp.ne.s32.totalorder %s114, %s115
    %p129 = scmp.eq.s32.totalorder %s18, 1
    %p130 = por %p128, %p129
    %p132 = scmp.ne.s32.totalorder %s115, %s131
    %p133 = scmp.eq.s32.totalorder %s18, 0
    %p134 = por %p132, %p133
    %s135 = ssub.s32 %s12, %s19
    %p136 = scmp.eq.s32.totalorder %s135, 0
    %s138 = sadd.s32 %s137, 1
    %s139 = scalar_select %p136, %s137, %s138
    %p142 = pneg %p136
    %p143 = scmp.eq.s32.totalorder %s12, 1
    %p144 = por %p142, %p143
    %p145 = scmp.ne.s32.totalorder %s137, %s140
    %p146 = scmp.eq.s32.totalorder %s12, 0
    %p147 = por %p145, %p146
    %p148 = scmp.ne.s32.totalorder %s137, %s140
    %p149 = scmp.eq.s32.totalorder %s17, 1
    %p150 = por %p148, %p149
    %p151 = scmp.ne.s32.totalorder %s140, %s141
    %p152 = scmp.eq.s32.totalorder %s17, 0
    %p153 = por %p151, %p152
    %p154 = scmp.ne.s32.totalorder %s140, %s141
    %p155 = scmp.eq.s32.totalorder %s18, 1
    %p156 = por %p154, %p155
    %p158 = scmp.ne.s32.totalorder %s141, %s157
    %p159 = scmp.eq.s32.totalorder %s18, 0
    %p160 = por %p158, %p159
    %p161 = scmp.le.s32.totalorder 1, %s12
    %p162 = scmp.lt.s32.totalorder %s12, 3
    %p163 = pnand %p161, %p162
    %p164 = pneg %p163
    // Predicated region
    $region9: #{_bottleneck_impl.6} parent=5 // pred_check
      _
    $region10: #{_bottleneck_impl.6} parent=5 // pred_check_branch
      %166 = sbr.rel (%p163) target = $region12
    $region11: #{_bottleneck_impl.6} parent=5 // pred_region
      %s167 = ssub.s32 %s12, 1
      // Predicated region
      $region13: #{_bottleneck_impl.6} parent=11 // pred_check
        %p168 = pneg %p59
      $region14: #{_bottleneck_impl.6} parent=11 // pred_check_branch
        %170 = sbr.rel (%p168) target = $region16
      $region15: #{_bottleneck_impl.6} parent=11 // pred_region
        _
      $region16: #{_bottleneck_impl.6} parent=11 // pred_fallthru
        _
      // Predicated region
      $region17: #{_bottleneck_impl.6} parent=11 // pred_check
        %p171 = pneg %p80
      $region18: #{_bottleneck_impl.6} parent=11 // pred_check_branch
        %173 = sbr.rel (%p171) target = $region20
      $region19: #{_bottleneck_impl.6} parent=11 // pred_region
        _
      $region20: #{_bottleneck_impl.6} parent=11 // pred_fallthru
        _
      // Predicated region
      $region21: #{_bottleneck_impl.6} parent=11 // pred_check
        %p174 = pneg %p101
      $region22: #{_bottleneck_impl.6} parent=11 // pred_check_branch
        %176 = sbr.rel (%p174) target = $region24
      $region23: #{_bottleneck_impl.6} parent=11 // pred_region
        _
      $region24: #{_bottleneck_impl.6} parent=11 // pred_fallthru
        _
    $region12: #{_bottleneck_impl.6} parent=5 // pred_fallthru
      _
    %p177 = scmp.lt.s32.totalorder %s12, 2
    // Predicated region
    $region25: #{_bottleneck_impl.6} parent=5 // pred_check
      %p178 = pneg %p177
    $region26: #{_bottleneck_impl.6} parent=5 // pred_check_branch
      %180 = sbr.rel (%p178) target = $region28
    $region27: #{_bottleneck_impl.6} parent=5 // pred_region
      // Predicated region
      $region29: #{_bottleneck_impl.6} parent=27 // pred_check
        %p181 = pneg %p32
      $region30: #{_bottleneck_impl.6} parent=27 // pred_check_branch
        %183 = sbr.rel (%p181) target = $region32
      $region31: #{_bottleneck_impl.6} parent=27 // pred_region
        %s184 = smul.u32 32, %s12
        %p185 = scmp.lt.s32.totalorder %s184, 63
        %s186 = scalar_select %p185, %s184, 63
        %s187 = smul.addr %s186, 8
        %s188 = scalar_lea.vmem %s0, %s187
        %s189 = smul.u32 32, %s12
      $region32: #{_bottleneck_impl.6} parent=27 // pred_fallthru
        _
    $region28: #{_bottleneck_impl.6} parent=5 // pred_fallthru
      _
    %p190 = scmp.le.s32.totalorder 1, %s12
    %p191 = scmp.lt.s32.totalorder %s12, 3
    %p192 = pnand %p190, %p191
    %p193 = pneg %p192
    // Predicated region
    $region33: #{_bottleneck_impl.6} parent=5 // pred_check
      _
    $region34: #{_bottleneck_impl.6} parent=5 // pred_check_branch
      %195 = sbr.rel (%p192) target = $region36
    $region35: #{_bottleneck_impl.6} parent=5 // pred_region
      %s196 = ssub.s32 %s12, 1
      %s197 = smul.u32 32, %s17
      %p198 = scmp.lt.s32.totalorder %s197, 63
      %s199 = scalar_select %p198, %s197, 63
      %s200 = smul.addr %s199, 8
      %s201 = scalar_lea.vmem %s0, %s200
      %p202 = pneg %p38
      %p203 = pneg %p35
      %p204 = pneg %p59
      %p205 = pneg %p56
      %p206 = pneg %p80
      %p207 = pneg %p77
      %p208 = pneg %p101
      %p209 = pneg %p98
      %p210 = pneg %p127
      %p211 = pneg %p124
      %s212 = smul.u32 32, %s17
      %p213 = scmp.lt.s32.totalorder %s212, 63
      %s214 = scalar_select %p213, %s212, 63
      %s215 = smul.addr %s214, 8
      %s216 = scalar_lea.vmem %s4, %s215
      %p217 = pneg %p153
      %p218 = pneg %p150
      %p219 = scmp.lt.s32.totalorder %s17, 1
      %s220 = scalar_select %p219, %s17, 1
      %s221 = smul.addr %s220, 2
      %s222 = scalar_lea.vmem %s5, %s221
      %s223 = smul.u32 32, %s17
      %p224 = scmp.lt.s32.totalorder %s223, 63
      %s225 = scalar_select %p224, %s223, 63
      %s226 = smul.addr %s225, 8
      %s227 = scalar_lea.vmem %s0, %s226
      %s228 = smul.u32 32, %s17
      %s229 = smul.u32 32, %s17
      %p230 = scmp.lt.s32.totalorder %s229, 63
      %s231 = scalar_select %p230, %s229, 63
      %s232 = smul.addr %s231, 8
      %s233 = scalar_lea.vmem %s4, %s232
      %s234 = smul.u32 32, %s17
      %p235 = scmp.lt.s32.totalorder %s17, 1
      %s236 = scalar_select %p235, %s17, 1
      %s237 = smul.addr %s236, 2
      %s238 = scalar_lea.vmem %s5, %s237
      %v240 = vld [vmem:[%s227] sm:$0xff]
      %v241 = vld [vmem:[%s227 + $0x8] sm:$0xff]
      %v242 = vld [vmem:[%s227 + $0x10] sm:$0xff]
      %v243 = vld [vmem:[%s227 + $0x18] sm:$0xff]
      %v244 = vld [vmem:[%s227 + $0x20] sm:$0xff]
      %v245 = vld [vmem:[%s227 + $0x28] sm:$0xff]
      %v246 = vld [vmem:[%s227 + $0x30] sm:$0xff]
      %v247 = vld [vmem:[%s227 + $0x38] sm:$0xff]
      %v248 = vld [vmem:[%s227 + $0x40] sm:$0xff]
      %v249 = vld [vmem:[%s227 + $0x48] sm:$0xff]
      %v250 = vld [vmem:[%s227 + $0x50] sm:$0xff]
      %v251 = vld [vmem:[%s227 + $0x58] sm:$0xff]
      %v252 = vld [vmem:[%s227 + $0x60] sm:$0xff]
      %v253 = vld [vmem:[%s227 + $0x68] sm:$0xff]
      %v254 = vld [vmem:[%s227 + $0x70] sm:$0xff]
      %v255 = vld [vmem:[%s227 + $0x78] sm:$0xff]
      %v256 = vld [vmem:[%s227 + $0x80] sm:$0xff]
      %v257 = vld [vmem:[%s227 + $0x88] sm:$0xff]
      %v258 = vld [vmem:[%s227 + $0x90] sm:$0xff]
      %v259 = vld [vmem:[%s227 + $0x98] sm:$0xff]
      %v260 = vld [vmem:[%s227 + $0xa0] sm:$0xff]
      %v261 = vld [vmem:[%s227 + $0xa8] sm:$0xff]
      %v262 = vld [vmem:[%s227 + $0xb0] sm:$0xff]
      %v263 = vld [vmem:[%s227 + $0xb8] sm:$0xff]
      %v264 = vld [vmem:[%s227 + $0xc0] sm:$0xff]
      %v265 = vld [vmem:[%s227 + $0xc8] sm:$0xff]
      %v266 = vld [vmem:[%s227 + $0xd0] sm:$0xff]
      %v267 = vld [vmem:[%s227 + $0xd8] sm:$0xff]
      %v268 = vld [vmem:[%s227 + $0xe0] sm:$0xff]
      %v269 = vld [vmem:[%s227 + $0xe8] sm:$0xff]
      %v270 = vld [vmem:[%s227 + $0xf0] sm:$0xff]
      %v271 = vld [vmem:[%s227 + $0xf8] sm:$0xff]
      %v272 = vld [vmem:[%s1] sm:$0x1]
      %v274 = vlaneseq
      %v275 = vshrl.u32 %v274, 7
      %v276 = vsub.s32 0, %v275
      %v277 = vrot.slane %v272, %v276
      %v279 = vmul.f32 %v240, %v277
      %v280 = vmul.f32 %v241, %v277
      %v281 = vmul.f32 %v242, %v277
      %v282 = vmul.f32 %v243, %v277
      %v283 = vmul.f32 %v244, %v277
      %v284 = vmul.f32 %v245, %v277
      %v285 = vmul.f32 %v246, %v277
      %v286 = vmul.f32 %v247, %v277
      %v287 = vmul.f32 %v248, %v277
      %v288 = vmul.f32 %v249, %v277
      %v289 = vmul.f32 %v250, %v277
      %v290 = vmul.f32 %v251, %v277
      %v291 = vmul.f32 %v252, %v277
      %v292 = vmul.f32 %v253, %v277
      %v293 = vmul.f32 %v254, %v277
      %v294 = vmul.f32 %v255, %v277
      %v295 = vmul.f32 %v256, %v277
      %v296 = vmul.f32 %v257, %v277
      %v297 = vmul.f32 %v258, %v277
      %v298 = vmul.f32 %v259, %v277
      %v299 = vmul.f32 %v260, %v277
      %v300 = vmul.f32 %v261, %v277
      %v301 = vmul.f32 %v262, %v277
      %v302 = vmul.f32 %v263, %v277
      %v303 = vmul.f32 %v264, %v277
      %v304 = vmul.f32 %v265, %v277
      %v305 = vmul.f32 %v266, %v277
      %v306 = vmul.f32 %v267, %v277
      %v307 = vmul.f32 %v268, %v277
      %v308 = vmul.f32 %v269, %v277
      %v309 = vmul.f32 %v270, %v277
      %v310 = vmul.f32 %v271, %v277
      %v311 = vld [vmem:[%s2] sm:$0x1]
      %v313 = vlaneseq
      %v314 = vshrl.u32 %v313, 7
      %v315 = vsub.s32 0, %v314
      %v316 = vrot.slane %v311, %v315
      %v318 = vadd.f32 %v279, %v316
      %v319 = vadd.f32 %v280, %v316
      %v320 = vadd.f32 %v281, %v316
      %v321 = vadd.f32 %v282, %v316
      %v322 = vadd.f32 %v283, %v316
      %v323 = vadd.f32 %v284, %v316
      %v324 = vadd.f32 %v285, %v316
      %v325 = vadd.f32 %v286, %v316
      %v326 = vadd.f32 %v287, %v316
      %v327 = vadd.f32 %v288, %v316
      %v328 = vadd.f32 %v289, %v316
      %v329 = vadd.f32 %v290, %v316
      %v330 = vadd.f32 %v291, %v316
      %v331 = vadd.f32 %v292, %v316
      %v332 = vadd.f32 %v293, %v316
      %v333 = vadd.f32 %v294, %v316
      %v334 = vadd.f32 %v295, %v316
      %v335 = vadd.f32 %v296, %v316
      %v336 = vadd.f32 %v297, %v316
      %v337 = vadd.f32 %v298, %v316
      %v338 = vadd.f32 %v299, %v316
      %v339 = vadd.f32 %v300, %v316
      %v340 = vadd.f32 %v301, %v316
      %v341 = vadd.f32 %v302, %v316
      %v342 = vadd.f32 %v303, %v316
      %v343 = vadd.f32 %v304, %v316
      %v344 = vadd.f32 %v305, %v316
      %v345 = vadd.f32 %v306, %v316
      %v346 = vadd.f32 %v307, %v316
      %v347 = vadd.f32 %v308, %v316
      %v348 = vadd.f32 %v309, %v316
      %v349 = vadd.f32 %v310, %v316
      %v350 = vmax.f32 %v318, 0.0
      %v351 = vmax.f32 %v319, 0.0
      %v352 = vmax.f32 %v320, 0.0
      %v353 = vmax.f32 %v321, 0.0
      %v354 = vmax.f32 %v322, 0.0
      %v355 = vmax.f32 %v323, 0.0
      %v356 = vmax.f32 %v324, 0.0
      %v357 = vmax.f32 %v325, 0.0
      %v358 = vmax.f32 %v326, 0.0
      %v359 = vmax.f32 %v327, 0.0
      %v360 = vmax.f32 %v328, 0.0
      %v361 = vmax.f32 %v329, 0.0
      %v362 = vmax.f32 %v330, 0.0
      %v363 = vmax.f32 %v331, 0.0
      %v364 = vmax.f32 %v332, 0.0
      %v365 = vmax.f32 %v333, 0.0
      %v366 = vmax.f32 %v334, 0.0
      %v367 = vmax.f32 %v335, 0.0
      %v368 = vmax.f32 %v336, 0.0
      %v369 = vmax.f32 %v337, 0.0
      %v370 = vmax.f32 %v338, 0.0
      %v371 = vmax.f32 %v339, 0.0
      %v372 = vmax.f32 %v340, 0.0
      %v373 = vmax.f32 %v341, 0.0
      %v374 = vmax.f32 %v342, 0.0
      %v375 = vmax.f32 %v343, 0.0
      %v376 = vmax.f32 %v344, 0.0
      %v377 = vmax.f32 %v345, 0.0
      %v378 = vmax.f32 %v346, 0.0
      %v379 = vmax.f32 %v347, 0.0
      %v380 = vmax.f32 %v348, 0.0
      %v381 = vmax.f32 %v349, 0.0
      %v382 = vpack.c.bf16 %v351, %v350
      %v383 = vpack.c.bf16 %v353, %v352
      %v384 = vpack.c.bf16 %v355, %v354
      %v385 = vpack.c.bf16 %v357, %v356
      %v386 = vpack.c.bf16 %v359, %v358
      %v387 = vpack.c.bf16 %v361, %v360
      %v388 = vpack.c.bf16 %v363, %v362
      %v389 = vpack.c.bf16 %v365, %v364
      %v390 = vpack.c.bf16 %v367, %v366
      %v391 = vpack.c.bf16 %v369, %v368
      %v392 = vpack.c.bf16 %v371, %v370
      %v393 = vpack.c.bf16 %v373, %v372
      %v394 = vpack.c.bf16 %v375, %v374
      %v395 = vpack.c.bf16 %v377, %v376
      %v396 = vpack.c.bf16 %v379, %v378
      %v397 = vpack.c.bf16 %v381, %v380
      %v398 = vld [vmem:[%s3] sm:$0xf]
      %v399 = vld [vmem:[%s3 + $0x4] sm:$0xf]
      %v400 = vld [vmem:[%s3 + $0x8] sm:$0xf]
      %v401 = vld [vmem:[%s3 + $0xc] sm:$0xf]
      %v402 = vld [vmem:[%s3 + $0x10] sm:$0xf]
      %v403 = vld [vmem:[%s3 + $0x14] sm:$0xf]
      %v404 = vld [vmem:[%s3 + $0x18] sm:$0xf]
      %v405 = vld [vmem:[%s3 + $0x1c] sm:$0xf]
      %v406 = vld [vmem:[%s3 + $0x20] sm:$0xf]
      %v407 = vld [vmem:[%s3 + $0x24] sm:$0xf]
      %v408 = vld [vmem:[%s3 + $0x28] sm:$0xf]
      %v409 = vld [vmem:[%s3 + $0x2c] sm:$0xf]
      %v410 = vld [vmem:[%s3 + $0x30] sm:$0xf]
      %v411 = vld [vmem:[%s3 + $0x34] sm:$0xf]
      %v412 = vld [vmem:[%s3 + $0x38] sm:$0xf]
      %v413 = vld [vmem:[%s3 + $0x3c] sm:$0xf]
      %v430 = vunpack.c.l.b16 %v398
      %v431 = vunpack.c.l.b16 %v399
      %v432 = vunpack.c.l.b16 %v400
      %v433 = vunpack.c.l.b16 %v401
      %v434 = vunpack.c.l.b16 %v402
      %v435 = vunpack.c.l.b16 %v403
      %v436 = vunpack.c.l.b16 %v404
      %v437 = vunpack.c.l.b16 %v405
      %v438 = vunpack.c.l.b16 %v406
      %v439 = vunpack.c.l.b16 %v407
      %v440 = vunpack.c.l.b16 %v408
      %v441 = vunpack.c.l.b16 %v409
      %v442 = vunpack.c.l.b16 %v410
      %v443 = vunpack.c.l.b16 %v411
      %v444 = vunpack.c.l.b16 %v412
      %v445 = vunpack.c.l.b16 %v413
      %v446 = vpack.c.b16 %v431, %v430
      %v447 = vpack.c.b16 %v433, %v432
      %v448 = vpack.c.b16 %v435, %v434
      %v449 = vpack.c.b16 %v437, %v436
      %v450 = vpack.c.b16 %v439, %v438
      %v451 = vpack.c.b16 %v441, %v440
      %v452 = vpack.c.b16 %v443, %v442
      %v453 = vpack.c.b16 %v445, %v444
      %462 = vmatprep.subr.bf16.mxu0 0
      %463 = vmatpush1.bf16.msra.mxu0 %v446
      %464 = vmatprep.subr.bf16.mxu0 0
      %465 = vmatpush1.bf16.msra.mxu0 %v447
      %466 = vmatprep.subr.bf16.mxu0 0
      %467 = vmatpush1.bf16.msra.mxu0 %v448
      %468 = vmatprep.subr.bf16.mxu0 0
      %469 = vmatpush1.bf16.msra.mxu0 %v449
      %470 = vmatprep.subr.bf16.mxu0 0
      %471 = vmatpush1.bf16.msra.mxu0 %v450
      %472 = vmatprep.subr.bf16.mxu0 0
      %473 = vmatpush1.bf16.msra.mxu0 %v451
      %474 = vmatprep.subr.bf16.mxu0 0
      %475 = vmatpush1.bf16.msra.mxu0 %v452
      %476 = vmatprep.subr.bf16.mxu0 0
      %477 = vmatpush1.bf16.msra.mxu0 %v453
      %478 = vmatprep.subr.bf16.mxu0 0
      %479 = vmatpush1.bf16.msra.mxu0 0
      %480 = vmatprep.subr.bf16.mxu0 0
      %481 = vmatpush1.bf16.msra.mxu0 0
      %482 = vmatprep.subr.bf16.mxu0 0
      %483 = vmatpush1.bf16.msra.mxu0 0
      %484 = vmatprep.subr.bf16.mxu0 0
      %485 = vmatpush1.bf16.msra.mxu0 0
      %486 = vmatprep.subr.bf16.mxu0 0
      %487 = vmatpush1.bf16.msra.mxu0 0
      %488 = vmatprep.subr.bf16.mxu0 0
      %489 = vmatpush1.bf16.msra.mxu0 0
      %490 = vmatprep.subr.bf16.mxu0 0
      %491 = vmatpush1.bf16.msra.mxu0 0
      %492 = vmatprep.subr.bf16.mxu0 0
      %493 = vmatpush1.bf16.msra.mxu0 0
      %494 = vmatprep.mubr.bf16.mxu0 0
      %495 = vmatmul.mubr.bf16.gmra.mrb[0].mxu0 %v382
      %v496 = vpop.f32.mrb[0].mxu0
      %v497 = vadd.f32 0.0, %v496
      %v498 = vpop.f32.mrb[0].mxu0
      %v499 = vpop.f32.mrb[0].mxu0
      %v500 = vadd.f32 0.0, %v499
      %v501 = vpop.f32.mrb[0].mxu0
      %502 = vmatprep.mubr.bf16.mxu0 0
      %503 = vmatmul.mubr.bf16.gmra.mrb[0].mxu0 %v383
      %v504 = vpop.f32.mrb[0].mxu0
      %v505 = vadd.f32 0.0, %v504
      %v506 = vpop.f32.mrb[0].mxu0
      %v507 = vpop.f32.mrb[0].mxu0
      %v508 = vadd.f32 0.0, %v507
      %v509 = vpop.f32.mrb[0].mxu0
      %510 = vmatprep.mubr.bf16.mxu0 0
      %511 = vmatmul.mubr.bf16.gmra.mrb[0].mxu0 %v384
      %v512 = vpop.f32.mrb[0].mxu0
      %v513 = vadd.f32 0.0, %v512
      %v514 = vpop.f32.mrb[0].mxu0
      %v515 = vpop.f32.mrb[0].mxu0
      %v516 = vadd.f32 0.0, %v515
      %v517 = vpop.f32.mrb[0].mxu0
      %518 = vmatprep.mubr.bf16.mxu0 0
      %519 = vmatmul.mubr.bf16.gmra.mrb[0].mxu0 %v385
      %v520 = vpop.f32.mrb[0].mxu0
      %v521 = vadd.f32 0.0, %v520
      %v522 = vpop.f32.mrb[0].mxu0
      %v523 = vpop.f32.mrb[0].mxu0
      %v524 = vadd.f32 0.0, %v523
      %v525 = vpop.f32.mrb[0].mxu0
      %526 = vmatprep.mubr.bf16.mxu0 0
      %527 = vmatmul.mubr.bf16.gmra.mrb[0].mxu0 %v386
      %v528 = vpop.f32.mrb[0].mxu0
      %v529 = vadd.f32 0.0, %v528
      %v530 = vpop.f32.mrb[0].mxu0
      %v531 = vpop.f32.mrb[0].mxu0
      %v532 = vadd.f32 0.0, %v531
      %v533 = vpop.f32.mrb[0].mxu0
      %534 = vmatprep.mubr.bf16.mxu0 0
      %535 = vmatmul.mubr.bf16.gmra.mrb[0].mxu0 %v387
      %v536 = vpop.f32.mrb[0].mxu0
      %v537 = vadd.f32 0.0, %v536
      %v538 = vpop.f32.mrb[0].mxu0
      %v539 = vpop.f32.mrb[0].mxu0
      %v540 = vadd.f32 0.0, %v539
      %v541 = vpop.f32.mrb[0].mxu0
      %542 = vmatprep.mubr.bf16.mxu0 0
      %543 = vmatmul.mubr.bf16.gmra.mrb[0].mxu0 %v388
      %v544 = vpop.f32.mrb[0].mxu0
      %v545 = vadd.f32 0.0, %v544
      %v546 = vpop.f32.mrb[0].mxu0
      %v547 = vpop.f32.mrb[0].mxu0
      %v548 = vadd.f32 0.0, %v547
      %v549 = vpop.f32.mrb[0].mxu0
      %550 = vmatprep.mubr.bf16.mxu0 0
      %551 = vmatmul.mubr.bf16.gmra.mrb[0].mxu0 %v389
      %v552 = vpop.f32.mrb[0].mxu0
      %v553 = vadd.f32 0.0, %v552
      %v554 = vpop.f32.mrb[0].mxu0
      %v555 = vpop.f32.mrb[0].mxu0
      %v556 = vadd.f32 0.0, %v555
      %v557 = vpop.f32.mrb[0].mxu0
      %558 = vmatprep.mubr.bf16.mxu0 0
      %559 = vmatmul.mubr.bf16.gmra.mrb[0].mxu0 %v390
      %v560 = vpop.f32.mrb[0].mxu0
      %v561 = vadd.f32 0.0, %v560
      %v562 = vpop.f32.mrb[0].mxu0
      %v563 = vpop.f32.mrb[0].mxu0
      %v564 = vadd.f32 0.0, %v563
      %v565 = vpop.f32.mrb[0].mxu0
      %566 = vmatprep.mubr.bf16.mxu0 0
      %567 = vmatmul.mubr.bf16.gmra.mrb[0].mxu0 %v391
      %v568 = vpop.f32.mrb[0].mxu0
      %v569 = vadd.f32 0.0, %v568
      %v570 = vpop.f32.mrb[0].mxu0
      %v571 = vpop.f32.mrb[0].mxu0
      %v572 = vadd.f32 0.0, %v571
      %v573 = vpop.f32.mrb[0].mxu0
      %574 = vmatprep.mubr.bf16.mxu0 0
      %575 = vmatmul.mubr.bf16.gmra.mrb[0].mxu0 %v392
      %v576 = vpop.f32.mrb[0].mxu0
      %v577 = vadd.f32 0.0, %v576
      %v578 = vpop.f32.mrb[0].mxu0
      %v579 = vpop.f32.mrb[0].mxu0
      %v580 = vadd.f32 0.0, %v579
      %v581 = vpop.f32.mrb[0].mxu0
      %582 = vmatprep.mubr.bf16.mxu0 0
      %583 = vmatmul.mubr.bf16.gmra.mrb[0].mxu0 %v393
      %v584 = vpop.f32.mrb[0].mxu0
      %v585 = vadd.f32 0.0, %v584
      %v586 = vpop.f32.mrb[0].mxu0
      %v587 = vpop.f32.mrb[0].mxu0
      %v588 = vadd.f32 0.0, %v587
      %v589 = vpop.f32.mrb[0].mxu0
      %590 = vmatprep.mubr.bf16.mxu0 0
      %591 = vmatmul.mubr.bf16.gmra.mrb[0].mxu0 %v394
      %v592 = vpop.f32.mrb[0].mxu0
      %v593 = vadd.f32 0.0, %v592
      %v594 = vpop.f32.mrb[0].mxu0
      %v595 = vpop.f32.mrb[0].mxu0
      %v596 = vadd.f32 0.0, %v595
      %v597 = vpop.f32.mrb[0].mxu0
      %598 = vmatprep.mubr.bf16.mxu0 0
      %599 = vmatmul.mubr.bf16.gmra.mrb[0].mxu0 %v395
      %v600 = vpop.f32.mrb[0].mxu0
      %v601 = vadd.f32 0.0, %v600
      %v602 = vpop.f32.mrb[0].mxu0
      %v603 = vpop.f32.mrb[0].mxu0
      %v604 = vadd.f32 0.0, %v603
      %v605 = vpop.f32.mrb[0].mxu0
      %606 = vmatprep.mubr.bf16.mxu0 0
      %607 = vmatmul.mubr.bf16.gmra.mrb[0].mxu0 %v396
      %v608 = vpop.f32.mrb[0].mxu0
      %v609 = vadd.f32 0.0, %v608
      %v610 = vpop.f32.mrb[0].mxu0
      %v611 = vpop.f32.mrb[0].mxu0
      %v612 = vadd.f32 0.0, %v611
      %v613 = vpop.f32.mrb[0].mxu0
      %614 = vmatprep.mubr.bf16.mxu0 0
      %615 = vmatmul.mubr.bf16.gmra.mrb[0].mxu0 %v397
      %v616 = vpop.f32.mrb[0].mxu0
      %v617 = vadd.f32 0.0, %v616
      %v618 = vpop.f32.mrb[0].mxu0
      %v619 = vpop.f32.mrb[0].mxu0
      %v620 = vadd.f32 0.0, %v619
      %v621 = vpop.f32.mrb[0].mxu0
      %622 = vdwg.mxu0
      %623 = vst [vmem:[%s233] sm:$0xff] %v497
      %624 = vst [vmem:[%s233 + $0x8] sm:$0xff] %v500
      %625 = vst [vmem:[%s233 + $0x10] sm:$0xff] %v505
      %626 = vst [vmem:[%s233 + $0x18] sm:$0xff] %v508
      %627 = vst [vmem:[%s233 + $0x20] sm:$0xff] %v513
      %628 = vst [vmem:[%s233 + $0x28] sm:$0xff] %v516
      %629 = vst [vmem:[%s233 + $0x30] sm:$0xff] %v521
      %630 = vst [vmem:[%s233 + $0x38] sm:$0xff] %v524
      %631 = vst [vmem:[%s233 + $0x40] sm:$0xff] %v529
      %632 = vst [vmem:[%s233 + $0x48] sm:$0xff] %v532
      %633 = vst [vmem:[%s233 + $0x50] sm:$0xff] %v537
      %634 = vst [vmem:[%s233 + $0x58] sm:$0xff] %v540
      %635 = vst [vmem:[%s233 + $0x60] sm:$0xff] %v545
      %636 = vst [vmem:[%s233 + $0x68] sm:$0xff] %v548
      %637 = vst [vmem:[%s233 + $0x70] sm:$0xff] %v553
      %638 = vst [vmem:[%s233 + $0x78] sm:$0xff] %v556
      %639 = vst [vmem:[%s233 + $0x80] sm:$0xff] %v561
      %640 = vst [vmem:[%s233 + $0x88] sm:$0xff] %v564
      %641 = vst [vmem:[%s233 + $0x90] sm:$0xff] %v569
      %642 = vst [vmem:[%s233 + $0x98] sm:$0xff] %v572
      %643 = vst [vmem:[%s233 + $0xa0] sm:$0xff] %v577
      %644 = vst [vmem:[%s233 + $0xa8] sm:$0xff] %v580
      %645 = vst [vmem:[%s233 + $0xb0] sm:$0xff] %v585
      %646 = vst [vmem:[%s233 + $0xb8] sm:$0xff] %v588
      %647 = vst [vmem:[%s233 + $0xc0] sm:$0xff] %v593
      %648 = vst [vmem:[%s233 + $0xc8] sm:$0xff] %v596
      %649 = vst [vmem:[%s233 + $0xd0] sm:$0xff] %v601
      %650 = vst [vmem:[%s233 + $0xd8] sm:$0xff] %v604
      %651 = vst [vmem:[%s233 + $0xe0] sm:$0xff] %v609
      %652 = vst [vmem:[%s233 + $0xe8] sm:$0xff] %v612
      %653 = vst [vmem:[%s233 + $0xf0] sm:$0xff] %v617
      %654 = vst [vmem:[%s233 + $0xf8] sm:$0xff] %v620
      %v655 = vadd.f32 %v497, %v500
      %v656 = vadd.f32 %v655, %v505
      %v657 = vadd.f32 %v656, %v508
      %v658 = vadd.f32 %v657, %v513
      %v659 = vadd.f32 %v658, %v516
      %v660 = vadd.f32 %v659, %v521
      %v661 = vadd.f32 %v660, %v524
      %v662 = vadd.f32 %v661, %v529
      %v663 = vadd.f32 %v662, %v532
      %v664 = vadd.f32 %v663, %v537
      %v665 = vadd.f32 %v664, %v540
      %v666 = vadd.f32 %v665, %v545
      %v667 = vadd.f32 %v666, %v548
      %v668 = vadd.f32 %v667, %v553
      %v669 = vadd.f32 %v668, %v556
      %v670 = vadd.f32 %v669, %v561
      %v671 = vadd.f32 %v670, %v564
      %v672 = vadd.f32 %v671, %v569
      %v673 = vadd.f32 %v672, %v572
      %v674 = vadd.f32 %v673, %v577
      %v675 = vadd.f32 %v674, %v580
      %v676 = vadd.f32 %v675, %v585
      %v677 = vadd.f32 %v676, %v588
      %v678 = vadd.f32 %v677, %v593
      %v679 = vadd.f32 %v678, %v596
      %v680 = vadd.f32 %v679, %v601
      %v681 = vadd.f32 %v680, %v604
      %v682 = vadd.f32 %v681, %v609
      %v683 = vadd.f32 %v682, %v612
      %v684 = vadd.f32 %v683, %v617
      %v685 = vadd.f32 %v684, %v620
      %v686 = vrot.slane %v685, 4
      %v687 = vadd.f32 %v685, %v686
      %v688 = vrot.slane %v687, 2
      %v689 = vadd.f32 %v687, %v688
      %v690 = vrot.slane %v689, 1
      %v691 = vadd.f32 %v689, %v690
      %v692 = vmul.f32 %v691, 0.00390625
      %v693 = vsub.f32 %v497, %v692
      %v694 = vsub.f32 %v500, %v692
      %v695 = vsub.f32 %v505, %v692
      %v696 = vsub.f32 %v508, %v692
      %v697 = vsub.f32 %v513, %v692
      %v698 = vsub.f32 %v516, %v692
      %v699 = vsub.f32 %v521, %v692
      %v700 = vsub.f32 %v524, %v692
      %v701 = vsub.f32 %v529, %v692
      %v702 = vsub.f32 %v532, %v692
      %v703 = vsub.f32 %v537, %v692
      %v704 = vsub.f32 %v540, %v692
      %v705 = vsub.f32 %v545, %v692
      %v706 = vsub.f32 %v548, %v692
      %v707 = vsub.f32 %v553, %v692
      %v708 = vsub.f32 %v556, %v692
      %v709 = vsub.f32 %v561, %v692
      %v710 = vsub.f32 %v564, %v692
      %v711 = vsub.f32 %v569, %v692
      %v712 = vsub.f32 %v572, %v692
      %v713 = vsub.f32 %v577, %v692
      %v714 = vsub.f32 %v580, %v692
      %v715 = vsub.f32 %v585, %v692
      %v716 = vsub.f32 %v588, %v692
      %v717 = vsub.f32 %v593, %v692
      %v718 = vsub.f32 %v596, %v692
      %v719 = vsub.f32 %v601, %v692
      %v720 = vsub.f32 %v604, %v692
      %v721 = vsub.f32 %v609, %v692
      %v722 = vsub.f32 %v612, %v692
      %v723 = vsub.f32 %v617, %v692
      %v724 = vsub.f32 %v620, %v692
      %v725 = vmul.f32 %v693, %v693
      %v726 = vmul.f32 %v694, %v694
      %v727 = vmul.f32 %v695, %v695
      %v728 = vmul.f32 %v696, %v696
      %v729 = vmul.f32 %v697, %v697
      %v730 = vmul.f32 %v698, %v698
      %v731 = vmul.f32 %v699, %v699
      %v732 = vmul.f32 %v700, %v700
      %v733 = vmul.f32 %v701, %v701
      %v734 = vmul.f32 %v702, %v702
      %v735 = vmul.f32 %v703, %v703
      %v736 = vmul.f32 %v704, %v704
      %v737 = vmul.f32 %v705, %v705
      %v738 = vmul.f32 %v706, %v706
      %v739 = vmul.f32 %v707, %v707
      %v740 = vmul.f32 %v708, %v708
      %v741 = vmul.f32 %v709, %v709
      %v742 = vmul.f32 %v710, %v710
      %v743 = vmul.f32 %v711, %v711
      %v744 = vmul.f32 %v712, %v712
      %v745 = vmul.f32 %v713, %v713
      %v746 = vmul.f32 %v714, %v714
      %v747 = vmul.f32 %v715, %v715
      %v748 = vmul.f32 %v716, %v716
      %v749 = vmul.f32 %v717, %v717
      %v750 = vmul.f32 %v718, %v718
      %v751 = vmul.f32 %v719, %v719
      %v752 = vmul.f32 %v720, %v720
      %v753 = vmul.f32 %v721, %v721
      %v754 = vmul.f32 %v722, %v722
      %v755 = vmul.f32 %v723, %v723
      %v756 = vmul.f32 %v724, %v724
      %v757 = vadd.f32 %v725, %v726
      %v758 = vadd.f32 %v757, %v727
      %v759 = vadd.f32 %v758, %v728
      %v760 = vadd.f32 %v759, %v729
      %v761 = vadd.f32 %v760, %v730
      %v762 = vadd.f32 %v761, %v731
      %v763 = vadd.f32 %v762, %v732
      %v764 = vadd.f32 %v763, %v733
      %v765 = vadd.f32 %v764, %v734
      %v766 = vadd.f32 %v765, %v735
      %v767 = vadd.f32 %v766, %v736
      %v768 = vadd.f32 %v767, %v737
      %v769 = vadd.f32 %v768, %v738
      %v770 = vadd.f32 %v769, %v739
      %v771 = vadd.f32 %v770, %v740
      %v772 = vadd.f32 %v771, %v741
      %v773 = vadd.f32 %v772, %v742
      %v774 = vadd.f32 %v773, %v743
      %v775 = vadd.f32 %v774, %v744
      %v776 = vadd.f32 %v775, %v745
      %v777 = vadd.f32 %v776, %v746
      %v778 = vadd.f32 %v777, %v747
      %v779 = vadd.f32 %v778, %v748
      %v780 = vadd.f32 %v779, %v749
      %v781 = vadd.f32 %v780, %v750
      %v782 = vadd.f32 %v781, %v751
      %v783 = vadd.f32 %v782, %v752
      %v784 = vadd.f32 %v783, %v753
      %v785 = vadd.f32 %v784, %v754
      %v786 = vadd.f32 %v785, %v755
      %v787 = vadd.f32 %v786, %v756
      %v788 = vrot.slane %v787, 4
      %v789 = vadd.f32 %v787, %v788
      %v790 = vrot.slane %v789, 2
      %v791 = vadd.f32 %v789, %v790
      %v792 = vrot.slane %v791, 1
      %v793 = vadd.f32 %v791, %v792
      %vm794 = vcmask 1040384
      %v795 = vsel %vm794, %v691, %v793
      %796 = vst [vmem:[%s238] sm:$0x3] %v795
      %s797 = smul.u32 32, %s17
      %p798 = scmp.lt.s32.totalorder %s797, 63
      %s799 = scalar_select %p798, %s797, 63
      %s800 = smul.addr %s799, 8
      %s801 = scalar_lea.vmem %s4, %s800
      %p802 = scmp.lt.s32.totalorder %s17, 1
      %s803 = scalar_select %p802, %s17, 1
      %s804 = smul.addr %s803, 2
      %s805 = scalar_lea.vmem %s5, %s804
      // Predicated region
      $region37: #{_bottleneck_impl.6} parent=35 // pred_check
        %p806 = pneg %p124
      $region38: #{_bottleneck_impl.6} parent=35 // pred_check_branch
        %808 = sbr.rel (%p806) target = $region40
      $region39: #{_bottleneck_impl.6} parent=35 // pred_region
        %s809 = smul.u32 32, %s17
      $region40: #{_bottleneck_impl.6} parent=35 // pred_fallthru
        _
      // Predicated region
      $region41: #{_bottleneck_impl.6} parent=35 // pred_check
        %p810 = pneg %p150
      $region42: #{_bottleneck_impl.6} parent=35 // pred_check_branch
        %812 = sbr.rel (%p810) target = $region44
      $region43: #{_bottleneck_impl.6} parent=35 // pred_region
        _
      $region44: #{_bottleneck_impl.6} parent=35 // pred_fallthru
        _
    $region36: #{_bottleneck_impl.6} parent=5 // pred_fallthru
      _
    %p813 = scmp.le.s32.totalorder 2, %s12
    // Predicated region
    $region45: #{_bottleneck_impl.6} parent=5 // pred_check
      %p814 = pneg %p813
    $region46: #{_bottleneck_impl.6} parent=5 // pred_check_branch
      %816 = sbr.rel (%p814) target = $region48
    $region47: #{_bottleneck_impl.6} parent=5 // pred_region
      %s817 = ssub.s32 %s12, 2
      // Predicated region
      $region49: #{_bottleneck_impl.6} parent=47 // pred_check
        %p818 = pneg %p130
      $region50: #{_bottleneck_impl.6} parent=47 // pred_check_branch
        %820 = sbr.rel (%p818) target = $region52
      $region51: #{_bottleneck_impl.6} parent=47 // pred_region
        %s821 = smul.u32 32, %s18
        %p822 = scmp.lt.s32.totalorder %s821, 63
        %s823 = scalar_select %p822, %s821, 63
        %s824 = smul.addr %s823, 8
        %s825 = scalar_lea.vmem %s4, %s824
      $region52: #{_bottleneck_impl.6} parent=47 // pred_fallthru
        _
      // Predicated region
      $region53: #{_bottleneck_impl.6} parent=47 // pred_check
        %p826 = pneg %p156
      $region54: #{_bottleneck_impl.6} parent=47 // pred_check_branch
        %828 = sbr.rel (%p826) target = $region56
      $region55: #{_bottleneck_impl.6} parent=47 // pred_region
        %p829 = scmp.lt.s32.totalorder %s18, 1
        %s830 = scalar_select %p829, %s18, 1
        %s831 = smul.addr %s830, 2
        %s832 = scalar_lea.vmem %s5, %s831
      $region56: #{_bottleneck_impl.6} parent=47 // pred_fallthru
        _
    $region48: #{_bottleneck_impl.6} parent=5 // pred_fallthru
      _
  $region6: #{_bottleneck_impl.6} parent=0 // loop_footer
    %s16 = sadd.s32 1, %s12
  $region7: #{_bottleneck_impl.6} parent=0 // loop_footer_branch
    %11 = sbr.rel target = $region3
  $region8: #{_bottleneck_impl.6} parent=0 // loop_exit
    _

// kernel: _bottleneck_impl.5
$region0: #{_bottleneck_impl.5}
  #allocation0 [shape = 'u32[]', space=smem, size = 0x4, offset = 0x4, fixed_abs, tag = 'smem constant byte address 0x4 - core index']
  #allocation1 [shape = 'u32[144,128]{1,0:T(1,128)}', space=vmem, size = 0x12000, scoped, tag = 'internal scratch']
  #allocation2 [shape = 'bf16[1,18,18,128]{3,2,1,0:T(8,128)(2,1)}', space=vmem, size = 0x1b000, scoped, tag = 'scratch operand']
  %s0 = inlined_call_operand.vmem [shape: f32[2,16,16,128], index: 0, kind: input, shape index: {}]
  %s1 = inlined_call_operand.vmem [shape: f32[1,128], index: 1, kind: input, shape index: {}]
  %s2 = inlined_call_operand.vmem [shape: f32[1,128], index: 2, kind: input, shape index: {}]
  %s3 = inlined_call_operand.vmem [shape: bf16[1152,128], index: 3, kind: input, shape index: {}]
  %s4 = inlined_call_operand.vmem [shape: f32[2,16,16,128], index: 4, kind: output, shape index: {0}]
  %s5 = inlined_call_operand.vmem [shape: f32[2,2,128], index: 5, kind: output, shape index: {1}]
  %6 = xla_tuple %s4, %s5
  %s7 = sld [smem:[#allocation0]]
  $region57: #{_bottleneck_impl.5} parent=0
    _
  %s9 = ssub.s32 1, %s7
  %s10 = scalar_select 0, %s9, %s7
  loop: start=0, step=1, limit=4
  $region2: #{_bottleneck_impl.5} parent=0 // loop_pre_header
    _
  $region3: #{_bottleneck_impl.5} parent=0 // loop_header
    %s12 = sphi 0, %s16
    %p13 = scmp.ge.s32.totalorder %s12, 4
    %s22 = sphi 0, %s24
    %s25 = sphi 0, %s22
    %s26 = sphi 0, %s25
    %s42 = sphi 0, %s26
    %s46 = sphi 0, %s46
    %s48 = sphi 0, %s46
    %s49 = sphi 0, %s48
    %s63 = sphi 0, %s49
    %s67 = sphi 0, %s67
    %s69 = sphi 0, %s67
    %s70 = sphi 0, %s69
    %s84 = sphi 0, %s70
    %s88 = sphi 0, %s88
    %s90 = sphi 0, %s88
    %s91 = sphi 0, %s90
    %s105 = sphi 0, %s91
    %s111 = sphi 0, %s113
    %s114 = sphi 0, %s111
    %s115 = sphi 0, %s114
    %s131 = sphi 0, %s115
    %s137 = sphi 0, %s139
    %s140 = sphi 0, %s137
    %s141 = sphi 0, %s140
    %s157 = sphi 0, %s141
  $region4: #{_bottleneck_impl.5} parent=0 // loop_header_branch
    %15 = sbr.rel (%p13) target = $region8
  $region5: #{_bottleneck_impl.5} parent=0 // loop_body
    %s17 = ssub.s32 %s12, 1
    %s18 = ssub.s32 %s12, 2
    %s19 = sadd.s32 %s12, 1
    %s20 = ssub.s32 %s12, %s19
    %p21 = scmp.eq.s32.totalorder %s20, 0
    %s23 = sadd.s32 %s22, 1
    %s24 = scalar_select %p21, %s22, %s23
    %p27 = pneg %p21
    %p28 = scmp.eq.s32.totalorder %s12, 1
    %p29 = por %p27, %p28
    %p30 = scmp.ne.s32.totalorder %s22, %s25
    %p31 = scmp.eq.s32.totalorder %s12, 0
    %p32 = por %p30, %p31
    %p33 = scmp.ne.s32.totalorder %s22, %s25
    %p34 = scmp.eq.s32.totalorder %s17, 1
    %p35 = por %p33, %p34
    %p36 = scmp.ne.s32.totalorder %s25, %s26
    %p37 = scmp.eq.s32.totalorder %s17, 0
    %p38 = por %p36, %p37
    %p39 = scmp.ne.s32.totalorder %s25, %s26
    %p40 = scmp.eq.s32.totalorder %s18, 1
    %p41 = por %p39, %p40
    %p43 = scmp.ne.s32.totalorder %s26, %s42
    %p44 = scmp.eq.s32.totalorder %s18, 0
    %p45 = por %p43, %p44
    %s47 = sadd.s32 %s46, 1
    %p50 = scmp.eq.s32.totalorder %s12, 1
    %p51 = scmp.ne.s32.totalorder %s46, %s48
    %p52 = scmp.eq.s32.totalorder %s12, 0
    %p53 = por %p51, %p52
    %p54 = scmp.ne.s32.totalorder %s46, %s48
    %p55 = scmp.eq.s32.totalorder %s17, 1
    %p56 = por %p54, %p55
    %p57 = scmp.ne.s32.totalorder %s48, %s49
    %p58 = scmp.eq.s32.totalorder %s17, 0
    %p59 = por %p57, %p58
    %p60 = scmp.ne.s32.totalorder %s48, %s49
    %p61 = scmp.eq.s32.totalorder %s18, 1
    %p62 = por %p60, %p61
    %p64 = scmp.ne.s32.totalorder %s49, %s63
    %p65 = scmp.eq.s32.totalorder %s18, 0
    %p66 = por %p64, %p65
    %s68 = sadd.s32 %s67, 1
    %p71 = scmp.eq.s32.totalorder %s12, 1
    %p72 = scmp.ne.s32.totalorder %s67, %s69
    %p73 = scmp.eq.s32.totalorder %s12, 0
    %p74 = por %p72, %p73
    %p75 = scmp.ne.s32.totalorder %s67, %s69
    %p76 = scmp.eq.s32.totalorder %s17, 1
    %p77 = por %p75, %p76
    %p78 = scmp.ne.s32.totalorder %s69, %s70
    %p79 = scmp.eq.s32.totalorder %s17, 0
    %p80 = por %p78, %p79
    %p81 = scmp.ne.s32.totalorder %s69, %s70
    %p82 = scmp.eq.s32.totalorder %s18, 1
    %p83 = por %p81, %p82
    %p85 = scmp.ne.s32.totalorder %s70, %s84
    %p86 = scmp.eq.s32.totalorder %s18, 0
    %p87 = por %p85, %p86
    %s89 = sadd.s32 %s88, 1
    %p92 = scmp.eq.s32.totalorder %s12, 1
    %p93 = scmp.ne.s32.totalorder %s88, %s90
    %p94 = scmp.eq.s32.totalorder %s12, 0
    %p95 = por %p93, %p94
    %p96 = scmp.ne.s32.totalorder %s88, %s90
    %p97 = scmp.eq.s32.totalorder %s17, 1
    %p98 = por %p96, %p97
    %p99 = scmp.ne.s32.totalorder %s90, %s91
    %p100 = scmp.eq.s32.totalorder %s17, 0
    %p101 = por %p99, %p100
    %p102 = scmp.ne.s32.totalorder %s90, %s91
    %p103 = scmp.eq.s32.totalorder %s18, 1
    %p104 = por %p102, %p103
    %p106 = scmp.ne.s32.totalorder %s91, %s105
    %p107 = scmp.eq.s32.totalorder %s18, 0
    %p108 = por %p106, %p107
    %s109 = ssub.s32 %s12, %s19
    %p110 = scmp.eq.s32.totalorder %s109, 0
    %s112 = sadd.s32 %s111, 1
    %s113 = scalar_select %p110, %s111, %s112
    %p116 = pneg %p110
    %p117 = scmp.eq.s32.totalorder %s12, 1
    %p118 = por %p116, %p117
    %p119 = scmp.ne.s32.totalorder %s111, %s114
    %p120 = scmp.eq.s32.totalorder %s12, 0
    %p121 = por %p119, %p120
    %p122 = scmp.ne.s32.totalorder %s111, %s114
    %p123 = scmp.eq.s32.totalorder %s17, 1
    %p124 = por %p122, %p123
    %p125 = scmp.ne.s32.totalorder %s114, %s115
    %p126 = scmp.eq.s32.totalorder %s17, 0
    %p127 = por %p125, %p126
    %p128 = scmp.ne.s32.totalorder %s114, %s115
    %p129 = scmp.eq.s32.totalorder %s18, 1
    %p130 = por %p128, %p129
    %p132 = scmp.ne.s32.totalorder %s115, %s131
    %p133 = scmp.eq.s32.totalorder %s18, 0
    %p134 = por %p132, %p133
    %s135 = ssub.s32 %s12, %s19
    %p136 = scmp.eq.s32.totalorder %s135, 0
    %s138 = sadd.s32 %s137, 1
    %s139 = scalar_select %p136, %s137, %s138
    %p142 = pneg %p136
    %p143 = scmp.eq.s32.totalorder %s12, 1
    %p144 = por %p142, %p143
    %p145 = scmp.ne.s32.totalorder %s137, %s140
    %p146 = scmp.eq.s32.totalorder %s12, 0
    %p147 = por %p145, %p146
    %p148 = scmp.ne.s32.totalorder %s137, %s140
    %p149 = scmp.eq.s32.totalorder %s17, 1
    %p150 = por %p148, %p149
    %p151 = scmp.ne.s32.totalorder %s140, %s141
    %p152 = scmp.eq.s32.totalorder %s17, 0
    %p153 = por %p151, %p152
    %p154 = scmp.ne.s32.totalorder %s140, %s141
    %p155 = scmp.eq.s32.totalorder %s18, 1
    %p156 = por %p154, %p155
    %p158 = scmp.ne.s32.totalorder %s141, %s157
    %p159 = scmp.eq.s32.totalorder %s18, 0
    %p160 = por %p158, %p159
    %p161 = scmp.le.s32.totalorder 1, %s12
    %p162 = scmp.lt.s32.totalorder %s12, 3
    %p163 = pnand %p161, %p162
    %p164 = pneg %p163
    // Predicated region
    $region9: #{_bottleneck_impl.5} parent=5 // pred_check
      _
    $region10: #{_bottleneck_impl.5} parent=5 // pred_check_branch
      %166 = sbr.rel (%p163) target = $region12
    $region11: #{_bottleneck_impl.5} parent=5 // pred_region
      %s167 = ssub.s32 %s12, 1
      // Predicated region
      $region13: #{_bottleneck_impl.5} parent=11 // pred_check
        %p168 = pneg %p59
      $region14: #{_bottleneck_impl.5} parent=11 // pred_check_branch
        %170 = sbr.rel (%p168) target = $region16
      $region15: #{_bottleneck_impl.5} parent=11 // pred_region
        _
      $region16: #{_bottleneck_impl.5} parent=11 // pred_fallthru
        _
      // Predicated region
      $region17: #{_bottleneck_impl.5} parent=11 // pred_check
        %p171 = pneg %p80
      $region18: #{_bottleneck_impl.5} parent=11 // pred_check_branch
        %173 = sbr.rel (%p171) target = $region20
      $region19: #{_bottleneck_impl.5} parent=11 // pred_region
        _
      $region20: #{_bottleneck_impl.5} parent=11 // pred_fallthru
        _
      // Predicated region
      $region21: #{_bottleneck_impl.5} parent=11 // pred_check
        %p174 = pneg %p101
      $region22: #{_bottleneck_impl.5} parent=11 // pred_check_branch
        %176 = sbr.rel (%p174) target = $region24
      $region23: #{_bottleneck_impl.5} parent=11 // pred_region
        _
      $region24: #{_bottleneck_impl.5} parent=11 // pred_fallthru
        _
    $region12: #{_bottleneck_impl.5} parent=5 // pred_fallthru
      _
    %p177 = scmp.lt.s32.totalorder %s12, 2
    // Predicated region
    $region25: #{_bottleneck_impl.5} parent=5 // pred_check
      %p178 = pneg %p177
    $region26: #{_bottleneck_impl.5} parent=5 // pred_check_branch
      %180 = sbr.rel (%p178) target = $region28
    $region27: #{_bottleneck_impl.5} parent=5 // pred_region
      // Predicated region
      $region29: #{_bottleneck_impl.5} parent=27 // pred_check
        %p181 = pneg %p32
      $region30: #{_bottleneck_impl.5} parent=27 // pred_check_branch
        %183 = sbr.rel (%p181) target = $region32
      $region31: #{_bottleneck_impl.5} parent=27 // pred_region
        %p184 = scmp.lt.s32.totalorder %s12, 1
        %s185 = scalar_select %p184, %s12, 1
        %s186 = smul.addr %s185, 32
        %s187 = smul.addr %s186, 8
        %s188 = scalar_lea.vmem %s0, %s187
      $region32: #{_bottleneck_impl.5} parent=27 // pred_fallthru
        _
    $region28: #{_bottleneck_impl.5} parent=5 // pred_fallthru
      _
    %p189 = scmp.le.s32.totalorder 1, %s12
    %p190 = scmp.lt.s32.totalorder %s12, 3
    %p191 = pnand %p189, %p190
    %p192 = pneg %p191
    // Predicated region
    $region33: #{_bottleneck_impl.5} parent=5 // pred_check
      _
    $region34: #{_bottleneck_impl.5} parent=5 // pred_check_branch
      %194 = sbr.rel (%p191) target = $region36
    $region35: #{_bottleneck_impl.5} parent=5 // pred_region
      %s195 = ssub.s32 %s12, 1
      %p196 = scmp.lt.s32.totalorder %s17, 1
      %s197 = scalar_select %p196, %s17, 1
      %s198 = smul.addr %s197, 32
      %s199 = smul.addr %s198, 8
      %s200 = scalar_lea.vmem %s0, %s199
      %p201 = pneg %p38
      %p202 = pneg %p35
      %p203 = pneg %p59
      %p204 = pneg %p56
      %p205 = pneg %p80
      %p206 = pneg %p77
      %p207 = pneg %p101
      %p208 = pneg %p98
      %p209 = pneg %p127
      %p210 = pneg %p124
      %p211 = scmp.lt.s32.totalorder %s17, 1
      %s212 = scalar_select %p211, %s17, 1
      %s213 = smul.addr %s212, 32
      %s214 = smul.addr %s213, 8
      %s215 = scalar_lea.vmem %s4, %s214
      %p216 = pneg %p153
      %p217 = pneg %p150
      %p218 = scmp.lt.s32.totalorder %s17, 1
      %s219 = scalar_select %p218, %s17, 1
      %s220 = smul.addr %s219, 2
      %s221 = scalar_lea.vmem %s5, %s220
      %p222 = scmp.lt.s32.totalorder %s17, 1
      %s223 = scalar_select %p222, %s17, 1
      %s224 = smul.addr %s223, 32
      %s225 = smul.addr %s224, 8
      %s226 = scalar_lea.vmem %s0, %s225
      %p227 = scmp.lt.s32.totalorder %s17, 1
      %s228 = scalar_select %p227, %s17, 1
      %s229 = smul.addr %s228, 32
      %s230 = smul.addr %s229, 8
      %s231 = scalar_lea.vmem %s4, %s230
      %p232 = scmp.lt.s32.totalorder %s17, 1
      %s233 = scalar_select %p232, %s17, 1
      %s234 = smul.addr %s233, 2
      %s235 = scalar_lea.vmem %s5, %s234
      %v237 = vld [vmem:[%s226] sm:$0xff]
      %v238 = vld [vmem:[%s226 + $0x8] sm:$0xff]
      %v239 = vld [vmem:[%s226 + $0x10] sm:$0xff]
      %v240 = vld [vmem:[%s226 + $0x18] sm:$0xff]
      %v241 = vld [vmem:[%s226 + $0x20] sm:$0xff]
      %v242 = vld [vmem:[%s226 + $0x28] sm:$0xff]
      %v243 = vld [vmem:[%s226 + $0x30] sm:$0xff]
      %v244 = vld [vmem:[%s226 + $0x38] sm:$0xff]
      %v245 = vld [vmem:[%s226 + $0x40] sm:$0xff]
      %v246 = vld [vmem:[%s226 + $0x48] sm:$0xff]
      %v247 = vld [vmem:[%s226 + $0x50] sm:$0xff]
      %v248 = vld [vmem:[%s226 + $0x58] sm:$0xff]
      %v249 = vld [vmem:[%s226 + $0x60] sm:$0xff]
      %v250 = vld [vmem:[%s226 + $0x68] sm:$0xff]
      %v251 = vld [vmem:[%s226 + $0x70] sm:$0xff]
      %v252 = vld [vmem:[%s226 + $0x78] sm:$0xff]
      %v253 = vld [vmem:[%s226 + $0x80] sm:$0xff]
      %v254 = vld [vmem:[%s226 + $0x88] sm:$0xff]
      %v255 = vld [vmem:[%s226 + $0x90] sm:$0xff]
      %v256 = vld [vmem:[%s226 + $0x98] sm:$0xff]
      %v257 = vld [vmem:[%s226 + $0xa0] sm:$0xff]
      %v258 = vld [vmem:[%s226 + $0xa8] sm:$0xff]
      %v259 = vld [vmem:[%s226 + $0xb0] sm:$0xff]
      %v260 = vld [vmem:[%s226 + $0xb8] sm:$0xff]
      %v261 = vld [vmem:[%s226 + $0xc0] sm:$0xff]
      %v262 = vld [vmem:[%s226 + $0xc8] sm:$0xff]
      %v263 = vld [vmem:[%s226 + $0xd0] sm:$0xff]
      %v264 = vld [vmem:[%s226 + $0xd8] sm:$0xff]
      %v265 = vld [vmem:[%s226 + $0xe0] sm:$0xff]
      %v266 = vld [vmem:[%s226 + $0xe8] sm:$0xff]
      %v267 = vld [vmem:[%s226 + $0xf0] sm:$0xff]
      %v268 = vld [vmem:[%s226 + $0xf8] sm:$0xff]
      %v269 = vld [vmem:[%s1] sm:$0x1]
      %v271 = vlaneseq
      %v272 = vshrl.u32 %v271, 7
      %v273 = vsub.s32 0, %v272
      %v274 = vrot.slane %v269, %v273
      %v276 = vmul.f32 %v237, %v274
      %v277 = vmul.f32 %v238, %v274
      %v278 = vmul.f32 %v239, %v274
      %v279 = vmul.f32 %v240, %v274
      %v280 = vmul.f32 %v241, %v274
      %v281 = vmul.f32 %v242, %v274
      %v282 = vmul.f32 %v243, %v274
      %v283 = vmul.f32 %v244, %v274
      %v284 = vmul.f32 %v245, %v274
      %v285 = vmul.f32 %v246, %v274
      %v286 = vmul.f32 %v247, %v274
      %v287 = vmul.f32 %v248, %v274
      %v288 = vmul.f32 %v249, %v274
      %v289 = vmul.f32 %v250, %v274
      %v290 = vmul.f32 %v251, %v274
      %v291 = vmul.f32 %v252, %v274
      %v292 = vmul.f32 %v253, %v274
      %v293 = vmul.f32 %v254, %v274
      %v294 = vmul.f32 %v255, %v274
      %v295 = vmul.f32 %v256, %v274
      %v296 = vmul.f32 %v257, %v274
      %v297 = vmul.f32 %v258, %v274
      %v298 = vmul.f32 %v259, %v274
      %v299 = vmul.f32 %v260, %v274
      %v300 = vmul.f32 %v261, %v274
      %v301 = vmul.f32 %v262, %v274
      %v302 = vmul.f32 %v263, %v274
      %v303 = vmul.f32 %v264, %v274
      %v304 = vmul.f32 %v265, %v274
      %v305 = vmul.f32 %v266, %v274
      %v306 = vmul.f32 %v267, %v274
      %v307 = vmul.f32 %v268, %v274
      %v308 = vld [vmem:[%s2] sm:$0x1]
      %v310 = vlaneseq
      %v311 = vshrl.u32 %v310, 7
      %v312 = vsub.s32 0, %v311
      %v313 = vrot.slane %v308, %v312
      %v315 = vadd.f32 %v276, %v313
      %v316 = vadd.f32 %v277, %v313
      %v317 = vadd.f32 %v278, %v313
      %v318 = vadd.f32 %v279, %v313
      %v319 = vadd.f32 %v280, %v313
      %v320 = vadd.f32 %v281, %v313
      %v321 = vadd.f32 %v282, %v313
      %v322 = vadd.f32 %v283, %v313
      %v323 = vadd.f32 %v284, %v313
      %v324 = vadd.f32 %v285, %v313
      %v325 = vadd.f32 %v286, %v313
      %v326 = vadd.f32 %v287, %v313
      %v327 = vadd.f32 %v288, %v313
      %v328 = vadd.f32 %v289, %v313
      %v329 = vadd.f32 %v290, %v313
      %v330 = vadd.f32 %v291, %v313
      %v331 = vadd.f32 %v292, %v313
      %v332 = vadd.f32 %v293, %v313
      %v333 = vadd.f32 %v294, %v313
      %v334 = vadd.f32 %v295, %v313
      %v335 = vadd.f32 %v296, %v313
      %v336 = vadd.f32 %v297, %v313
      %v337 = vadd.f32 %v298, %v313
      %v338 = vadd.f32 %v299, %v313
      %v339 = vadd.f32 %v300, %v313
      %v340 = vadd.f32 %v301, %v313
      %v341 = vadd.f32 %v302, %v313
      %v342 = vadd.f32 %v303, %v313
      %v343 = vadd.f32 %v304, %v313
      %v344 = vadd.f32 %v305, %v313
      %v345 = vadd.f32 %v306, %v313
      %v346 = vadd.f32 %v307, %v313
      %v347 = vmax.f32 %v315, 0.0
      %v348 = vmax.f32 %v316, 0.0
      %v349 = vmax.f32 %v317, 0.0
      %v350 = vmax.f32 %v318, 0.0
      %v351 = vmax.f32 %v319, 0.0
      %v352 = vmax.f32 %v320, 0.0
      %v353 = vmax.f32 %v321, 0.0
      %v354 = vmax.f32 %v322, 0.0
      %v355 = vmax.f32 %v323, 0.0
      %v356 = vmax.f32 %v324, 0.0
      %v357 = vmax.f32 %v325, 0.0
      %v358 = vmax.f32 %v326, 0.0
      %v359 = vmax.f32 %v327, 0.0
      %v360 = vmax.f32 %v328, 0.0
      %v361 = vmax.f32 %v329, 0.0
      %v362 = vmax.f32 %v330, 0.0
      %v363 = vmax.f32 %v331, 0.0
      %v364 = vmax.f32 %v332, 0.0
      %v365 = vmax.f32 %v333, 0.0
      %v366 = vmax.f32 %v334, 0.0
      %v367 = vmax.f32 %v335, 0.0
      %v368 = vmax.f32 %v336, 0.0
      %v369 = vmax.f32 %v337, 0.0
      %v370 = vmax.f32 %v338, 0.0
      %v371 = vmax.f32 %v339, 0.0
      %v372 = vmax.f32 %v340, 0.0
      %v373 = vmax.f32 %v341, 0.0
      %v374 = vmax.f32 %v342, 0.0
      %v375 = vmax.f32 %v343, 0.0
      %v376 = vmax.f32 %v344, 0.0
      %v377 = vmax.f32 %v345, 0.0
      %v378 = vmax.f32 %v346, 0.0
      %379 = vst [vmem:[#allocation2] sm:$0xf] 0
      %380 = vst [vmem:[#allocation2 + $0x4] sm:$0xf] 0
      %381 = vst [vmem:[#allocation2 + $0x8] sm:$0x1] 0
      %382 = vst [vmem:[#allocation2 + $0xc] sm:$0xf] 0
      %383 = vst [vmem:[#allocation2 + $0x10] sm:$0xf] 0
      %384 = vst [vmem:[#allocation2 + $0x14] sm:$0x1] 0
      %385 = vst [vmem:[#allocation2 + $0x18] sm:$0xf] 0
      %386 = vst [vmem:[#allocation2 + $0x1c] sm:$0xf] 0
      %387 = vst [vmem:[#allocation2 + $0x20] sm:$0x1] 0
      %388 = vst [vmem:[#allocation2 + $0x24] sm:$0xf] 0
      %389 = vst [vmem:[#allocation2 + $0x28] sm:$0xf] 0
      %390 = vst [vmem:[#allocation2 + $0x2c] sm:$0x1] 0
      %391 = vst [vmem:[#allocation2 + $0x30] sm:$0xf] 0
      %392 = vst [vmem:[#allocation2 + $0x34] sm:$0xf] 0
      %393 = vst [vmem:[#allocation2 + $0x38] sm:$0x1] 0
      %394 = vst [vmem:[#allocation2 + $0x3c] sm:$0xf] 0
      %395 = vst [vmem:[#allocation2 + $0x40] sm:$0xf] 0
      %396 = vst [vmem:[#allocation2 + $0x44] sm:$0x1] 0
      %397 = vst [vmem:[#allocation2 + $0x48] sm:$0xf] 0
      %398 = vst [vmem:[#allocation2 + $0x4c] sm:$0xf] 0
      %399 = vst [vmem:[#allocation2 + $0x50] sm:$0x1] 0
      %400 = vst [vmem:[#allocation2 + $0x54] sm:$0xf] 0
      %401 = vst [vmem:[#allocation2 + $0x58] sm:$0xf] 0
      %402 = vst [vmem:[#allocation2 + $0x5c] sm:$0x1] 0
      %403 = vst [vmem:[#allocation2 + $0x60] sm:$0xf] 0
      %404 = vst [vmem:[#allocation2 + $0x64] sm:$0xf] 0
      %405 = vst [vmem:[#allocation2 + $0x68] sm:$0x1] 0
      %406 = vst [vmem:[#allocation2 + $0x6c] sm:$0xf] 0
      %407 = vst [vmem:[#allocation2 + $0x70] sm:$0xf] 0
      %408 = vst [vmem:[#allocation2 + $0x74] sm:$0x1] 0
      %409 = vst [vmem:[#allocation2 + $0x78] sm:$0xf] 0
      %410 = vst [vmem:[#allocation2 + $0x7c] sm:$0xf] 0
      %411 = vst [vmem:[#allocation2 + $0x80] sm:$0x1] 0
      %412 = vst [vmem:[#allocation2 + $0x84] sm:$0xf] 0
      %413 = vst [vmem:[#allocation2 + $0x88] sm:$0xf] 0
      %414 = vst [vmem:[#allocation2 + $0x8c] sm:$0x1] 0
      %415 = vst [vmem:[#allocation2 + $0x90] sm:$0xf] 0
      %416 = vst [vmem:[#allocation2 + $0x94] sm:$0xf] 0
      %417 = vst [vmem:[#allocation2 + $0x98] sm:$0x1] 0
      %418 = vst [vmem:[#allocation2 + $0x9c] sm:$0xf] 0
      %419 = vst [vmem:[#allocation2 + $0xa0] sm:$0xf] 0
      %420 = vst [vmem:[#allocation2 + $0xa4] sm:$0x1] 0
      %421 = vst [vmem:[#allocation2 + $0xa8] sm:$0xf] 0
      %422 = vst [vmem:[#allocation2 + $0xac] sm:$0xf] 0
      %423 = vst [vmem:[#allocation2 + $0xb0] sm:$0x1] 0
      %424 = vst [vmem:[#allocation2 + $0xb4] sm:$0xf] 0
      %425 = vst [vmem:[#allocation2 + $0xb8] sm:$0xf] 0
      %426 = vst [vmem:[#allocation2 + $0xbc] sm:$0x1] 0
      %427 = vst [vmem:[#allocation2 + $0xc0] sm:$0xf] 0
      %428 = vst [vmem:[#allocation2 + $0xc4] sm:$0xf] 0
      %429 = vst [vmem:[#allocation2 + $0xc8] sm:$0x1] 0
      %430 = vst [vmem:[#allocation2 + $0xcc] sm:$0xf] 0
      %431 = vst [vmem:[#allocation2 + $0xd0] sm:$0xf] 0
      %432 = vst [vmem:[#allocation2 + $0xd4] sm:$0x1] 0
      %v433 = vpack.c.bf16 %v348, %v347
      %v434 = vpack.c.bf16 %v350, %v349
      %v435 = vpack.c.bf16 %v352, %v351
      %v436 = vpack.c.bf16 %v354, %v353
      %v437 = vpack.c.bf16 %v356, %v355
      %v438 = vpack.c.bf16 %v358, %v357
      %v439 = vpack.c.bf16 %v360, %v359
      %v440 = vpack.c.bf16 %v362, %v361
      %v441 = vpack.c.bf16 %v364, %v363
      %v442 = vpack.c.bf16 %v366, %v365
      %v443 = vpack.c.bf16 %v368, %v367
      %v444 = vpack.c.bf16 %v370, %v369
      %v445 = vpack.c.bf16 %v372, %v371
      %v446 = vpack.c.bf16 %v374, %v373
      %v447 = vpack.c.bf16 %v376, %v375
      %v448 = vpack.c.bf16 %v378, %v377
      %v465 = vunpack.c.l.b16 %v433
      %v466 = vunpack.c.h.b16 %v433
      %v467 = vunpack.c.l.b16 %v434
      %v468 = vunpack.c.h.b16 %v434
      %v469 = vunpack.c.l.b16 %v435
      %v470 = vunpack.c.h.b16 %v435
      %v471 = vunpack.c.l.b16 %v436
      %v472 = vunpack.c.h.b16 %v436
      %v473 = vunpack.c.l.b16 %v437
      %v474 = vunpack.c.h.b16 %v437
      %v475 = vunpack.c.l.b16 %v438
      %v476 = vunpack.c.h.b16 %v438
      %v477 = vunpack.c.l.b16 %v439
      %v478 = vunpack.c.h.b16 %v439
      %v479 = vunpack.c.l.b16 %v440
      %v480 = vunpack.c.h.b16 %v440
      %v481 = vunpack.c.l.b16 %v441
      %v482 = vunpack.c.h.b16 %v441
      %v483 = vunpack.c.l.b16 %v442
      %v484 = vunpack.c.h.b16 %v442
      %v485 = vunpack.c.l.b16 %v443
      %v486 = vunpack.c.h.b16 %v443
      %v487 = vunpack.c.l.b16 %v444
      %v488 = vunpack.c.h.b16 %v444
      %v489 = vunpack.c.l.b16 %v445
      %v490 = vunpack.c.h.b16 %v445
      %v491 = vunpack.c.l.b16 %v446
      %v492 = vunpack.c.h.b16 %v446
      %v493 = vunpack.c.l.b16 %v447
      %v494 = vunpack.c.h.b16 %v447
      %v495 = vunpack.c.l.b16 %v448
      %v496 = vunpack.c.h.b16 %v448
      %v497 = vpack.c.b16 %v465, %v465
      %v498 = vpack.c.b16 %v466, %v466
      %v499 = vpack.c.b16 %v467, %v467
      %v500 = vpack.c.b16 %v468, %v468
      %v501 = vpack.c.b16 %v469, %v469
      %v502 = vpack.c.b16 %v470, %v470
      %v503 = vpack.c.b16 %v471, %v471
      %v504 = vpack.c.b16 %v472, %v472
      %v505 = vpack.c.b16 %v473, %v473
      %v506 = vpack.c.b16 %v474, %v474
      %v507 = vpack.c.b16 %v475, %v475
      %v508 = vpack.c.b16 %v476, %v476
      %v509 = vpack.c.b16 %v477, %v477
      %v510 = vpack.c.b16 %v478, %v478
      %v511 = vpack.c.b16 %v479, %v479
      %v512 = vpack.c.b16 %v480, %v480
      %v513 = vpack.c.b16 %v481, %v481
      %v514 = vpack.c.b16 %v482, %v482
      %v515 = vpack.c.b16 %v483, %v483
      %v516 = vpack.c.b16 %v484, %v484
      %v517 = vpack.c.b16 %v485, %v485
      %v518 = vpack.c.b16 %v486, %v486
      %v519 = vpack.c.b16 %v487, %v487
      %v520 = vpack.c.b16 %v488, %v488
      %v521 = vpack.c.b16 %v489, %v489
      %v522 = vpack.c.b16 %v490, %v490
      %v523 = vpack.c.b16 %v491, %v491
      %v524 = vpack.c.b16 %v492, %v492
      %v525 = vpack.c.b16 %v493, %v493
      %v526 = vpack.c.b16 %v494, %v494
      %v527 = vpack.c.b16 %v495, %v495
      %v528 = vpack.c.b16 %v496, %v496
      %vm529 = vsmask.f32 256
      %vm530 = vsmask.f32 4368
      %vm531 = vmor %vm529, %vm530
      %v533 = vshrl.u32 %v497, 16
      %v535 = vrot.slane %v533, 7
      %v536 = vshll.u32 %v497, 16
      %v538 = vor.u32 %v535, %v536
      %v539 = vrot.slane %v535, 4
      %v541 = vshrl.u32 %v498, 16
      %v543 = vrot.slane %v541, 7
      %v544 = vshll.u32 %v498, 16
      %v546 = vor.u32 %v543, %v544
      %v547 = vsel %vm531, %v539, %v546
      %v548 = vrot.slane %v543, 4
      %v550 = vshrl.u32 %v499, 16
      %v552 = vrot.slane %v550, 7
      %v553 = vshll.u32 %v499, 16
      %v555 = vor.u32 %v552, %v553
      %v556 = vrot.slane %v552, 4
      %v558 = vshrl.u32 %v500, 16
      %v560 = vrot.slane %v558, 7
      %v561 = vshll.u32 %v500, 16
      %v563 = vor.u32 %v560, %v561
      %v564 = vsel %vm531, %v556, %v563
      %v565 = vrot.slane %v560, 4
      %v567 = vshrl.u32 %v501, 16
      %v569 = vrot.slane %v567, 7
      %v570 = vshll.u32 %v501, 16
      %v572 = vor.u32 %v569, %v570
      %v573 = vrot.slane %v569, 4
      %v575 = vshrl.u32 %v502, 16
      %v577 = vrot.slane %v575, 7
      %v578 = vshll.u32 %v502, 16
      %v580 = vor.u32 %v577, %v578
      %v581 = vsel %vm531, %v573, %v580
      %v582 = vrot.slane %v577, 4
      %v584 = vshrl.u32 %v503, 16
      %v586 = vrot.slane %v584, 7
      %v587 = vshll.u32 %v503, 16
      %v589 = vor.u32 %v586, %v587
      %v590 = vrot.slane %v586, 4
      %v592 = vshrl.u32 %v504, 16
      %v594 = vrot.slane %v592, 7
      %v595 = vshll.u32 %v504, 16
      %v597 = vor.u32 %v594, %v595
      %v598 = vsel %vm531, %v590, %v597
      %v599 = vrot.slane %v594, 4
      %v601 = vshrl.u32 %v505, 16
      %v603 = vrot.slane %v601, 7
      %v604 = vshll.u32 %v505, 16
      %v606 = vor.u32 %v603, %v604
      %v607 = vrot.slane %v603, 4
      %v609 = vshrl.u32 %v506, 16
      %v611 = vrot.slane %v609, 7
      %v612 = vshll.u32 %v506, 16
      %v614 = vor.u32 %v611, %v612
      %v615 = vsel %vm531, %v607, %v614
      %v616 = vrot.slane %v611, 4
      %v618 = vshrl.u32 %v507, 16
      %v620 = vrot.slane %v618, 7
      %v621 = vshll.u32 %v507, 16
      %v623 = vor.u32 %v620, %v621
      %v624 = vrot.slane %v620, 4
      %v626 = vshrl.u32 %v508, 16
      %v628 = vrot.slane %v626, 7
      %v629 = vshll.u32 %v508, 16
      %v631 = vor.u32 %v628, %v629
      %v632 = vsel %vm531, %v624, %v631
      %v633 = vrot.slane %v628, 4
      %v635 = vshrl.u32 %v509, 16
      %v637 = vrot.slane %v635, 7
      %v638 = vshll.u32 %v509, 16
      %v640 = vor.u32 %v637, %v638
      %v641 = vrot.slane %v637, 4
      %v643 = vshrl.u32 %v510, 16
      %v645 = vrot.slane %v643, 7
      %v646 = vshll.u32 %v510, 16
      %v648 = vor.u32 %v645, %v646
      %v649 = vsel %vm531, %v641, %v648
      %v650 = vrot.slane %v645, 4
      %v652 = vshrl.u32 %v511, 16
      %v654 = vrot.slane %v652, 7
      %v655 = vshll.u32 %v511, 16
      %v657 = vor.u32 %v654, %v655
      %v658 = vrot.slane %v654, 4
      %v660 = vshrl.u32 %v512, 16
      %v662 = vrot.slane %v660, 7
      %v663 = vshll.u32 %v512, 16
      %v665 = vor.u32 %v662, %v663
      %v666 = vsel %vm531, %v658, %v665
      %v667 = vrot.slane %v662, 4
      %v669 = vshrl.u32 %v513, 16
      %v671 = vrot.slane %v669, 7
      %v672 = vshll.u32 %v513, 16
      %v674 = vor.u32 %v671, %v672
      %v675 = vrot.slane %v671, 4
      %v677 = vshrl.u32 %v514, 16
      %v679 = vrot.slane %v677, 7
      %v680 = vshll.u32 %v514, 16
      %v682 = vor.u32 %v679, %v680
      %v683 = vsel %vm531, %v675, %v682
      %v684 = vrot.slane %v679, 4
      %v686 = vshrl.u32 %v515, 16
      %v688 = vrot.slane %v686, 7
      %v689 = vshll.u32 %v515, 16
      %v691 = vor.u32 %v688, %v689
      %v692 = vrot.slane %v688, 4
      %v694 = vshrl.u32 %v516, 16
      %v696 = vrot.slane %v694, 7
      %v697 = vshll.u32 %v516, 16
      %v699 = vor.u32 %v696, %v697
      %v700 = vsel %vm531, %v692, %v699
      %v701 = vrot.slane %v696, 4
      %v703 = vshrl.u32 %v517, 16
      %v705 = vrot.slane %v703, 7
      %v706 = vshll.u32 %v517, 16
      %v708 = vor.u32 %v705, %v706
      %v709 = vrot.slane %v705, 4
      %v711 = vshrl.u32 %v518, 16
      %v713 = vrot.slane %v711, 7
      %v714 = vshll.u32 %v518, 16
      %v716 = vor.u32 %v713, %v714
      %v717 = vsel %vm531, %v709, %v716
      %v718 = vrot.slane %v713, 4
      %v720 = vshrl.u32 %v519, 16
      %v722 = vrot.slane %v720, 7
      %v723 = vshll.u32 %v519, 16
      %v725 = vor.u32 %v722, %v723
      %v726 = vrot.slane %v722, 4
      %v728 = vshrl.u32 %v520, 16
      %v730 = vrot.slane %v728, 7
      %v731 = vshll.u32 %v520, 16
      %v733 = vor.u32 %v730, %v731
      %v734 = vsel %vm531, %v726, %v733
      %v735 = vrot.slane %v730, 4
      %v737 = vshrl.u32 %v521, 16
      %v739 = vrot.slane %v737, 7
      %v740 = vshll.u32 %v521, 16
      %v742 = vor.u32 %v739, %v740
      %v743 = vrot.slane %v739, 4
      %v745 = vshrl.u32 %v522, 16
      %v747 = vrot.slane %v745, 7
      %v748 = vshll.u32 %v522, 16
      %v750 = vor.u32 %v747, %v748
      %v751 = vsel %vm531, %v743, %v750
      %v752 = vrot.slane %v747, 4
      %v754 = vshrl.u32 %v523, 16
      %v756 = vrot.slane %v754, 7
      %v757 = vshll.u32 %v523, 16
      %v759 = vor.u32 %v756, %v757
      %v760 = vrot.slane %v756, 4
      %v762 = vshrl.u32 %v524, 16
      %v764 = vrot.slane %v762, 7
      %v765 = vshll.u32 %v524, 16
      %v767 = vor.u32 %v764, %v765
      %v768 = vsel %vm531, %v760, %v767
      %v769 = vrot.slane %v764, 4
      %v771 = vshrl.u32 %v525, 16
      %v773 = vrot.slane %v771, 7
      %v774 = vshll.u32 %v525, 16
      %v776 = vor.u32 %v773, %v774
      %v777 = vrot.slane %v773, 4
      %v779 = vshrl.u32 %v526, 16
      %v781 = vrot.slane %v779, 7
      %v782 = vshll.u32 %v526, 16
      %v784 = vor.u32 %v781, %v782
      %v785 = vsel %vm531, %v777, %v784
      %v786 = vrot.slane %v781, 4
      %v788 = vshrl.u32 %v527, 16
      %v790 = vrot.slane %v788, 7
      %v791 = vshll.u32 %v527, 16
      %v793 = vor.u32 %v790, %v791
      %v794 = vrot.slane %v790, 4
      %v796 = vshrl.u32 %v528, 16
      %v798 = vrot.slane %v796, 7
      %v799 = vshll.u32 %v528, 16
      %v801 = vor.u32 %v798, %v799
      %v802 = vsel %vm531, %v794, %v801
      %v803 = vrot.slane %v798, 4
      %s852 = scalar_lea.vmem [#allocation2], 12
      %vm853 = vcmask 1043456
      %vm854 = vsmask.f32 7938
      %vm855 = vmand %vm853, %vm854
      %v856 = vld [vmem:[%s852] sm:$0xf]
      %v857 = vsel %vm855, %v538, %v856
      %858 = vst [vmem:[%s852] sm:$0xf] %v857
      %859 = vst [vmem:[%s852 + $0x4] sm:$0xf] %v547
      %vm860 = vcmask 1040384
      %vm861 = vmand %vm860, %vm529
      %v862 = vld [vmem:[%s852 + $0x8] sm:$0x1]
      %v863 = vsel %vm861, %v548, %v862
      %864 = vst [vmem:[%s852 + $0x8] sm:$0x1] %v863
      %v865 = vld [vmem:[%s852 + $0xc] sm:$0xf]
      %v866 = vsel %vm855, %v555, %v865
      %867 = vst [vmem:[%s852 + $0xc] sm:$0xf] %v866
      %868 = vst [vmem:[%s852 + $0x10] sm:$0xf] %v564
      %v869 = vld [vmem:[%s852 + $0x14] sm:$0x1]
      %v870 = vsel %vm861, %v565, %v869
      %871 = vst [vmem:[%s852 + $0x14] sm:$0x1] %v870
      %v872 = vld [vmem:[%s852 + $0x18] sm:$0xf]
      %v873 = vsel %vm855, %v572, %v872
      %874 = vst [vmem:[%s852 + $0x18] sm:$0xf] %v873
      %875 = vst [vmem:[%s852 + $0x1c] sm:$0xf] %v581
      %v876 = vld [vmem:[%s852 + $0x20] sm:$0x1]
      %v877 = vsel %vm861, %v582, %v876
      %878 = vst [vmem:[%s852 + $0x20] sm:$0x1] %v877
      %v879 = vld [vmem:[%s852 + $0x24] sm:$0xf]
      %v880 = vsel %vm855, %v589, %v879
      %881 = vst [vmem:[%s852 + $0x24] sm:$0xf] %v880
      %882 = vst [vmem:[%s852 + $0x28] sm:$0xf] %v598
      %v883 = vld [vmem:[%s852 + $0x2c] sm:$0x1]
      %v884 = vsel %vm861, %v599, %v883
      %885 = vst [vmem:[%s852 + $0x2c] sm:$0x1] %v884
      %v886 = vld [vmem:[%s852 + $0x30] sm:$0xf]
      %v887 = vsel %vm855, %v606, %v886
      %888 = vst [vmem:[%s852 + $0x30] sm:$0xf] %v887
      %889 = vst [vmem:[%s852 + $0x34] sm:$0xf] %v615
      %v890 = vld [vmem:[%s852 + $0x38] sm:$0x1]
      %v891 = vsel %vm861, %v616, %v890
      %892 = vst [vmem:[%s852 + $0x38] sm:$0x1] %v891
      %v893 = vld [vmem:[%s852 + $0x3c] sm:$0xf]
      %v894 = vsel %vm855, %v623, %v893
      %895 = vst [vmem:[%s852 + $0x3c] sm:$0xf] %v894
      %896 = vst [vmem:[%s852 + $0x40] sm:$0xf] %v632
      %v897 = vld [vmem:[%s852 + $0x44] sm:$0x1]
      %v898 = vsel %vm861, %v633, %v897
      %899 = vst [vmem:[%s852 + $0x44] sm:$0x1] %v898
      %v900 = vld [vmem:[%s852 + $0x48] sm:$0xf]
      %v901 = vsel %vm855, %v640, %v900
      %902 = vst [vmem:[%s852 + $0x48] sm:$0xf] %v901
      %903 = vst [vmem:[%s852 + $0x4c] sm:$0xf] %v649
      %v904 = vld [vmem:[%s852 + $0x50] sm:$0x1]
      %v905 = vsel %vm861, %v650, %v904
      %906 = vst [vmem:[%s852 + $0x50] sm:$0x1] %v905
      %v907 = vld [vmem:[%s852 + $0x54] sm:$0xf]
      %v908 = vsel %vm855, %v657, %v907
      %909 = vst [vmem:[%s852 + $0x54] sm:$0xf] %v908
      %910 = vst [vmem:[%s852 + $0x58] sm:$0xf] %v666
      %v911 = vld [vmem:[%s852 + $0x5c] sm:$0x1]
      %v912 = vsel %vm861, %v667, %v911
      %913 = vst [vmem:[%s852 + $0x5c] sm:$0x1] %v912
      %v914 = vld [vmem:[%s852 + $0x60] sm:$0xf]
      %v915 = vsel %vm855, %v674, %v914
      %916 = vst [vmem:[%s852 + $0x60] sm:$0xf] %v915
      %917 = vst [vmem:[%s852 + $0x64] sm:$0xf] %v683
      %v918 = vld [vmem:[%s852 + $0x68] sm:$0x1]
      %v919 = vsel %vm861, %v684, %v918
      %920 = vst [vmem:[%s852 + $0x68] sm:$0x1] %v919
      %v921 = vld [vmem:[%s852 + $0x6c] sm:$0xf]
      %v922 = vsel %vm855, %v691, %v921
      %923 = vst [vmem:[%s852 + $0x6c] sm:$0xf] %v922
      %924 = vst [vmem:[%s852 + $0x70] sm:$0xf] %v700
      %v925 = vld [vmem:[%s852 + $0x74] sm:$0x1]
      %v926 = vsel %vm861, %v701, %v925
      %927 = vst [vmem:[%s852 + $0x74] sm:$0x1] %v926
      %v928 = vld [vmem:[%s852 + $0x78] sm:$0xf]
      %v929 = vsel %vm855, %v708, %v928
      %930 = vst [vmem:[%s852 + $0x78] sm:$0xf] %v929
      %931 = vst [vmem:[%s852 + $0x7c] sm:$0xf] %v717
      %v932 = vld [vmem:[%s852 + $0x80] sm:$0x1]
      %v933 = vsel %vm861, %v718, %v932
      %934 = vst [vmem:[%s852 + $0x80] sm:$0x1] %v933
      %v935 = vld [vmem:[%s852 + $0x84] sm:$0xf]
      %v936 = vsel %vm855, %v725, %v935
      %937 = vst [vmem:[%s852 + $0x84] sm:$0xf] %v936
      %938 = vst [vmem:[%s852 + $0x88] sm:$0xf] %v734
      %v939 = vld [vmem:[%s852 + $0x8c] sm:$0x1]
      %v940 = vsel %vm861, %v735, %v939
      %941 = vst [vmem:[%s852 + $0x8c] sm:$0x1] %v940
      %v942 = vld [vmem:[%s852 + $0x90] sm:$0xf]
      %v943 = vsel %vm855, %v742, %v942
      %944 = vst [vmem:[%s852 + $0x90] sm:$0xf] %v943
      %945 = vst [vmem:[%s852 + $0x94] sm:$0xf] %v751
      %v946 = vld [vmem:[%s852 + $0x98] sm:$0x1]
      %v947 = vsel %vm861, %v752, %v946
      %948 = vst [vmem:[%s852 + $0x98] sm:$0x1] %v947
      %v949 = vld [vmem:[%s852 + $0x9c] sm:$0xf]
      %v950 = vsel %vm855, %v759, %v949
      %951 = vst [vmem:[%s852 + $0x9c] sm:$0xf] %v950
      %952 = vst [vmem:[%s852 + $0xa0] sm:$0xf] %v768
      %v953 = vld [vmem:[%s852 + $0xa4] sm:$0x1]
      %v954 = vsel %vm861, %v769, %v953
      %955 = vst [vmem:[%s852 + $0xa4] sm:$0x1] %v954
      %v956 = vld [vmem:[%s852 + $0xa8] sm:$0xf]
      %v957 = vsel %vm855, %v776, %v956
      %958 = vst [vmem:[%s852 + $0xa8] sm:$0xf] %v957
      %959 = vst [vmem:[%s852 + $0xac] sm:$0xf] %v785
      %v960 = vld [vmem:[%s852 + $0xb0] sm:$0x1]
      %v961 = vsel %vm861, %v786, %v960
      %962 = vst [vmem:[%s852 + $0xb0] sm:$0x1] %v961
      %v963 = vld [vmem:[%s852 + $0xb4] sm:$0xf]
      %v964 = vsel %vm855, %v793, %v963
      %965 = vst [vmem:[%s852 + $0xb4] sm:$0xf] %v964
      %966 = vst [vmem:[%s852 + $0xb8] sm:$0xf] %v802
      %v967 = vld [vmem:[%s852 + $0xbc] sm:$0x1]
      %v968 = vsel %vm861, %v803, %v967
      %969 = vst [vmem:[%s852 + $0xbc] sm:$0x1] %v968
      %v970 = vld [vmem:[#allocation2] sm:$0xf]
      %v971 = vld [vmem:[#allocation2 + $0x4] sm:$0xf]
      %v972 = vld [vmem:[#allocation2 + $0x8] sm:$0x1]
      %v973 = vld [vmem:[#allocation2 + $0xc] sm:$0xf]
      %v974 = vld [vmem:[#allocation2 + $0x10] sm:$0xf]
      %v975 = vld [vmem:[#allocation2 + $0x14] sm:$0x1]
      %v976 = vld [vmem:[#allocation2 + $0x18] sm:$0xf]
      %v977 = vld [vmem:[#allocation2 + $0x1c] sm:$0xf]
      %v978 = vld [vmem:[#allocation2 + $0x20] sm:$0x1]
      %v979 = vld [vmem:[#allocation2 + $0x24] sm:$0xf]
      %v980 = vld [vmem:[#allocation2 + $0x28] sm:$0xf]
      %v981 = vld [vmem:[#allocation2 + $0x2c] sm:$0x1]
      %v982 = vld [vmem:[#allocation2 + $0x30] sm:$0xf]
      %v983 = vld [vmem:[#allocation2 + $0x34] sm:$0xf]
      %v984 = vld [vmem:[#allocation2 + $0x38] sm:$0x1]
      %v985 = vld [vmem:[#allocation2 + $0x3c] sm:$0xf]
      %v986 = vld [vmem:[#allocation2 + $0x40] sm:$0xf]
      %v987 = vld [vmem:[#allocation2 + $0x44] sm:$0x1]
      %v988 = vld [vmem:[#allocation2 + $0x48] sm:$0xf]
      %v989 = vld [vmem:[#allocation2 + $0x4c] sm:$0xf]
      %v990 = vld [vmem:[#allocation2 + $0x50] sm:$0x1]
      %v991 = vld [vmem:[#allocation2 + $0x54] sm:$0xf]
      %v992 = vld [vmem:[#allocation2 + $0x58] sm:$0xf]
      %v993 = vld [vmem:[#allocation2 + $0x5c] sm:$0x1]
      %v994 = vld [vmem:[#allocation2 + $0x60] sm:$0xf]
      %v995 = vld [vmem:[#allocation2 + $0x64] sm:$0xf]
      %v996 = vld [vmem:[#allocation2 + $0x68] sm:$0x1]
      %v997 = vld [vmem:[#allocation2 + $0x6c] sm:$0xf]
      %v998 = vld [vmem:[#allocation2 + $0x70] sm:$0xf]
      %v999 = vld [vmem:[#allocation2 + $0x74] sm:$0x1]
      %v1000 = vld [vmem:[#allocation2 + $0x78] sm:$0xf]
      %v1001 = vld [vmem:[#allocation2 + $0x7c] sm:$0xf]
      %v1002 = vld [vmem:[#allocation2 + $0x80] sm:$0x1]
      %v1003 = vld [vmem:[#allocation2 + $0x84] sm:$0xf]
      %v1004 = vld [vmem:[#allocation2 + $0x88] sm:$0xf]
      %v1005 = vld [vmem:[#allocation2 + $0x8c] sm:$0x1]
      %v1006 = vld [vmem:[#allocation2 + $0x90] sm:$0xf]
      %v1007 = vld [vmem:[#allocation2 + $0x94] sm:$0xf]
      %v1008 = vld [vmem:[#allocation2 + $0x98] sm:$0x1]
      %v1009 = vld [vmem:[#allocation2 + $0x9c] sm:$0xf]
      %v1010 = vld [vmem:[#allocation2 + $0xa0] sm:$0xf]
      %v1011 = vld [vmem:[#allocation2 + $0xa4] sm:$0x1]
      %v1012 = vld [vmem:[#allocation2 + $0xa8] sm:$0xf]
      %v1013 = vld [vmem:[#allocation2 + $0xac] sm:$0xf]
      %v1014 = vld [vmem:[#allocation2 + $0xb0] sm:$0x1]
      %v1015 = vld [vmem:[#allocation2 + $0xb4] sm:$0xf]
      %v1016 = vld [vmem:[#allocation2 + $0xb8] sm:$0xf]
      %v1017 = vld [vmem:[#allocation2 + $0xbc] sm:$0x1]
      %v1018 = vld [vmem:[#allocation2 + $0xc0] sm:$0xf]
      %v1019 = vld [vmem:[#allocation2 + $0xc4] sm:$0xf]
      %v1020 = vld [vmem:[#allocation2 + $0xc8] sm:$0x1]
      %v1021 = vld [vmem:[#allocation2 + $0xcc] sm:$0xf]
      %v1022 = vld [vmem:[#allocation2 + $0xd0] sm:$0xf]
      %v1023 = vld [vmem:[#allocation2 + $0xd4] sm:$0x1]
      %vm1024 = vsmask.f32 3328
      %vm1025 = vsmask.f32 7440
      %vm1026 = vmor %vm1024, %vm1025
      %v1028 = vshrl.u32 %v970, 16
      %v1030 = vrot.slane %v1028, 4
      %v1031 = vshll.u32 %v970, 16
      %v1033 = vrot.slane %v1031, 5
      %v1034 = vor.u32 %v1030, %v1033
      %v1035 = vrot.slane %v1034, 4
      %v1037 = vshll.u32 %v971, 16
      %v1039 = vrot.slane %v1037, 5
      %v1040 = vsel %vm1026, %v1035, %v1039
      %v1041 = vshrl.u32 %v971, 16
      %v1043 = vrot.slane %v1041, 4
      %v1044 = vor.u32 %v1043, %v1039
      %v1045 = vrot.slane %v1044, 4
      %v1047 = vshll.u32 %v972, 16
      %v1049 = vrot.slane %v1047, 5
      %v1050 = vsel %vm1026, %v1045, %v1049
      %v1052 = vshrl.u32 %v973, 16
      %v1054 = vrot.slane %v1052, 4
      %v1055 = vshll.u32 %v973, 16
      %v1057 = vrot.slane %v1055, 5
      %v1058 = vor.u32 %v1054, %v1057
      %v1059 = vrot.slane %v1058, 4
      %v1061 = vshll.u32 %v974, 16
      %v1063 = vrot.slane %v1061, 5
      %v1064 = vsel %vm1026, %v1059, %v1063
      %v1065 = vshrl.u32 %v974, 16
      %v1067 = vrot.slane %v1065, 4
      %v1068 = vor.u32 %v1067, %v1063
      %v1069 = vrot.slane %v1068, 4
      %v1071 = vshll.u32 %v975, 16
      %v1073 = vrot.slane %v1071, 5
      %v1074 = vsel %vm1026, %v1069, %v1073
      %v1076 = vshrl.u32 %v976, 16
      %v1078 = vrot.slane %v1076, 4
      %v1079 = vshll.u32 %v976, 16
      %v1081 = vrot.slane %v1079, 5
      %v1082 = vor.u32 %v1078, %v1081
      %v1083 = vrot.slane %v1082, 4
      %v1085 = vshll.u32 %v977, 16
      %v1087 = vrot.slane %v1085, 5
      %v1088 = vsel %vm1026, %v1083, %v1087
      %v1089 = vshrl.u32 %v977, 16
      %v1091 = vrot.slane %v1089, 4
      %v1092 = vor.u32 %v1091, %v1087
      %v1093 = vrot.slane %v1092, 4
      %v1095 = vshll.u32 %v978, 16
      %v1097 = vrot.slane %v1095, 5
      %v1098 = vsel %vm1026, %v1093, %v1097
      %v1100 = vshrl.u32 %v979, 16
      %v1102 = vrot.slane %v1100, 4
      %v1103 = vshll.u32 %v979, 16
      %v1105 = vrot.slane %v1103, 5
      %v1106 = vor.u32 %v1102, %v1105
      %v1107 = vrot.slane %v1106, 4
      %v1109 = vshll.u32 %v980, 16
      %v1111 = vrot.slane %v1109, 5
      %v1112 = vsel %vm1026, %v1107, %v1111
      %v1113 = vshrl.u32 %v980, 16
      %v1115 = vrot.slane %v1113, 4
      %v1116 = vor.u32 %v1115, %v1111
      %v1117 = vrot.slane %v1116, 4
      %v1119 = vshll.u32 %v981, 16
      %v1121 = vrot.slane %v1119, 5
      %v1122 = vsel %vm1026, %v1117, %v1121
      %v1124 = vshrl.u32 %v982, 16
      %v1126 = vrot.slane %v1124, 4
      %v1127 = vshll.u32 %v982, 16
      %v1129 = vrot.slane %v1127, 5
      %v1130 = vor.u32 %v1126, %v1129
      %v1131 = vrot.slane %v1130, 4
      %v1133 = vshll.u32 %v983, 16
      %v1135 = vrot.slane %v1133, 5
      %v1136 = vsel %vm1026, %v1131, %v1135
      %v1137 = vshrl.u32 %v983, 16
      %v1139 = vrot.slane %v1137, 4
      %v1140 = vor.u32 %v1139, %v1135
      %v1141 = vrot.slane %v1140, 4
      %v1143 = vshll.u32 %v984, 16
      %v1145 = vrot.slane %v1143, 5
      %v1146 = vsel %vm1026, %v1141, %v1145
      %v1148 = vshrl.u32 %v985, 16
      %v1150 = vrot.slane %v1148, 4
      %v1151 = vshll.u32 %v985, 16
      %v1153 = vrot.slane %v1151, 5
      %v1154 = vor.u32 %v1150, %v1153
      %v1155 = vrot.slane %v1154, 4
      %v1157 = vshll.u32 %v986, 16
      %v1159 = vrot.slane %v1157, 5
      %v1160 = vsel %vm1026, %v1155, %v1159
      %v1161 = vshrl.u32 %v986, 16
      %v1163 = vrot.slane %v1161, 4
      %v1164 = vor.u32 %v1163, %v1159
      %v1165 = vrot.slane %v1164, 4
      %v1167 = vshll.u32 %v987, 16
      %v1169 = vrot.slane %v1167, 5
      %v1170 = vsel %vm1026, %v1165, %v1169
      %v1172 = vshrl.u32 %v988, 16
      %v1174 = vrot.slane %v1172, 4
      %v1175 = vshll.u32 %v988, 16
      %v1177 = vrot.slane %v1175, 5
      %v1178 = vor.u32 %v1174, %v1177
      %v1179 = vrot.slane %v1178, 4
      %v1181 = vshll.u32 %v989, 16
      %v1183 = vrot.slane %v1181, 5
      %v1184 = vsel %vm1026, %v1179, %v1183
      %v1185 = vshrl.u32 %v989, 16
      %v1187 = vrot.slane %v1185, 4
      %v1188 = vor.u32 %v1187, %v1183
      %v1189 = vrot.slane %v1188, 4
      %v1191 = vshll.u32 %v990, 16
      %v1193 = vrot.slane %v1191, 5
      %v1194 = vsel %vm1026, %v1189, %v1193
      %v1196 = vshrl.u32 %v991, 16
      %v1198 = vrot.slane %v1196, 4
      %v1199 = vshll.u32 %v991, 16
      %v1201 = vrot.slane %v1199, 5
      %v1202 = vor.u32 %v1198, %v1201
      %v1203 = vrot.slane %v1202, 4
      %v1205 = vshll.u32 %v992, 16
      %v1207 = vrot.slane %v1205, 5
      %v1208 = vsel %vm1026, %v1203, %v1207
      %v1209 = vshrl.u32 %v992, 16
      %v1211 = vrot.slane %v1209, 4
      %v1212 = vor.u32 %v1211, %v1207
      %v1213 = vrot.slane %v1212, 4
      %v1215 = vshll.u32 %v993, 16
      %v1217 = vrot.slane %v1215, 5
      %v1218 = vsel %vm1026, %v1213, %v1217
      %v1220 = vshrl.u32 %v994, 16
      %v1222 = vrot.slane %v1220, 4
      %v1223 = vshll.u32 %v994, 16
      %v1225 = vrot.slane %v1223, 5
      %v1226 = vor.u32 %v1222, %v1225
      %v1227 = vrot.slane %v1226, 4
      %v1229 = vshll.u32 %v995, 16
      %v1231 = vrot.slane %v1229, 5
      %v1232 = vsel %vm1026, %v1227, %v1231
      %v1233 = vshrl.u32 %v995, 16
      %v1235 = vrot.slane %v1233, 4
      %v1236 = vor.u32 %v1235, %v1231
      %v1237 = vrot.slane %v1236, 4
      %v1239 = vshll.u32 %v996, 16
      %v1241 = vrot.slane %v1239, 5
      %v1242 = vsel %vm1026, %v1237, %v1241
      %v1244 = vshrl.u32 %v997, 16
      %v1246 = vrot.slane %v1244, 4
      %v1247 = vshll.u32 %v997, 16
      %v1249 = vrot.slane %v1247, 5
      %v1250 = vor.u32 %v1246, %v1249
      %v1251 = vrot.slane %v1250, 4
      %v1253 = vshll.u32 %v998, 16
      %v1255 = vrot.slane %v1253, 5
      %v1256 = vsel %vm1026, %v1251, %v1255
      %v1257 = vshrl.u32 %v998, 16
      %v1259 = vrot.slane %v1257, 4
      %v1260 = vor.u32 %v1259, %v1255
      %v1261 = vrot.slane %v1260, 4
      %v1263 = vshll.u32 %v999, 16
      %v1265 = vrot.slane %v1263, 5
      %v1266 = vsel %vm1026, %v1261, %v1265
      %v1268 = vshrl.u32 %v1000, 16
      %v1270 = vrot.slane %v1268, 4
      %v1271 = vshll.u32 %v1000, 16
      %v1273 = vrot.slane %v1271, 5
      %v1274 = vor.u32 %v1270, %v1273
      %v1275 = vrot.slane %v1274, 4
      %v1277 = vshll.u32 %v1001, 16
      %v1279 = vrot.slane %v1277, 5
      %v1280 = vsel %vm1026, %v1275, %v1279
      %v1281 = vshrl.u32 %v1001, 16
      %v1283 = vrot.slane %v1281, 4
      %v1284 = vor.u32 %v1283, %v1279
      %v1285 = vrot.slane %v1284, 4
      %v1287 = vshll.u32 %v1002, 16
      %v1289 = vrot.slane %v1287, 5
      %v1290 = vsel %vm1026, %v1285, %v1289
      %v1292 = vshrl.u32 %v1003, 16
      %v1294 = vrot.slane %v1292, 4
      %v1295 = vshll.u32 %v1003, 16
      %v1297 = vrot.slane %v1295, 5
      %v1298 = vor.u32 %v1294, %v1297
      %v1299 = vrot.slane %v1298, 4
      %v1301 = vshll.u32 %v1004, 16
      %v1303 = vrot.slane %v1301, 5
      %v1304 = vsel %vm1026, %v1299, %v1303
      %v1305 = vshrl.u32 %v1004, 16
      %v1307 = vrot.slane %v1305, 4
      %v1308 = vor.u32 %v1307, %v1303
      %v1309 = vrot.slane %v1308, 4
      %v1311 = vshll.u32 %v1005, 16
      %v1313 = vrot.slane %v1311, 5
      %v1314 = vsel %vm1026, %v1309, %v1313
      %v1316 = vshrl.u32 %v1006, 16
      %v1318 = vrot.slane %v1316, 4
      %v1319 = vshll.u32 %v1006, 16
      %v1321 = vrot.slane %v1319, 5
      %v1322 = vor.u32 %v1318, %v1321
      %v1323 = vrot.slane %v1322, 4
      %v1325 = vshll.u32 %v1007, 16
      %v1327 = vrot.slane %v1325, 5
      %v1328 = vsel %vm1026, %v1323, %v1327
      %v1329 = vshrl.u32 %v1007, 16
      %v1331 = vrot.slane %v1329, 4
      %v1332 = vor.u32 %v1331, %v1327
      %v1333 = vrot.slane %v1332, 4
      %v1335 = vshll.u32 %v1008, 16
      %v1337 = vrot.slane %v1335, 5
      %v1338 = vsel %vm1026, %v1333, %v1337
      %v1340 = vshrl.u32 %v1009, 16
      %v1342 = vrot.slane %v1340, 4
      %v1343 = vshll.u32 %v1009, 16
      %v1345 = vrot.slane %v1343, 5
      %v1346 = vor.u32 %v1342, %v1345
      %v1347 = vrot.slane %v1346, 4
      %v1349 = vshll.u32 %v1010, 16
      %v1351 = vrot.slane %v1349, 5
      %v1352 = vsel %vm1026, %v1347, %v1351
      %v1353 = vshrl.u32 %v1010, 16
      %v1355 = vrot.slane %v1353, 4
      %v1356 = vor.u32 %v1355, %v1351
      %v1357 = vrot.slane %v1356, 4
      %v1359 = vshll.u32 %v1011, 16
      %v1361 = vrot.slane %v1359, 5
      %v1362 = vsel %vm1026, %v1357, %v1361
      %v1364 = vshrl.u32 %v1012, 16
      %v1366 = vrot.slane %v1364, 4
      %v1367 = vshll.u32 %v1012, 16
      %v1369 = vrot.slane %v1367, 5
      %v1370 = vor.u32 %v1366, %v1369
      %v1371 = vrot.slane %v1370, 4
      %v1373 = vshll.u32 %v1013, 16
      %v1375 = vrot.slane %v1373, 5
      %v1376 = vsel %vm1026, %v1371, %v1375
      %v1377 = vshrl.u32 %v1013, 16
      %v1379 = vrot.slane %v1377, 4
      %v1380 = vor.u32 %v1379, %v1375
      %v1381 = vrot.slane %v1380, 4
      %v1383 = vshll.u32 %v1014, 16
      %v1385 = vrot.slane %v1383, 5
      %v1386 = vsel %vm1026, %v1381, %v1385
      %v1388 = vshrl.u32 %v1015, 16
      %v1390 = vrot.slane %v1388, 4
      %v1391 = vshll.u32 %v1015, 16
      %v1393 = vrot.slane %v1391, 5
      %v1394 = vor.u32 %v1390, %v1393
      %v1395 = vrot.slane %v1394, 4
      %v1397 = vshll.u32 %v1016, 16
      %v1399 = vrot.slane %v1397, 5
      %v1400 = vsel %vm1026, %v1395, %v1399
      %v1401 = vshrl.u32 %v1016, 16
      %v1403 = vrot.slane %v1401, 4
      %v1404 = vor.u32 %v1403, %v1399
      %v1405 = vrot.slane %v1404, 4
      %v1407 = vshll.u32 %v1017, 16
      %v1409 = vrot.slane %v1407, 5
      %v1410 = vsel %vm1026, %v1405, %v1409
      %v1443 = vunpack.c.l.b16 %v970
      %v1444 = vunpack.c.l.b16 %v971
      %v1445 = vunpack.c.l.b16 %v973
      %v1446 = vunpack.c.l.b16 %v974
      %v1447 = vunpack.c.l.b16 %v976
      %v1448 = vunpack.c.l.b16 %v977
      %v1449 = vunpack.c.l.b16 %v979
      %v1450 = vunpack.c.l.b16 %v980
      %v1451 = vunpack.c.l.b16 %v982
      %v1452 = vunpack.c.l.b16 %v983
      %v1453 = vunpack.c.l.b16 %v985
      %v1454 = vunpack.c.l.b16 %v986
      %v1455 = vunpack.c.l.b16 %v988
      %v1456 = vunpack.c.l.b16 %v989
      %v1457 = vunpack.c.l.b16 %v991
      %v1458 = vunpack.c.l.b16 %v992
      %v1459 = vunpack.c.l.b16 %v994
      %v1460 = vunpack.c.l.b16 %v995
      %v1461 = vunpack.c.l.b16 %v997
      %v1462 = vunpack.c.l.b16 %v998
      %v1463 = vunpack.c.l.b16 %v1000
      %v1464 = vunpack.c.l.b16 %v1001
      %v1465 = vunpack.c.l.b16 %v1003
      %v1466 = vunpack.c.l.b16 %v1004
      %v1467 = vunpack.c.l.b16 %v1006
      %v1468 = vunpack.c.l.b16 %v1007
      %v1469 = vunpack.c.l.b16 %v1009
      %v1470 = vunpack.c.l.b16 %v1010
      %v1471 = vunpack.c.l.b16 %v1012
      %v1472 = vunpack.c.l.b16 %v1013
      %v1473 = vunpack.c.l.b16 %v1015
      %v1474 = vunpack.c.l.b16 %v1016
      %v1475 = vpack.c.b16 %v1444, %v1443
      %v1476 = vpack.c.b16 %v1446, %v1445
      %v1477 = vpack.c.b16 %v1448, %v1447
      %v1478 = vpack.c.b16 %v1450, %v1449
      %v1479 = vpack.c.b16 %v1452, %v1451
      %v1480 = vpack.c.b16 %v1454, %v1453
      %v1481 = vpack.c.b16 %v1456, %v1455
      %v1482 = vpack.c.b16 %v1458, %v1457
      %v1483 = vpack.c.b16 %v1460, %v1459
      %v1484 = vpack.c.b16 %v1462, %v1461
      %v1485 = vpack.c.b16 %v1464, %v1463
      %v1486 = vpack.c.b16 %v1466, %v1465
      %v1487 = vpack.c.b16 %v1468, %v1467
      %v1488 = vpack.c.b16 %v1470, %v1469
      %v1489 = vpack.c.b16 %v1472, %v1471
      %v1490 = vpack.c.b16 %v1474, %v1473
      %v1507 = vunpack.c.l.b16 %v1040
      %v1508 = vunpack.c.l.b16 %v1050
      %v1509 = vunpack.c.l.b16 %v1064
      %v1510 = vunpack.c.l.b16 %v1074
      %v1511 = vunpack.c.l.b16 %v1088
      %v1512 = vunpack.c.l.b16 %v1098
      %v1513 = vunpack.c.l.b16 %v1112
      %v1514 = vunpack.c.l.b16 %v1122
      %v1515 = vunpack.c.l.b16 %v1136
      %v1516 = vunpack.c.l.b16 %v1146
      %v1517 = vunpack.c.l.b16 %v1160
      %v1518 = vunpack.c.l.b16 %v1170
      %v1519 = vunpack.c.l.b16 %v1184
      %v1520 = vunpack.c.l.b16 %v1194
      %v1521 = vunpack.c.l.b16 %v1208
      %v1522 = vunpack.c.l.b16 %v1218
      %v1523 = vunpack.c.l.b16 %v1232
      %v1524 = vunpack.c.l.b16 %v1242
      %v1525 = vunpack.c.l.b16 %v1256
      %v1526 = vunpack.c.l.b16 %v1266
      %v1527 = vunpack.c.l.b16 %v1280
      %v1528 = vunpack.c.l.b16 %v1290
      %v1529 = vunpack.c.l.b16 %v1304
      %v1530 = vunpack.c.l.b16 %v1314
      %v1531 = vunpack.c.l.b16 %v1328
      %v1532 = vunpack.c.l.b16 %v1338
      %v1533 = vunpack.c.l.b16 %v1352
      %v1534 = vunpack.c.l.b16 %v1362
      %v1535 = vunpack.c.l.b16 %v1376
      %v1536 = vunpack.c.l.b16 %v1386
      %v1537 = vunpack.c.l.b16 %v1400
      %v1538 = vunpack.c.l.b16 %v1410
      %v1539 = vpack.c.b16 %v1508, %v1507
      %v1540 = vpack.c.b16 %v1510, %v1509
      %v1541 = vpack.c.b16 %v1512, %v1511
      %v1542 = vpack.c.b16 %v1514, %v1513
      %v1543 = vpack.c.b16 %v1516, %v1515
      %v1544 = vpack.c.b16 %v1518, %v1517
      %v1545 = vpack.c.b16 %v1520, %v1519
      %v1546 = vpack.c.b16 %v1522, %v1521
      %v1547 = vpack.c.b16 %v1524, %v1523
      %v1548 = vpack.c.b16 %v1526, %v1525
      %v1549 = vpack.c.b16 %v1528, %v1527
      %v1550 = vpack.c.b16 %v1530, %v1529
      %v1551 = vpack.c.b16 %v1532, %v1531
      %v1552 = vpack.c.b16 %v1534, %v1533
      %v1553 = vpack.c.b16 %v1536, %v1535
      %v1554 = vpack.c.b16 %v1538, %v1537
      %v1571 = vld [vmem:[%s3] sm:$0xf]
      %v1572 = vld [vmem:[%s3 + $0x4] sm:$0xf]
      %v1573 = vld [vmem:[%s3 + $0x8] sm:$0xf]
      %v1574 = vld [vmem:[%s3 + $0xc] sm:$0xf]
      %v1575 = vld [vmem:[%s3 + $0x10] sm:$0xf]
      %v1576 = vld [vmem:[%s3 + $0x14] sm:$0xf]
      %v1577 = vld [vmem:[%s3 + $0x18] sm:$0xf]
      %v1578 = vld [vmem:[%s3 + $0x1c] sm:$0xf]
      %v1579 = vld [vmem:[%s3 + $0x20] sm:$0xf]
      %v1580 = vld [vmem:[%s3 + $0x24] sm:$0xf]
      %v1581 = vld [vmem:[%s3 + $0x28] sm:$0xf]
      %v1582 = vld [vmem:[%s3 + $0x2c] sm:$0xf]
      %v1583 = vld [vmem:[%s3 + $0x30] sm:$0xf]
      %v1584 = vld [vmem:[%s3 + $0x34] sm:$0xf]
      %v1585 = vld [vmem:[%s3 + $0x38] sm:$0xf]
      %v1586 = vld [vmem:[%s3 + $0x3c] sm:$0xf]
      %v1587 = vld [vmem:[%s3 + $0x40] sm:$0xf]
      %v1588 = vld [vmem:[%s3 + $0x44] sm:$0xf]
      %v1589 = vld [vmem:[%s3 + $0x48] sm:$0xf]
      %v1590 = vld [vmem:[%s3 + $0x4c] sm:$0xf]
      %v1591 = vld [vmem:[%s3 + $0x50] sm:$0xf]
      %v1592 = vld [vmem:[%s3 + $0x54] sm:$0xf]
      %v1593 = vld [vmem:[%s3 + $0x58] sm:$0xf]
      %v1594 = vld [vmem:[%s3 + $0x5c] sm:$0xf]
      %v1595 = vld [vmem:[%s3 + $0x60] sm:$0xf]
      %v1596 = vld [vmem:[%s3 + $0x64] sm:$0xf]
      %v1597 = vld [vmem:[%s3 + $0x68] sm:$0xf]
      %v1598 = vld [vmem:[%s3 + $0x6c] sm:$0xf]
      %v1599 = vld [vmem:[%s3 + $0x70] sm:$0xf]
      %v1600 = vld [vmem:[%s3 + $0x74] sm:$0xf]
      %v1601 = vld [vmem:[%s3 + $0x78] sm:$0xf]
      %v1602 = vld [vmem:[%s3 + $0x7c] sm:$0xf]
      %vm1619 = vcmask 1042432
      %vm1620 = vcmask 1046532
      %vm1621 = vmor %vm1619, %vm1620
      %v1622 = vrot.slane %v970, 5
      %v1623 = vrot.slane %v1622, 4
      %v1624 = vrot.slane %v971, 5
      %v1625 = vsel %vm1621, %v1623, %v1624
      %v1626 = vrot.slane %v1624, 4
      %v1627 = vrot.slane %v972, 5
      %v1628 = vsel %vm1621, %v1626, %v1627
      %v1629 = vrot.slane %v973, 5
      %v1630 = vrot.slane %v1629, 4
      %v1631 = vrot.slane %v974, 5
      %v1632 = vsel %vm1621, %v1630, %v1631
      %v1633 = vrot.slane %v1631, 4
      %v1634 = vrot.slane %v975, 5
      %v1635 = vsel %vm1621, %v1633, %v1634
      %v1636 = vrot.slane %v976, 5
      %v1637 = vrot.slane %v1636, 4
      %v1638 = vrot.slane %v977, 5
      %v1639 = vsel %vm1621, %v1637, %v1638
      %v1640 = vrot.slane %v1638, 4
      %v1641 = vrot.slane %v978, 5
      %v1642 = vsel %vm1621, %v1640, %v1641
      %v1643 = vrot.slane %v979, 5
      %v1644 = vrot.slane %v1643, 4
      %v1645 = vrot.slane %v980, 5
      %v1646 = vsel %vm1621, %v1644, %v1645
      %v1647 = vrot.slane %v1645, 4
      %v1648 = vrot.slane %v981, 5
      %v1649 = vsel %vm1621, %v1647, %v1648
      %v1650 = vrot.slane %v982, 5
      %v1651 = vrot.slane %v1650, 4
      %v1652 = vrot.slane %v983, 5
      %v1653 = vsel %vm1621, %v1651, %v1652
      %v1654 = vrot.slane %v1652, 4
      %v1655 = vrot.slane %v984, 5
      %v1656 = vsel %vm1621, %v1654, %v1655
      %v1657 = vrot.slane %v985, 5
      %v1658 = vrot.slane %v1657, 4
      %v1659 = vrot.slane %v986, 5
      %v1660 = vsel %vm1621, %v1658, %v1659
      %v1661 = vrot.slane %v1659, 4
      %v1662 = vrot.slane %v987, 5
      %v1663 = vsel %vm1621, %v1661, %v1662
      %v1664 = vrot.slane %v988, 5
      %v1665 = vrot.slane %v1664, 4
      %v1666 = vrot.slane %v989, 5
      %v1667 = vsel %vm1621, %v1665, %v1666
      %v1668 = vrot.slane %v1666, 4
      %v1669 = vrot.slane %v990, 5
      %v1670 = vsel %vm1621, %v1668, %v1669
      %v1671 = vrot.slane %v991, 5
      %v1672 = vrot.slane %v1671, 4
      %v1673 = vrot.slane %v992, 5
      %v1674 = vsel %vm1621, %v1672, %v1673
      %v1675 = vrot.slane %v1673, 4
      %v1676 = vrot.slane %v993, 5
      %v1677 = vsel %vm1621, %v1675, %v1676
      %v1678 = vrot.slane %v994, 5
      %v1679 = vrot.slane %v1678, 4
      %v1680 = vrot.slane %v995, 5
      %v1681 = vsel %vm1621, %v1679, %v1680
      %v1682 = vrot.slane %v1680, 4
      %v1683 = vrot.slane %v996, 5
      %v1684 = vsel %vm1621, %v1682, %v1683
      %v1685 = vrot.slane %v997, 5
      %v1686 = vrot.slane %v1685, 4
      %v1687 = vrot.slane %v998, 5
      %v1688 = vsel %vm1621, %v1686, %v1687
      %v1689 = vrot.slane %v1687, 4
      %v1690 = vrot.slane %v999, 5
      %v1691 = vsel %vm1621, %v1689, %v1690
      %v1692 = vrot.slane %v1000, 5
      %v1693 = vrot.slane %v1692, 4
      %v1694 = vrot.slane %v1001, 5
      %v1695 = vsel %vm1621, %v1693, %v1694
      %v1696 = vrot.slane %v1694, 4
      %v1697 = vrot.slane %v1002, 5
      %v1698 = vsel %vm1621, %v1696, %v1697
      %v1699 = vrot.slane %v1003, 5
      %v1700 = vrot.slane %v1699, 4
      %v1701 = vrot.slane %v1004, 5
      %v1702 = vsel %vm1621, %v1700, %v1701
      %v1703 = vrot.slane %v1701, 4
      %v1704 = vrot.slane %v1005, 5
      %v1705 = vsel %vm1621, %v1703, %v1704
      %v1706 = vrot.slane %v1006, 5
      %v1707 = vrot.slane %v1706, 4
      %v1708 = vrot.slane %v1007, 5
      %v1709 = vsel %vm1621, %v1707, %v1708
      %v1710 = vrot.slane %v1708, 4
      %v1711 = vrot.slane %v1008, 5
      %v1712 = vsel %vm1621, %v1710, %v1711
      %v1713 = vrot.slane %v1009, 5
      %v1714 = vrot.slane %v1713, 4
      %v1715 = vrot.slane %v1010, 5
      %v1716 = vsel %vm1621, %v1714, %v1715
      %v1717 = vrot.slane %v1715, 4
      %v1718 = vrot.slane %v1011, 5
      %v1719 = vsel %vm1621, %v1717, %v1718
      %v1720 = vrot.slane %v1012, 5
      %v1721 = vrot.slane %v1720, 4
      %v1722 = vrot.slane %v1013, 5
      %v1723 = vsel %vm1621, %v1721, %v1722
      %v1724 = vrot.slane %v1722, 4
      %v1725 = vrot.slane %v1014, 5
      %v1726 = vsel %vm1621, %v1724, %v1725
      %v1727 = vrot.slane %v1015, 5
      %v1728 = vrot.slane %v1727, 4
      %v1729 = vrot.slane %v1016, 5
      %v1730 = vsel %vm1621, %v1728, %v1729
      %v1731 = vrot.slane %v1729, 4
      %v1732 = vrot.slane %v1017, 5
      %v1733 = vsel %vm1621, %v1731, %v1732
      %v1734 = vunpack.c.l.b16 %v1625
      %v1735 = vunpack.c.l.b16 %v1628
      %v1736 = vunpack.c.l.b16 %v1632
      %v1737 = vunpack.c.l.b16 %v1635
      %v1738 = vunpack.c.l.b16 %v1639
      %v1739 = vunpack.c.l.b16 %v1642
      %v1740 = vunpack.c.l.b16 %v1646
      %v1741 = vunpack.c.l.b16 %v1649
      %v1742 = vunpack.c.l.b16 %v1653
      %v1743 = vunpack.c.l.b16 %v1656
      %v1744 = vunpack.c.l.b16 %v1660
      %v1745 = vunpack.c.l.b16 %v1663
      %v1746 = vunpack.c.l.b16 %v1667
      %v1747 = vunpack.c.l.b16 %v1670
      %v1748 = vunpack.c.l.b16 %v1674
      %v1749 = vunpack.c.l.b16 %v1677
      %v1750 = vunpack.c.l.b16 %v1681
      %v1751 = vunpack.c.l.b16 %v1684
      %v1752 = vunpack.c.l.b16 %v1688
      %v1753 = vunpack.c.l.b16 %v1691
      %v1754 = vunpack.c.l.b16 %v1695
      %v1755 = vunpack.c.l.b16 %v1698
      %v1756 = vunpack.c.l.b16 %v1702
      %v1757 = vunpack.c.l.b16 %v1705
      %v1758 = vunpack.c.l.b16 %v1709
      %v1759 = vunpack.c.l.b16 %v1712
      %v1760 = vunpack.c.l.b16 %v1716
      %v1761 = vunpack.c.l.b16 %v1719
      %v1762 = vunpack.c.l.b16 %v1723
      %v1763 = vunpack.c.l.b16 %v1726
      %v1764 = vunpack.c.l.b16 %v1730
      %v1765 = vunpack.c.l.b16 %v1733
      %v1766 = vpack.c.b16 %v1735, %v1734
      %v1767 = vpack.c.b16 %v1737, %v1736
      %v1768 = vpack.c.b16 %v1739, %v1738
      %v1769 = vpack.c.b16 %v1741, %v1740
      %v1770 = vpack.c.b16 %v1743, %v1742
      %v1771 = vpack.c.b16 %v1745, %v1744
      %v1772 = vpack.c.b16 %v1747, %v1746
      %v1773 = vpack.c.b16 %v1749, %v1748
      %v1774 = vpack.c.b16 %v1751, %v1750
      %v1775 = vpack.c.b16 %v1753, %v1752
      %v1776 = vpack.c.b16 %v1755, %v1754
      %v1777 = vpack.c.b16 %v1757, %v1756
      %v1778 = vpack.c.b16 %v1759, %v1758
      %v1779 = vpack.c.b16 %v1761, %v1760
      %v1780 = vpack.c.b16 %v1763, %v1762
      %v1781 = vpack.c.b16 %v1765, %v1764
      %v1800 = vunpack.c.l.b16 %v1018
      %v1801 = vunpack.c.l.b16 %v1019
      %v1802 = vpack.c.b16 %v1801, %v1800
      %v1804 = vld [vmem:[%s3 + $0x80] sm:$0xf]
      %v1805 = vld [vmem:[%s3 + $0x84] sm:$0xf]
      %v1806 = vld [vmem:[%s3 + $0x88] sm:$0xf]
      %v1807 = vld [vmem:[%s3 + $0x8c] sm:$0xf]
      %v1808 = vld [vmem:[%s3 + $0x90] sm:$0xf]
      %v1809 = vld [vmem:[%s3 + $0x94] sm:$0xf]
      %v1810 = vld [vmem:[%s3 + $0x98] sm:$0xf]
      %v1811 = vld [vmem:[%s3 + $0x9c] sm:$0xf]
      %v1812 = vld [vmem:[%s3 + $0xa0] sm:$0xf]
      %v1813 = vld [vmem:[%s3 + $0xa4] sm:$0xf]
      %v1814 = vld [vmem:[%s3 + $0xa8] sm:$0xf]
      %v1815 = vld [vmem:[%s3 + $0xac] sm:$0xf]
      %v1816 = vld [vmem:[%s3 + $0xb0] sm:$0xf]
      %v1817 = vld [vmem:[%s3 + $0xb4] sm:$0xf]
      %v1818 = vld [vmem:[%s3 + $0xb8] sm:$0xf]
      %v1819 = vld [vmem:[%s3 + $0xbc] sm:$0xf]
      %v1820 = vld [vmem:[%s3 + $0xc0] sm:$0xf]
      %v1821 = vld [vmem:[%s3 + $0xc4] sm:$0xf]
      %v1822 = vld [vmem:[%s3 + $0xc8] sm:$0xf]
      %v1823 = vld [vmem:[%s3 + $0xcc] sm:$0xf]
      %v1824 = vld [vmem:[%s3 + $0xd0] sm:$0xf]
      %v1825 = vld [vmem:[%s3 + $0xd4] sm:$0xf]
      %v1826 = vld [vmem:[%s3 + $0xd8] sm:$0xf]
      %v1827 = vld [vmem:[%s3 + $0xdc] sm:$0xf]
      %v1828 = vld [vmem:[%s3 + $0xe0] sm:$0xf]
      %v1829 = vld [vmem:[%s3 + $0xe4] sm:$0xf]
      %v1830 = vld [vmem:[%s3 + $0xe8] sm:$0xf]
      %v1831 = vld [vmem:[%s3 + $0xec] sm:$0xf]
      %v1832 = vld [vmem:[%s3 + $0xf0] sm:$0xf]
      %v1833 = vld [vmem:[%s3 + $0xf4] sm:$0xf]
      %v1834 = vld [vmem:[%s3 + $0xf8] sm:$0xf]
      %v1835 = vld [vmem:[%s3 + $0xfc] sm:$0xf]
      %v1868 = vunpack.c.l.b16 %v1804
      %v1869 = vunpack.c.l.b16 %v1805
      %v1870 = vunpack.c.l.b16 %v1806
      %v1871 = vunpack.c.l.b16 %v1807
      %v1872 = vunpack.c.l.b16 %v1808
      %v1873 = vunpack.c.l.b16 %v1809
      %v1874 = vunpack.c.l.b16 %v1810
      %v1875 = vunpack.c.l.b16 %v1811
      %v1876 = vunpack.c.l.b16 %v1812
      %v1877 = vunpack.c.l.b16 %v1813
      %v1878 = vunpack.c.l.b16 %v1814
      %v1879 = vunpack.c.l.b16 %v1815
      %v1880 = vunpack.c.l.b16 %v1816
      %v1881 = vunpack.c.l.b16 %v1817
      %v1882 = vunpack.c.l.b16 %v1818
      %v1883 = vunpack.c.l.b16 %v1819
      %v1884 = vunpack.c.l.b16 %v1820
      %v1885 = vunpack.c.l.b16 %v1821
      %v1886 = vunpack.c.l.b16 %v1822
      %v1887 = vunpack.c.l.b16 %v1823
      %v1888 = vunpack.c.l.b16 %v1824
      %v1889 = vunpack.c.l.b16 %v1825
      %v1890 = vunpack.c.l.b16 %v1826
      %v1891 = vunpack.c.l.b16 %v1827
      %v1892 = vunpack.c.l.b16 %v1828
      %v1893 = vunpack.c.l.b16 %v1829
      %v1894 = vunpack.c.l.b16 %v1830
      %v1895 = vunpack.c.l.b16 %v1831
      %v1896 = vunpack.c.l.b16 %v1832
      %v1897 = vunpack.c.l.b16 %v1833
      %v1898 = vunpack.c.l.b16 %v1834
      %v1899 = vunpack.c.l.b16 %v1835
      %v1900 = vpack.c.b16 %v1869, %v1868
      %v1901 = vpack.c.b16 %v1871, %v1870
      %v1902 = vpack.c.b16 %v1873, %v1872
      %v1903 = vpack.c.b16 %v1875, %v1874
      %v1904 = vpack.c.b16 %v1877, %v1876
      %v1905 = vpack.c.b16 %v1879, %v1878
      %v1906 = vpack.c.b16 %v1881, %v1880
      %v1907 = vpack.c.b16 %v1883, %v1882
      %v1908 = vpack.c.b16 %v1885, %v1884
      %v1909 = vpack.c.b16 %v1887, %v1886
      %v1910 = vpack.c.b16 %v1889, %v1888
      %v1911 = vpack.c.b16 %v1891, %v1890
      %v1912 = vpack.c.b16 %v1893, %v1892
      %v1913 = vpack.c.b16 %v1895, %v1894
      %v1914 = vpack.c.b16 %v1897, %v1896
      %v1915 = vpack.c.b16 %v1899, %v1898
      %1932 = vmatprep.subr.bf16.mxu0 0
      %1933 = vmatpush1.bf16.msra.mxu0 %v1900
      %1934 = vmatprep.subr.bf16.mxu0 0
      %1935 = vmatpush1.bf16.msra.mxu0 %v1901
      %1936 = vmatprep.subr.bf16.mxu0 0
      %1937 = vmatpush1.bf16.msra.mxu0 %v1902
      %1938 = vmatprep.subr.bf16.mxu0 0
      %1939 = vmatpush1.bf16.msra.mxu0 %v1903
      %1940 = vmatprep.subr.bf16.mxu0 0
      %1941 = vmatpush1.bf16.msra.mxu0 %v1904
      %1942 = vmatprep.subr.bf16.mxu0 0
      %1943 = vmatpush1.bf16.msra.mxu0 %v1905
      %1944 = vmatprep.subr.bf16.mxu0 0
      %1945 = vmatpush1.bf16.msra.mxu0 %v1906
      %1946 = vmatprep.subr.bf16.mxu0 0
      %1947 = vmatpush1.bf16.msra.mxu0 %v1907
      %1948 = vmatprep.subr.bf16.mxu0 0
      %1949 = vmatpush1.bf16.msra.mxu0 %v1908
      %1950 = vmatprep.subr.bf16.mxu0 0
      %1951 = vmatpush1.bf16.msra.mxu0 %v1909
      %1952 = vmatprep.subr.bf16.mxu0 0
      %1953 = vmatpush1.bf16.msra.mxu0 %v1910
      %1954 = vmatprep.subr.bf16.mxu0 0
      %1955 = vmatpush1.bf16.msra.mxu0 %v1911
      %1956 = vmatprep.subr.bf16.mxu0 0
      %1957 = vmatpush1.bf16.msra.mxu0 %v1912
      %1958 = vmatprep.subr.bf16.mxu0 0
      %1959 = vmatpush1.bf16.msra.mxu0 %v1913
      %1960 = vmatprep.subr.bf16.mxu0 0
      %1961 = vmatpush1.bf16.msra.mxu0 %v1914
      %1962 = vmatprep.subr.bf16.mxu0 0
      %1963 = vmatpush1.bf16.msra.mxu0 %v1915
      %1964 = vmatprep.mubr.bf16.mxu0 %v1476
      %1965 = vmatmul.mubr.bf16.gmra.mrb[0].mxu0 %v1766
      %v1966 = vpop.f32.mrb[0].mxu0
      %v1967 = vadd.f32 0.0, %v1966
      %v1968 = vpop.f32.mrb[0].mxu0
      %v1969 = vpop.f32.mrb[0].mxu0
      %v1970 = vadd.f32 0.0, %v1969
      %v1971 = vpop.f32.mrb[0].mxu0
      %1972 = vmatprep.mubr.bf16.mxu0 %v1477
      %1973 = vmatmul.mubr.bf16.gmra.mrb[0].mxu0 %v1767
      %v1974 = vpop.f32.mrb[0].mxu0
      %v1975 = vadd.f32 0.0, %v1974
      %v1976 = vpop.f32.mrb[0].mxu0
      %v1977 = vpop.f32.mrb[0].mxu0
      %v1978 = vadd.f32 0.0, %v1977
      %v1979 = vpop.f32.mrb[0].mxu0
      %1980 = vmatprep.mubr.bf16.mxu0 %v1478
      %1981 = vmatmul.mubr.bf16.gmra.mrb[0].mxu0 %v1768
      %v1982 = vpop.f32.mrb[0].mxu0
      %v1983 = vadd.f32 0.0, %v1982
      %v1984 = vpop.f32.mrb[0].mxu0
      %v1985 = vpop.f32.mrb[0].mxu0
      %v1986 = vadd.f32 0.0, %v1985
      %v1987 = vpop.f32.mrb[0].mxu0
      %1988 = vmatprep.mubr.bf16.mxu0 %v1479
      %1989 = vmatmul.mubr.bf16.gmra.mrb[0].mxu0 %v1769
      %v1990 = vpop.f32.mrb[0].mxu0
      %v1991 = vadd.f32 0.0, %v1990
      %v1992 = vpop.f32.mrb[0].mxu0
      %v1993 = vpop.f32.mrb[0].mxu0
      %v1994 = vadd.f32 0.0, %v1993
      %v1995 = vpop.f32.mrb[0].mxu0
      %1996 = vmatprep.mubr.bf16.mxu0 %v1480
      %1997 = vmatmul.mubr.bf16.gmra.mrb[0].mxu0 %v1770
      %v1998 = vpop.f32.mrb[0].mxu0
      %v1999 = vadd.f32 0.0, %v1998
      %v2000 = vpop.f32.mrb[0].mxu0
      %v2001 = vpop.f32.mrb[0].mxu0
      %v2002 = vadd.f32 0.0, %v2001
      %v2003 = vpop.f32.mrb[0].mxu0
      %2004 = vmatprep.mubr.bf16.mxu0 %v1481
      %2005 = vmatmul.mubr.bf16.gmra.mrb[0].mxu0 %v1771
      %v2006 = vpop.f32.mrb[0].mxu0
      %v2007 = vadd.f32 0.0, %v2006
      %v2008 = vpop.f32.mrb[0].mxu0
      %v2009 = vpop.f32.mrb[0].mxu0
      %v2010 = vadd.f32 0.0, %v2009
      %v2011 = vpop.f32.mrb[0].mxu0
      %2012 = vmatprep.mubr.bf16.mxu0 %v1482
      %2013 = vmatmul.mubr.bf16.gmra.mrb[0].mxu0 %v1772
      %v2014 = vpop.f32.mrb[0].mxu0
      %v2015 = vadd.f32 0.0, %v2014
      %v2016 = vpop.f32.mrb[0].mxu0
      %v2017 = vpop.f32.mrb[0].mxu0
      %v2018 = vadd.f32 0.0, %v2017
      %v2019 = vpop.f32.mrb[0].mxu0
      %2020 = vmatprep.mubr.bf16.mxu0 %v1483
      %2021 = vmatmul.mubr.bf16.gmra.mrb[0].mxu0 %v1773
      %v2022 = vpop.f32.mrb[0].mxu0
      %v2023 = vadd.f32 0.0, %v2022
      %v2024 = vpop.f32.mrb[0].mxu0
      %v2025 = vpop.f32.mrb[0].mxu0
      %v2026 = vadd.f32 0.0, %v2025
      %v2027 = vpop.f32.mrb[0].mxu0
      %2028 = vmatprep.mubr.bf16.mxu0 %v1484
      %2029 = vmatmul.mubr.bf16.gmra.mrb[0].mxu0 %v1774
      %v2030 = vpop.f32.mrb[0].mxu0
      %v2031 = vadd.f32 0.0, %v2030
      %v2032 = vpop.f32.mrb[0].mxu0
      %v2033 = vpop.f32.mrb[0].mxu0
      %v2034 = vadd.f32 0.0, %v2033
      %v2035 = vpop.f32.mrb[0].mxu0
      %2036 = vmatprep.mubr.bf16.mxu0 %v1485
      %2037 = vmatmul.mubr.bf16.gmra.mrb[0].mxu0 %v1775
      %v2038 = vpop.f32.mrb[0].mxu0
      %v2039 = vadd.f32 0.0, %v2038
      %v2040 = vpop.f32.mrb[0].mxu0
      %v2041 = vpop.f32.mrb[0].mxu0
      %v2042 = vadd.f32 0.0, %v2041
      %v2043 = vpop.f32.mrb[0].mxu0
      %2044 = vmatprep.mubr.bf16.mxu0 %v1486
      %2045 = vmatmul.mubr.bf16.gmra.mrb[0].mxu0 %v1776
      %v2046 = vpop.f32.mrb[0].mxu0
      %v2047 = vadd.f32 0.0, %v2046
      %v2048 = vpop.f32.mrb[0].mxu0
      %v2049 = vpop.f32.mrb[0].mxu0
      %v2050 = vadd.f32 0.0, %v2049
      %v2051 = vpop.f32.mrb[0].mxu0
      %2052 = vmatprep.mubr.bf16.mxu0 %v1487
      %2053 = vmatmul.mubr.bf16.gmra.mrb[0].mxu0 %v1777
      %v2054 = vpop.f32.mrb[0].mxu0
      %v2055 = vadd.f32 0.0, %v2054
      %v2056 = vpop.f32.mrb[0].mxu0
      %v2057 = vpop.f32.mrb[0].mxu0
      %v2058 = vadd.f32 0.0, %v2057
      %v2059 = vpop.f32.mrb[0].mxu0
      %2060 = vmatprep.mubr.bf16.mxu0 %v1488
      %2061 = vmatmul.mubr.bf16.gmra.mrb[0].mxu0 %v1778
      %v2062 = vpop.f32.mrb[0].mxu0
      %v2063 = vadd.f32 0.0, %v2062
      %v2064 = vpop.f32.mrb[0].mxu0
      %v2065 = vpop.f32.mrb[0].mxu0
      %v2066 = vadd.f32 0.0, %v2065
      %v2067 = vpop.f32.mrb[0].mxu0
      %2068 = vmatprep.mubr.bf16.mxu0 %v1489
      %2069 = vmatmul.mubr.bf16.gmra.mrb[0].mxu0 %v1779
      %v2070 = vpop.f32.mrb[0].mxu0
      %v2071 = vadd.f32 0.0, %v2070
      %v2072 = vpop.f32.mrb[0].mxu0
      %v2073 = vpop.f32.mrb[0].mxu0
      %v2074 = vadd.f32 0.0, %v2073
      %v2075 = vpop.f32.mrb[0].mxu0
      %2076 = vmatprep.mubr.bf16.mxu0 %v1490
      %2077 = vmatmul.mubr.bf16.gmra.mrb[0].mxu0 %v1780
      %v2078 = vpop.f32.mrb[0].mxu0
      %v2079 = vadd.f32 0.0, %v2078
      %v2080 = vpop.f32.mrb[0].mxu0
      %v2081 = vpop.f32.mrb[0].mxu0
      %v2082 = vadd.f32 0.0, %v2081
      %v2083 = vpop.f32.mrb[0].mxu0
      %2084 = vmatprep.mubr.bf16.mxu0 %v1802
      %2085 = vmatmul.mubr.bf16.gmra.mrb[0].mxu0 %v1781
      %v2086 = vpop.f32.mrb[0].mxu0
      %v2087 = vadd.f32 0.0, %v2086
      %v2088 = vpop.f32.mrb[0].mxu0
      %v2089 = vpop.f32.mrb[0].mxu0
      %v2090 = vadd.f32 0.0, %v2089
      %v2091 = vpop.f32.mrb[0].mxu0
      %2092 = vdwg.mxu0
      %v2125 = vunpack.c.l.b16 %v1571
      %v2126 = vunpack.c.l.b16 %v1572
      %v2127 = vunpack.c.l.b16 %v1573
      %v2128 = vunpack.c.l.b16 %v1574
      %v2129 = vunpack.c.l.b16 %v1575
      %v2130 = vunpack.c.l.b16 %v1576
      %v2131 = vunpack.c.l.b16 %v1577
      %v2132 = vunpack.c.l.b16 %v1578
      %v2133 = vunpack.c.l.b16 %v1579
      %v2134 = vunpack.c.l.b16 %v1580
      %v2135 = vunpack.c.l.b16 %v1581
      %v2136 = vunpack.c.l.b16 %v1582
      %v2137 = vunpack.c.l.b16 %v1583
      %v2138 = vunpack.c.l.b16 %v1584
      %v2139 = vunpack.c.l.b16 %v1585
      %v2140 = vunpack.c.l.b16 %v1586
      %v2141 = vunpack.c.l.b16 %v1587
      %v2142 = vunpack.c.l.b16 %v1588
      %v2143 = vunpack.c.l.b16 %v1589
      %v2144 = vunpack.c.l.b16 %v1590
      %v2145 = vunpack.c.l.b16 %v1591
      %v2146 = vunpack.c.l.b16 %v1592
      %v2147 = vunpack.c.l.b16 %v1593
      %v2148 = vunpack.c.l.b16 %v1594
      %v2149 = vunpack.c.l.b16 %v1595
      %v2150 = vunpack.c.l.b16 %v1596
      %v2151 = vunpack.c.l.b16 %v1597
      %v2152 = vunpack.c.l.b16 %v1598
      %v2153 = vunpack.c.l.b16 %v1599
      %v2154 = vunpack.c.l.b16 %v1600
      %v2155 = vunpack.c.l.b16 %v1601
      %v2156 = vunpack.c.l.b16 %v1602
      %v2157 = vpack.c.b16 %v2126, %v2125
      %v2158 = vpack.c.b16 %v2128, %v2127
      %v2159 = vpack.c.b16 %v2130, %v2129
      %v2160 = vpack.c.b16 %v2132, %v2131
      %v2161 = vpack.c.b16 %v2134, %v2133
      %v2162 = vpack.c.b16 %v2136, %v2135
      %v2163 = vpack.c.b16 %v2138, %v2137
      %v2164 = vpack.c.b16 %v2140, %v2139
      %v2165 = vpack.c.b16 %v2142, %v2141
      %v2166 = vpack.c.b16 %v2144, %v2143
      %v2167 = vpack.c.b16 %v2146, %v2145
      %v2168 = vpack.c.b16 %v2148, %v2147
      %v2169 = vpack.c.b16 %v2150, %v2149
      %v2170 = vpack.c.b16 %v2152, %v2151
      %v2171 = vpack.c.b16 %v2154, %v2153
      %v2172 = vpack.c.b16 %v2156, %v2155
      %2189 = vmatprep.subr.bf16.mxu0 0
      %2190 = vmatpush1.bf16.msra.mxu0 %v2157
      %2191 = vmatprep.subr.bf16.mxu0 0
      %2192 = vmatpush1.bf16.msra.mxu0 %v2158
      %2193 = vmatprep.subr.bf16.mxu0 0
      %2194 = vmatpush1.bf16.msra.mxu0 %v2159
      %2195 = vmatprep.subr.bf16.mxu0 0
      %2196 = vmatpush1.bf16.msra.mxu0 %v2160
      %2197 = vmatprep.subr.bf16.mxu0 0
      %2198 = vmatpush1.bf16.msra.mxu0 %v2161
      %2199 = vmatprep.subr.bf16.mxu0 0
      %2200 = vmatpush1.bf16.msra.mxu0 %v2162
      %2201 = vmatprep.subr.bf16.mxu0 0
      %2202 = vmatpush1.bf16.msra.mxu0 %v2163
      %2203 = vmatprep.subr.bf16.mxu0 0
      %2204 = vmatpush1.bf16.msra.mxu0 %v2164
      %2205 = vmatprep.subr.bf16.mxu0 0
      %2206 = vmatpush1.bf16.msra.mxu0 %v2165
      %2207 = vmatprep.subr.bf16.mxu0 0
      %2208 = vmatpush1.bf16.msra.mxu0 %v2166
      %2209 = vmatprep.subr.bf16.mxu0 0
      %2210 = vmatpush1.bf16.msra.mxu0 %v2167
      %2211 = vmatprep.subr.bf16.mxu0 0
      %2212 = vmatpush1.bf16.msra.mxu0 %v2168
      %2213 = vmatprep.subr.bf16.mxu0 0
      %2214 = vmatpush1.bf16.msra.mxu0 %v2169
      %2215 = vmatprep.subr.bf16.mxu0 0
      %2216 = vmatpush1.bf16.msra.mxu0 %v2170
      %2217 = vmatprep.subr.bf16.mxu0 0
      %2218 = vmatpush1.bf16.msra.mxu0 %v2171
      %2219 = vmatprep.subr.bf16.mxu0 0
      %2220 = vmatpush1.bf16.msra.mxu0 %v2172
      %2221 = vmatprep.mubr.bf16.mxu0 %v1539
      %2222 = vmatmul.mubr.bf16.gmra.mrb[0].mxu0 %v1475
      %v2223 = vpop.f32.mrb[0].mxu0
      %v2224 = vadd.f32 %v1967, %v2223
      %v2225 = vpop.f32.mrb[0].mxu0
      %v2226 = vpop.f32.mrb[0].mxu0
      %v2227 = vadd.f32 %v1970, %v2226
      %v2228 = vpop.f32.mrb[0].mxu0
      %2229 = vmatprep.mubr.bf16.mxu0 %v1540
      %2230 = vmatmul.mubr.bf16.gmra.mrb[0].mxu0 %v1476
      %v2231 = vpop.f32.mrb[0].mxu0
      %v2232 = vadd.f32 %v1975, %v2231
      %v2233 = vpop.f32.mrb[0].mxu0
      %v2234 = vpop.f32.mrb[0].mxu0
      %v2235 = vadd.f32 %v1978, %v2234
      %v2236 = vpop.f32.mrb[0].mxu0
      %2237 = vmatprep.mubr.bf16.mxu0 %v1541
      %2238 = vmatmul.mubr.bf16.gmra.mrb[0].mxu0 %v1477
      %v2239 = vpop.f32.mrb[0].mxu0
      %v2240 = vadd.f32 %v1983, %v2239
      %v2241 = vpop.f32.mrb[0].mxu0
      %v2242 = vpop.f32.mrb[0].mxu0
      %v2243 = vadd.f32 %v1986, %v2242
      %v2244 = vpop.f32.mrb[0].mxu0
      %2245 = vmatprep.mubr.bf16.mxu0 %v1542
      %2246 = vmatmul.mubr.bf16.gmra.mrb[0].mxu0 %v1478
      %v2247 = vpop.f32.mrb[0].mxu0
      %v2248 = vadd.f32 %v1991, %v2247
      %v2249 = vpop.f32.mrb[0].mxu0
      %v2250 = vpop.f32.mrb[0].mxu0
      %v2251 = vadd.f32 %v1994, %v2250
      %v2252 = vpop.f32.mrb[0].mxu0
      %2253 = vmatprep.mubr.bf16.mxu0 %v1543
      %2254 = vmatmul.mubr.bf16.gmra.mrb[0].mxu0 %v1479
      %v2255 = vpop.f32.mrb[0].mxu0
      %v2256 = vadd.f32 %v1999, %v2255
      %v2257 = vpop.f32.mrb[0].mxu0
      %v2258 = vpop.f32.mrb[0].mxu0
      %v2259 = vadd.f32 %v2002, %v2258
      %v2260 = vpop.f32.mrb[0].mxu0
      %2261 = vmatprep.mubr.bf16.mxu0 %v1544
      %2262 = vmatmul.mubr.bf16.gmra.mrb[0].mxu0 %v1480
      %v2263 = vpop.f32.mrb[0].mxu0
      %v2264 = vadd.f32 %v2007, %v2263
      %v2265 = vpop.f32.mrb[0].mxu0
      %v2266 = vpop.f32.mrb[0].mxu0
      %v2267 = vadd.f32 %v2010, %v2266
      %v2268 = vpop.f32.mrb[0].mxu0
      %2269 = vmatprep.mubr.bf16.mxu0 %v1545
      %2270 = vmatmul.mubr.bf16.gmra.mrb[0].mxu0 %v1481
      %v2271 = vpop.f32.mrb[0].mxu0
      %v2272 = vadd.f32 %v2015, %v2271
      %v2273 = vpop.f32.mrb[0].mxu0
      %v2274 = vpop.f32.mrb[0].mxu0
      %v2275 = vadd.f32 %v2018, %v2274
      %v2276 = vpop.f32.mrb[0].mxu0
      %2277 = vmatprep.mubr.bf16.mxu0 %v1546
      %2278 = vmatmul.mubr.bf16.gmra.mrb[0].mxu0 %v1482
      %v2279 = vpop.f32.mrb[0].mxu0
      %v2280 = vadd.f32 %v2023, %v2279
      %v2281 = vpop.f32.mrb[0].mxu0
      %v2282 = vpop.f32.mrb[0].mxu0
      %v2283 = vadd.f32 %v2026, %v2282
      %v2284 = vpop.f32.mrb[0].mxu0
      %2285 = vmatprep.mubr.bf16.mxu0 %v1547
      %2286 = vmatmul.mubr.bf16.gmra.mrb[0].mxu0 %v1483
      %v2287 = vpop.f32.mrb[0].mxu0
      %v2288 = vadd.f32 %v2031, %v2287
      %v2289 = vpop.f32.mrb[0].mxu0
      %v2290 = vpop.f32.mrb[0].mxu0
      %v2291 = vadd.f32 %v2034, %v2290
      %v2292 = vpop.f32.mrb[0].mxu0
      %2293 = vmatprep.mubr.bf16.mxu0 %v1548
      %2294 = vmatmul.mubr.bf16.gmra.mrb[0].mxu0 %v1484
      %v2295 = vpop.f32.mrb[0].mxu0
      %v2296 = vadd.f32 %v2039, %v2295
      %v2297 = vpop.f32.mrb[0].mxu0
      %v2298 = vpop.f32.mrb[0].mxu0
      %v2299 = vadd.f32 %v2042, %v2298
      %v2300 = vpop.f32.mrb[0].mxu0
      %2301 = vmatprep.mubr.bf16.mxu0 %v1549
      %2302 = vmatmul.mubr.bf16.gmra.mrb[0].mxu0 %v1485
      %v2303 = vpop.f32.mrb[0].mxu0
      %v2304 = vadd.f32 %v2047, %v2303
      %v2305 = vpop.f32.mrb[0].mxu0
      %v2306 = vpop.f32.mrb[0].mxu0
      %v2307 = vadd.f32 %v2050, %v2306
      %v2308 = vpop.f32.mrb[0].mxu0
      %2309 = vmatprep.mubr.bf16.mxu0 %v1550
      %2310 = vmatmul.mubr.bf16.gmra.mrb[0].mxu0 %v1486
      %v2311 = vpop.f32.mrb[0].mxu0
      %v2312 = vadd.f32 %v2055, %v2311
      %v2313 = vpop.f32.mrb[0].mxu0
      %v2314 = vpop.f32.mrb[0].mxu0
      %v2315 = vadd.f32 %v2058, %v2314
      %v2316 = vpop.f32.mrb[0].mxu0
      %2317 = vmatprep.mubr.bf16.mxu0 %v1551
      %2318 = vmatmul.mubr.bf16.gmra.mrb[0].mxu0 %v1487
      %v2319 = vpop.f32.mrb[0].mxu0
      %v2320 = vadd.f32 %v2063, %v2319
      %v2321 = vpop.f32.mrb[0].mxu0
      %v2322 = vpop.f32.mrb[0].mxu0
      %v2323 = vadd.f32 %v2066, %v2322
      %v2324 = vpop.f32.mrb[0].mxu0
      %2325 = vmatprep.mubr.bf16.mxu0 %v1552
      %2326 = vmatmul.mubr.bf16.gmra.mrb[0].mxu0 %v1488
      %v2327 = vpop.f32.mrb[0].mxu0
      %v2328 = vadd.f32 %v2071, %v2327
      %v2329 = vpop.f32.mrb[0].mxu0
      %v2330 = vpop.f32.mrb[0].mxu0
      %v2331 = vadd.f32 %v2074, %v2330
      %v2332 = vpop.f32.mrb[0].mxu0
      %2333 = vmatprep.mubr.bf16.mxu0 %v1553
      %2334 = vmatmul.mubr.bf16.gmra.mrb[0].mxu0 %v1489
      %v2335 = vpop.f32.mrb[0].mxu0
      %v2336 = vadd.f32 %v2079, %v2335
      %v2337 = vpop.f32.mrb[0].mxu0
      %v2338 = vpop.f32.mrb[0].mxu0
      %v2339 = vadd.f32 %v2082, %v2338
      %v2340 = vpop.f32.mrb[0].mxu0
      %2341 = vmatprep.mubr.bf16.mxu0 %v1554
      %2342 = vmatmul.mubr.bf16.gmra.mrb[0].mxu0 %v1490
      %v2343 = vpop.f32.mrb[0].mxu0
      %v2344 = vadd.f32 %v2087, %v2343
      %v2345 = vpop.f32.mrb[0].mxu0
      %v2346 = vpop.f32.mrb[0].mxu0
      %v2347 = vadd.f32 %v2090, %v2346
      %v2348 = vpop.f32.mrb[0].mxu0
      %2349 = vdwg.mxu0
      %v2351 = vshrl.u32 %v1018, 16
      %v2353 = vrot.slane %v2351, 4
      %v2354 = vshll.u32 %v1018, 16
      %v2356 = vrot.slane %v2354, 5
      %v2357 = vor.u32 %v2353, %v2356
      %v2358 = vrot.slane %v2357, 4
      %v2360 = vshll.u32 %v1019, 16
      %v2362 = vrot.slane %v2360, 5
      %v2363 = vsel %vm1026, %v2358, %v2362
      %v2364 = vshrl.u32 %v1019, 16
      %v2366 = vrot.slane %v2364, 4
      %v2367 = vor.u32 %v2366, %v2362
      %v2368 = vrot.slane %v2367, 4
      %v2370 = vshll.u32 %v1020, 16
      %v2372 = vrot.slane %v2370, 5
      %v2373 = vsel %vm1026, %v2368, %v2372
      %v2375 = vrot.slane %v1018, 5
      %v2376 = vrot.slane %v2375, 4
      %v2377 = vrot.slane %v1019, 5
      %v2378 = vsel %vm1621, %v2376, %v2377
      %v2379 = vrot.slane %v2377, 4
      %v2380 = vrot.slane %v1020, 5
      %v2381 = vsel %vm1621, %v2379, %v2380
      %v2382 = vunpack.c.l.b16 %v2363
      %v2383 = vunpack.c.l.b16 %v2373
      %v2384 = vpack.c.b16 %v2383, %v2382
      %v2386 = vunpack.c.l.b16 %v2378
      %v2387 = vunpack.c.l.b16 %v2381
      %v2388 = vpack.c.b16 %v2387, %v2386
      %v2390 = vld [vmem:[%s3 + $0x100] sm:$0xf]
      %v2391 = vld [vmem:[%s3 + $0x104] sm:$0xf]
      %v2392 = vld [vmem:[%s3 + $0x108] sm:$0xf]
      %v2393 = vld [vmem:[%s3 + $0x10c] sm:$0xf]
      %v2394 = vld [vmem:[%s3 + $0x110] sm:$0xf]
      %v2395 = vld [vmem:[%s3 + $0x114] sm:$0xf]
      %v2396 = vld [vmem:[%s3 + $0x118] sm:$0xf]
      %v2397 = vld [vmem:[%s3 + $0x11c] sm:$0xf]
      %v2398 = vld [vmem:[%s3 + $0x120] sm:$0xf]
      %v2399 = vld [vmem:[%s3 + $0x124] sm:$0xf]
      %v2400 = vld [vmem:[%s3 + $0x128] sm:$0xf]
      %v2401 = vld [vmem:[%s3 + $0x12c] sm:$0xf]
      %v2402 = vld [vmem:[%s3 + $0x130] sm:$0xf]
      %v2403 = vld [vmem:[%s3 + $0x134] sm:$0xf]
      %v2404 = vld [vmem:[%s3 + $0x138] sm:$0xf]
      %v2405 = vld [vmem:[%s3 + $0x13c] sm:$0xf]
      %v2406 = vld [vmem:[%s3 + $0x140] sm:$0xf]
      %v2407 = vld [vmem:[%s3 + $0x144] sm:$0xf]
      %v2408 = vld [vmem:[%s3 + $0x148] sm:$0xf]
      %v2409 = vld [vmem:[%s3 + $0x14c] sm:$0xf]
      %v2410 = vld [vmem:[%s3 + $0x150] sm:$0xf]
      %v2411 = vld [vmem:[%s3 + $0x154] sm:$0xf]
      %v2412 = vld [vmem:[%s3 + $0x158] sm:$0xf]
      %v2413 = vld [vmem:[%s3 + $0x15c] sm:$0xf]
      %v2414 = vld [vmem:[%s3 + $0x160] sm:$0xf]
      %v2415 = vld [vmem:[%s3 + $0x164] sm:$0xf]
      %v2416 = vld [vmem:[%s3 + $0x168] sm:$0xf]
      %v2417 = vld [vmem:[%s3 + $0x16c] sm:$0xf]
      %v2418 = vld [vmem:[%s3 + $0x170] sm:$0xf]
      %v2419 = vld [vmem:[%s3 + $0x174] sm:$0xf]
      %v2420 = vld [vmem:[%s3 + $0x178] sm:$0xf]
      %v2421 = vld [vmem:[%s3 + $0x17c] sm:$0xf]
      %v2454 = vunpack.c.l.b16 %v2390
      %v2455 = vunpack.c.l.b16 %v2391
      %v2456 = vunpack.c.l.b16 %v2392
      %v2457 = vunpack.c.l.b16 %v2393
      %v2458 = vunpack.c.l.b16 %v2394
      %v2459 = vunpack.c.l.b16 %v2395
      %v2460 = vunpack.c.l.b16 %v2396
      %v2461 = vunpack.c.l.b16 %v2397
      %v2462 = vunpack.c.l.b16 %v2398
      %v2463 = vunpack.c.l.b16 %v2399
      %v2464 = vunpack.c.l.b16 %v2400
      %v2465 = vunpack.c.l.b16 %v2401
      %v2466 = vunpack.c.l.b16 %v2402
      %v2467 = vunpack.c.l.b16 %v2403
      %v2468 = vunpack.c.l.b16 %v2404
      %v2469 = vunpack.c.l.b16 %v2405
      %v2470 = vunpack.c.l.b16 %v2406
      %v2471 = vunpack.c.l.b16 %v2407
      %v2472 = vunpack.c.l.b16 %v2408
      %v2473 = vunpack.c.l.b16 %v2409
      %v2474 = vunpack.c.l.b16 %v2410
      %v2475 = vunpack.c.l.b16 %v2411
      %v2476 = vunpack.c.l.b16 %v2412
      %v2477 = vunpack.c.l.b16 %v2413
      %v2478 = vunpack.c.l.b16 %v2414
      %v2479 = vunpack.c.l.b16 %v2415
      %v2480 = vunpack.c.l.b16 %v2416
      %v2481 = vunpack.c.l.b16 %v2417
      %v2482 = vunpack.c.l.b16 %v2418
      %v2483 = vunpack.c.l.b16 %v2419
      %v2484 = vunpack.c.l.b16 %v2420
      %v2485 = vunpack.c.l.b16 %v2421
      %v2486 = vpack.c.b16 %v2455, %v2454
      %v2487 = vpack.c.b16 %v2457, %v2456
      %v2488 = vpack.c.b16 %v2459, %v2458
      %v2489 = vpack.c.b16 %v2461, %v2460
      %v2490 = vpack.c.b16 %v2463, %v2462
      %v2491 = vpack.c.b16 %v2465, %v2464
      %v2492 = vpack.c.b16 %v2467, %v2466
      %v2493 = vpack.c.b16 %v2469, %v2468
      %v2494 = vpack.c.b16 %v2471, %v2470
      %v2495 = vpack.c.b16 %v2473, %v2472
      %v2496 = vpack.c.b16 %v2475, %v2474
      %v2497 = vpack.c.b16 %v2477, %v2476
      %v2498 = vpack.c.b16 %v2479, %v2478
      %v2499 = vpack.c.b16 %v2481, %v2480
      %v2500 = vpack.c.b16 %v2483, %v2482
      %v2501 = vpack.c.b16 %v2485, %v2484
      %2518 = vmatprep.subr.bf16.mxu0 0
      %2519 = vmatpush1.bf16.msra.mxu0 %v2486
      %2520 = vmatprep.subr.bf16.mxu0 0
      %2521 = vmatpush1.bf16.msra.mxu0 %v2487
      %2522 = vmatprep.subr.bf16.mxu0 0
      %2523 = vmatpush1.bf16.msra.mxu0 %v2488
      %2524 = vmatprep.subr.bf16.mxu0 0
      %2525 = vmatpush1.bf16.msra.mxu0 %v2489
      %2526 = vmatprep.subr.bf16.mxu0 0
      %2527 = vmatpush1.bf16.msra.mxu0 %v2490
      %2528 = vmatprep.subr.bf16.mxu0 0
      %2529 = vmatpush1.bf16.msra.mxu0 %v2491
      %2530 = vmatprep.subr.bf16.mxu0 0
      %2531 = vmatpush1.bf16.msra.mxu0 %v2492
      %2532 = vmatprep.subr.bf16.mxu0 0
      %2533 = vmatpush1.bf16.msra.mxu0 %v2493
      %2534 = vmatprep.subr.bf16.mxu0 0
      %2535 = vmatpush1.bf16.msra.mxu0 %v2494
      %2536 = vmatprep.subr.bf16.mxu0 0
      %2537 = vmatpush1.bf16.msra.mxu0 %v2495
      %2538 = vmatprep.subr.bf16.mxu0 0
      %2539 = vmatpush1.bf16.msra.mxu0 %v2496
      %2540 = vmatprep.subr.bf16.mxu0 0
      %2541 = vmatpush1.bf16.msra.mxu0 %v2497
      %2542 = vmatprep.subr.bf16.mxu0 0
      %2543 = vmatpush1.bf16.msra.mxu0 %v2498
      %2544 = vmatprep.subr.bf16.mxu0 0
      %2545 = vmatpush1.bf16.msra.mxu0 %v2499
      %2546 = vmatprep.subr.bf16.mxu0 0
      %2547 = vmatpush1.bf16.msra.mxu0 %v2500
      %2548 = vmatprep.subr.bf16.mxu0 0
      %2549 = vmatpush1.bf16.msra.mxu0 %v2501
      %2550 = vmatprep.mubr.bf16.mxu0 %v1767
      %2551 = vmatmul.mubr.bf16.gmra.mrb[0].mxu0 %v1540
      %v2552 = vpop.f32.mrb[0].mxu0
      %v2553 = vadd.f32 0.0, %v2552
      %v2554 = vpop.f32.mrb[0].mxu0
      %v2555 = vpop.f32.mrb[0].mxu0
      %v2556 = vadd.f32 0.0, %v2555
      %v2557 = vpop.f32.mrb[0].mxu0
      %2558 = vmatprep.mubr.bf16.mxu0 %v1768
      %2559 = vmatmul.mubr.bf16.gmra.mrb[0].mxu0 %v1541
      %v2560 = vpop.f32.mrb[0].mxu0
      %v2561 = vadd.f32 0.0, %v2560
      %v2562 = vpop.f32.mrb[0].mxu0
      %v2563 = vpop.f32.mrb[0].mxu0
      %v2564 = vadd.f32 0.0, %v2563
      %v2565 = vpop.f32.mrb[0].mxu0
      %2566 = vmatprep.mubr.bf16.mxu0 %v1769
      %2567 = vmatmul.mubr.bf16.gmra.mrb[0].mxu0 %v1542
      %v2568 = vpop.f32.mrb[0].mxu0
      %v2569 = vadd.f32 0.0, %v2568
      %v2570 = vpop.f32.mrb[0].mxu0
      %v2571 = vpop.f32.mrb[0].mxu0
      %v2572 = vadd.f32 0.0, %v2571
      %v2573 = vpop.f32.mrb[0].mxu0
      %2574 = vmatprep.mubr.bf16.mxu0 %v1770
      %2575 = vmatmul.mubr.bf16.gmra.mrb[0].mxu0 %v1543
      %v2576 = vpop.f32.mrb[0].mxu0
      %v2577 = vadd.f32 0.0, %v2576
      %v2578 = vpop.f32.mrb[0].mxu0
      %v2579 = vpop.f32.mrb[0].mxu0
      %v2580 = vadd.f32 0.0, %v2579
      %v2581 = vpop.f32.mrb[0].mxu0
      %2582 = vmatprep.mubr.bf16.mxu0 %v1771
      %2583 = vmatmul.mubr.bf16.gmra.mrb[0].mxu0 %v1544
      %v2584 = vpop.f32.mrb[0].mxu0
      %v2585 = vadd.f32 0.0, %v2584
      %v2586 = vpop.f32.mrb[0].mxu0
      %v2587 = vpop.f32.mrb[0].mxu0
      %v2588 = vadd.f32 0.0, %v2587
      %v2589 = vpop.f32.mrb[0].mxu0
      %2590 = vmatprep.mubr.bf16.mxu0 %v1772
      %2591 = vmatmul.mubr.bf16.gmra.mrb[0].mxu0 %v1545
      %v2592 = vpop.f32.mrb[0].mxu0
      %v2593 = vadd.f32 0.0, %v2592
      %v2594 = vpop.f32.mrb[0].mxu0
      %v2595 = vpop.f32.mrb[0].mxu0
      %v2596 = vadd.f32 0.0, %v2595
      %v2597 = vpop.f32.mrb[0].mxu0
      %2598 = vmatprep.mubr.bf16.mxu0 %v1773
      %2599 = vmatmul.mubr.bf16.gmra.mrb[0].mxu0 %v1546
      %v2600 = vpop.f32.mrb[0].mxu0
      %v2601 = vadd.f32 0.0, %v2600
      %v2602 = vpop.f32.mrb[0].mxu0
      %v2603 = vpop.f32.mrb[0].mxu0
      %v2604 = vadd.f32 0.0, %v2603
      %v2605 = vpop.f32.mrb[0].mxu0
      %2606 = vmatprep.mubr.bf16.mxu0 %v1774
      %2607 = vmatmul.mubr.bf16.gmra.mrb[0].mxu0 %v1547
      %v2608 = vpop.f32.mrb[0].mxu0
      %v2609 = vadd.f32 0.0, %v2608
      %v2610 = vpop.f32.mrb[0].mxu0
      %v2611 = vpop.f32.mrb[0].mxu0
      %v2612 = vadd.f32 0.0, %v2611
      %v2613 = vpop.f32.mrb[0].mxu0
      %2614 = vmatprep.mubr.bf16.mxu0 %v1775
      %2615 = vmatmul.mubr.bf16.gmra.mrb[0].mxu0 %v1548
      %v2616 = vpop.f32.mrb[0].mxu0
      %v2617 = vadd.f32 0.0, %v2616
      %v2618 = vpop.f32.mrb[0].mxu0
      %v2619 = vpop.f32.mrb[0].mxu0
      %v2620 = vadd.f32 0.0, %v2619
      %v2621 = vpop.f32.mrb[0].mxu0
      %2622 = vmatprep.mubr.bf16.mxu0 %v1776
      %2623 = vmatmul.mubr.bf16.gmra.mrb[0].mxu0 %v1549
      %v2624 = vpop.f32.mrb[0].mxu0
      %v2625 = vadd.f32 0.0, %v2624
      %v2626 = vpop.f32.mrb[0].mxu0
      %v2627 = vpop.f32.mrb[0].mxu0
      %v2628 = vadd.f32 0.0, %v2627
      %v2629 = vpop.f32.mrb[0].mxu0
      %2630 = vmatprep.mubr.bf16.mxu0 %v1777
      %2631 = vmatmul.mubr.bf16.gmra.mrb[0].mxu0 %v1550
      %v2632 = vpop.f32.mrb[0].mxu0
      %v2633 = vadd.f32 0.0, %v2632
      %v2634 = vpop.f32.mrb[0].mxu0
      %v2635 = vpop.f32.mrb[0].mxu0
      %v2636 = vadd.f32 0.0, %v2635
      %v2637 = vpop.f32.mrb[0].mxu0
      %2638 = vmatprep.mubr.bf16.mxu0 %v1778
      %2639 = vmatmul.mubr.bf16.gmra.mrb[0].mxu0 %v1551
      %v2640 = vpop.f32.mrb[0].mxu0
      %v2641 = vadd.f32 0.0, %v2640
      %v2642 = vpop.f32.mrb[0].mxu0
      %v2643 = vpop.f32.mrb[0].mxu0
      %v2644 = vadd.f32 0.0, %v2643
      %v2645 = vpop.f32.mrb[0].mxu0
      %2646 = vmatprep.mubr.bf16.mxu0 %v1779
      %2647 = vmatmul.mubr.bf16.gmra.mrb[0].mxu0 %v1552
      %v2648 = vpop.f32.mrb[0].mxu0
      %v2649 = vadd.f32 0.0, %v2648
      %v2650 = vpop.f32.mrb[0].mxu0
      %v2651 = vpop.f32.mrb[0].mxu0
      %v2652 = vadd.f32 0.0, %v2651
      %v2653 = vpop.f32.mrb[0].mxu0
      %2654 = vmatprep.mubr.bf16.mxu0 %v1780
      %2655 = vmatmul.mubr.bf16.gmra.mrb[0].mxu0 %v1553
      %v2656 = vpop.f32.mrb[0].mxu0
      %v2657 = vadd.f32 0.0, %v2656
      %v2658 = vpop.f32.mrb[0].mxu0
      %v2659 = vpop.f32.mrb[0].mxu0
      %v2660 = vadd.f32 0.0, %v2659
      %v2661 = vpop.f32.mrb[0].mxu0
      %2662 = vmatprep.mubr.bf16.mxu0 %v1781
      %2663 = vmatmul.mubr.bf16.gmra.mrb[0].mxu0 %v1554
      %v2664 = vpop.f32.mrb[0].mxu0
      %v2665 = vadd.f32 0.0, %v2664
      %v2666 = vpop.f32.mrb[0].mxu0
      %v2667 = vpop.f32.mrb[0].mxu0
      %v2668 = vadd.f32 0.0, %v2667
      %v2669 = vpop.f32.mrb[0].mxu0
      %2670 = vmatprep.mubr.bf16.mxu0 %v2388
      %2671 = vmatmul.mubr.bf16.gmra.mrb[0].mxu0 %v2384
      %v2672 = vpop.f32.mrb[0].mxu0
      %v2673 = vadd.f32 0.0, %v2672
      %v2674 = vpop.f32.mrb[0].mxu0
      %v2675 = vpop.f32.mrb[0].mxu0
      %v2676 = vadd.f32 0.0, %v2675
      %v2677 = vpop.f32.mrb[0].mxu0
      %2678 = vdwg.mxu0
      %v2679 = vadd.f32 %v2224, %v2553
      %v2680 = vadd.f32 %v2227, %v2556
      %v2681 = vadd.f32 %v2232, %v2561
      %v2682 = vadd.f32 %v2235, %v2564
      %v2683 = vadd.f32 %v2240, %v2569
      %v2684 = vadd.f32 %v2243, %v2572
      %v2685 = vadd.f32 %v2248, %v2577
      %v2686 = vadd.f32 %v2251, %v2580
      %v2687 = vadd.f32 %v2256, %v2585
      %v2688 = vadd.f32 %v2259, %v2588
      %v2689 = vadd.f32 %v2264, %v2593
      %v2690 = vadd.f32 %v2267, %v2596
      %v2691 = vadd.f32 %v2272, %v2601
      %v2692 = vadd.f32 %v2275, %v2604
      %v2693 = vadd.f32 %v2280, %v2609
      %v2694 = vadd.f32 %v2283, %v2612
      %v2695 = vadd.f32 %v2288, %v2617
      %v2696 = vadd.f32 %v2291, %v2620
      %v2697 = vadd.f32 %v2296, %v2625
      %v2698 = vadd.f32 %v2299, %v2628
      %v2699 = vadd.f32 %v2304, %v2633
      %v2700 = vadd.f32 %v2307, %v2636
      %v2701 = vadd.f32 %v2312, %v2641
      %v2702 = vadd.f32 %v2315, %v2644
      %v2703 = vadd.f32 %v2320, %v2649
      %v2704 = vadd.f32 %v2323, %v2652
      %v2705 = vadd.f32 %v2328, %v2657
      %v2706 = vadd.f32 %v2331, %v2660
      %v2707 = vadd.f32 %v2336, %v2665
      %v2708 = vadd.f32 %v2339, %v2668
      %v2709 = vadd.f32 %v2344, %v2673
      %v2710 = vadd.f32 %v2347, %v2676
      %v2712 = vshrl.u32 %v1021, 16
      %v2714 = vrot.slane %v2712, 4
      %v2715 = vshll.u32 %v1021, 16
      %v2717 = vrot.slane %v2715, 5
      %v2718 = vor.u32 %v2714, %v2717
      %v2719 = vrot.slane %v2718, 4
      %v2721 = vshll.u32 %v1022, 16
      %v2723 = vrot.slane %v2721, 5
      %v2724 = vsel %vm1026, %v2719, %v2723
      %v2725 = vshrl.u32 %v1022, 16
      %v2727 = vrot.slane %v2725, 4
      %v2728 = vor.u32 %v2727, %v2723
      %v2729 = vrot.slane %v2728, 4
      %v2731 = vshll.u32 %v1023, 16
      %v2733 = vrot.slane %v2731, 5
      %v2734 = vsel %vm1026, %v2729, %v2733
      %v2737 = vunpack.c.l.b16 %v1021
      %v2738 = vunpack.c.l.b16 %v1022
      %v2739 = vpack.c.b16 %v2738, %v2737
      %v2741 = vunpack.c.l.b16 %v2724
      %v2742 = vunpack.c.l.b16 %v2734
      %v2743 = vpack.c.b16 %v2742, %v2741
      %v2745 = vld [vmem:[%s3 + $0x180] sm:$0xf]
      %v2746 = vld [vmem:[%s3 + $0x184] sm:$0xf]
      %v2747 = vld [vmem:[%s3 + $0x188] sm:$0xf]
      %v2748 = vld [vmem:[%s3 + $0x18c] sm:$0xf]
      %v2749 = vld [vmem:[%s3 + $0x190] sm:$0xf]
      %v2750 = vld [vmem:[%s3 + $0x194] sm:$0xf]
      %v2751 = vld [vmem:[%s3 + $0x198] sm:$0xf]
      %v2752 = vld [vmem:[%s3 + $0x19c] sm:$0xf]
      %v2753 = vld [vmem:[%s3 + $0x1a0] sm:$0xf]
      %v2754 = vld [vmem:[%s3 + $0x1a4] sm:$0xf]
      %v2755 = vld [vmem:[%s3 + $0x1a8] sm:$0xf]
      %v2756 = vld [vmem:[%s3 + $0x1ac] sm:$0xf]
      %v2757 = vld [vmem:[%s3 + $0x1b0] sm:$0xf]
      %v2758 = vld [vmem:[%s3 + $0x1b4] sm:$0xf]
      %v2759 = vld [vmem:[%s3 + $0x1b8] sm:$0xf]
      %v2760 = vld [vmem:[%s3 + $0x1bc] sm:$0xf]
      %v2761 = vld [vmem:[%s3 + $0x1c0] sm:$0xf]
      %v2762 = vld [vmem:[%s3 + $0x1c4] sm:$0xf]
      %v2763 = vld [vmem:[%s3 + $0x1c8] sm:$0xf]
      %v2764 = vld [vmem:[%s3 + $0x1cc] sm:$0xf]
      %v2765 = vld [vmem:[%s3 + $0x1d0] sm:$0xf]
      %v2766 = vld [vmem:[%s3 + $0x1d4] sm:$0xf]
      %v2767 = vld [vmem:[%s3 + $0x1d8] sm:$0xf]
      %v2768 = vld [vmem:[%s3 + $0x1dc] sm:$0xf]
      %v2769 = vld [vmem:[%s3 + $0x1e0] sm:$0xf]
      %v2770 = vld [vmem:[%s3 + $0x1e4] sm:$0xf]
      %v2771 = vld [vmem:[%s3 + $0x1e8] sm:$0xf]
      %v2772 = vld [vmem:[%s3 + $0x1ec] sm:$0xf]
      %v2773 = vld [vmem:[%s3 + $0x1f0] sm:$0xf]
      %v2774 = vld [vmem:[%s3 + $0x1f4] sm:$0xf]
      %v2775 = vld [vmem:[%s3 + $0x1f8] sm:$0xf]
      %v2776 = vld [vmem:[%s3 + $0x1fc] sm:$0xf]
      %v2809 = vunpack.c.l.b16 %v2745
      %v2810 = vunpack.c.l.b16 %v2746
      %v2811 = vunpack.c.l.b16 %v2747
      %v2812 = vunpack.c.l.b16 %v2748
      %v2813 = vunpack.c.l.b16 %v2749
      %v2814 = vunpack.c.l.b16 %v2750
      %v2815 = vunpack.c.l.b16 %v2751
      %v2816 = vunpack.c.l.b16 %v2752
      %v2817 = vunpack.c.l.b16 %v2753
      %v2818 = vunpack.c.l.b16 %v2754
      %v2819 = vunpack.c.l.b16 %v2755
      %v2820 = vunpack.c.l.b16 %v2756
      %v2821 = vunpack.c.l.b16 %v2757
      %v2822 = vunpack.c.l.b16 %v2758
      %v2823 = vunpack.c.l.b16 %v2759
      %v2824 = vunpack.c.l.b16 %v2760
      %v2825 = vunpack.c.l.b16 %v2761
      %v2826 = vunpack.c.l.b16 %v2762
      %v2827 = vunpack.c.l.b16 %v2763
      %v2828 = vunpack.c.l.b16 %v2764
      %v2829 = vunpack.c.l.b16 %v2765
      %v2830 = vunpack.c.l.b16 %v2766
      %v2831 = vunpack.c.l.b16 %v2767
      %v2832 = vunpack.c.l.b16 %v2768
      %v2833 = vunpack.c.l.b16 %v2769
      %v2834 = vunpack.c.l.b16 %v2770
      %v2835 = vunpack.c.l.b16 %v2771
      %v2836 = vunpack.c.l.b16 %v2772
      %v2837 = vunpack.c.l.b16 %v2773
      %v2838 = vunpack.c.l.b16 %v2774
      %v2839 = vunpack.c.l.b16 %v2775
      %v2840 = vunpack.c.l.b16 %v2776
      %v2841 = vpack.c.b16 %v2810, %v2809
      %v2842 = vpack.c.b16 %v2812, %v2811
      %v2843 = vpack.c.b16 %v2814, %v2813
      %v2844 = vpack.c.b16 %v2816, %v2815
      %v2845 = vpack.c.b16 %v2818, %v2817
      %v2846 = vpack.c.b16 %v2820, %v2819
      %v2847 = vpack.c.b16 %v2822, %v2821
      %v2848 = vpack.c.b16 %v2824, %v2823
      %v2849 = vpack.c.b16 %v2826, %v2825
      %v2850 = vpack.c.b16 %v2828, %v2827
      %v2851 = vpack.c.b16 %v2830, %v2829
      %v2852 = vpack.c.b16 %v2832, %v2831
      %v2853 = vpack.c.b16 %v2834, %v2833
      %v2854 = vpack.c.b16 %v2836, %v2835
      %v2855 = vpack.c.b16 %v2838, %v2837
      %v2856 = vpack.c.b16 %v2840, %v2839
      %2873 = vmatprep.subr.bf16.mxu0 0
      %2874 = vmatpush1.bf16.msra.mxu0 %v2841
      %2875 = vmatprep.subr.bf16.mxu0 0
      %2876 = vmatpush1.bf16.msra.mxu0 %v2842
      %2877 = vmatprep.subr.bf16.mxu0 0
      %2878 = vmatpush1.bf16.msra.mxu0 %v2843
      %2879 = vmatprep.subr.bf16.mxu0 0
      %2880 = vmatpush1.bf16.msra.mxu0 %v2844
      %2881 = vmatprep.subr.bf16.mxu0 0
      %2882 = vmatpush1.bf16.msra.mxu0 %v2845
      %2883 = vmatprep.subr.bf16.mxu0 0
      %2884 = vmatpush1.bf16.msra.mxu0 %v2846
      %2885 = vmatprep.subr.bf16.mxu0 0
      %2886 = vmatpush1.bf16.msra.mxu0 %v2847
      %2887 = vmatprep.subr.bf16.mxu0 0
      %2888 = vmatpush1.bf16.msra.mxu0 %v2848
      %2889 = vmatprep.subr.bf16.mxu0 0
      %2890 = vmatpush1.bf16.msra.mxu0 %v2849
      %2891 = vmatprep.subr.bf16.mxu0 0
      %2892 = vmatpush1.bf16.msra.mxu0 %v2850
      %2893 = vmatprep.subr.bf16.mxu0 0
      %2894 = vmatpush1.bf16.msra.mxu0 %v2851
      %2895 = vmatprep.subr.bf16.mxu0 0
      %2896 = vmatpush1.bf16.msra.mxu0 %v2852
      %2897 = vmatprep.subr.bf16.mxu0 0
      %2898 = vmatpush1.bf16.msra.mxu0 %v2853
      %2899 = vmatprep.subr.bf16.mxu0 0
      %2900 = vmatpush1.bf16.msra.mxu0 %v2854
      %2901 = vmatprep.subr.bf16.mxu0 0
      %2902 = vmatpush1.bf16.msra.mxu0 %v2855
      %2903 = vmatprep.subr.bf16.mxu0 0
      %2904 = vmatpush1.bf16.msra.mxu0 %v2856
      %2905 = vmatprep.mubr.bf16.mxu0 %v1541
      %2906 = vmatmul.mubr.bf16.gmra.mrb[0].mxu0 %v1477
      %v2907 = vpop.f32.mrb[0].mxu0
      %v2908 = vadd.f32 0.0, %v2907
      %v2909 = vpop.f32.mrb[0].mxu0
      %v2910 = vpop.f32.mrb[0].mxu0
      %v2911 = vadd.f32 0.0, %v2910
      %v2912 = vpop.f32.mrb[0].mxu0
      %2913 = vmatprep.mubr.bf16.mxu0 %v1542
      %2914 = vmatmul.mubr.bf16.gmra.mrb[0].mxu0 %v1478
      %v2915 = vpop.f32.mrb[0].mxu0
      %v2916 = vadd.f32 0.0, %v2915
      %v2917 = vpop.f32.mrb[0].mxu0
      %v2918 = vpop.f32.mrb[0].mxu0
      %v2919 = vadd.f32 0.0, %v2918
      %v2920 = vpop.f32.mrb[0].mxu0
      %2921 = vmatprep.mubr.bf16.mxu0 %v1543
      %2922 = vmatmul.mubr.bf16.gmra.mrb[0].mxu0 %v1479
      %v2923 = vpop.f32.mrb[0].mxu0
      %v2924 = vadd.f32 0.0, %v2923
      %v2925 = vpop.f32.mrb[0].mxu0
      %v2926 = vpop.f32.mrb[0].mxu0
      %v2927 = vadd.f32 0.0, %v2926
      %v2928 = vpop.f32.mrb[0].mxu0
      %2929 = vmatprep.mubr.bf16.mxu0 %v1544
      %2930 = vmatmul.mubr.bf16.gmra.mrb[0].mxu0 %v1480
      %v2931 = vpop.f32.mrb[0].mxu0
      %v2932 = vadd.f32 0.0, %v2931
      %v2933 = vpop.f32.mrb[0].mxu0
      %v2934 = vpop.f32.mrb[0].mxu0
      %v2935 = vadd.f32 0.0, %v2934
      %v2936 = vpop.f32.mrb[0].mxu0
      %2937 = vmatprep.mubr.bf16.mxu0 %v1545
      %2938 = vmatmul.mubr.bf16.gmra.mrb[0].mxu0 %v1481
      %v2939 = vpop.f32.mrb[0].mxu0
      %v2940 = vadd.f32 0.0, %v2939
      %v2941 = vpop.f32.mrb[0].mxu0
      %v2942 = vpop.f32.mrb[0].mxu0
      %v2943 = vadd.f32 0.0, %v2942
      %v2944 = vpop.f32.mrb[0].mxu0
      %2945 = vmatprep.mubr.bf16.mxu0 %v1546
      %2946 = vmatmul.mubr.bf16.gmra.mrb[0].mxu0 %v1482
      %v2947 = vpop.f32.mrb[0].mxu0
      %v2948 = vadd.f32 0.0, %v2947
      %v2949 = vpop.f32.mrb[0].mxu0
      %v2950 = vpop.f32.mrb[0].mxu0
      %v2951 = vadd.f32 0.0, %v2950
      %v2952 = vpop.f32.mrb[0].mxu0
      %2953 = vmatprep.mubr.bf16.mxu0 %v1547
      %2954 = vmatmul.mubr.bf16.gmra.mrb[0].mxu0 %v1483
      %v2955 = vpop.f32.mrb[0].mxu0
      %v2956 = vadd.f32 0.0, %v2955
      %v2957 = vpop.f32.mrb[0].mxu0
      %v2958 = vpop.f32.mrb[0].mxu0
      %v2959 = vadd.f32 0.0, %v2958
      %v2960 = vpop.f32.mrb[0].mxu0
      %2961 = vmatprep.mubr.bf16.mxu0 %v1548
      %2962 = vmatmul.mubr.bf16.gmra.mrb[0].mxu0 %v1484
      %v2963 = vpop.f32.mrb[0].mxu0
      %v2964 = vadd.f32 0.0, %v2963
      %v2965 = vpop.f32.mrb[0].mxu0
      %v2966 = vpop.f32.mrb[0].mxu0
      %v2967 = vadd.f32 0.0, %v2966
      %v2968 = vpop.f32.mrb[0].mxu0
      %2969 = vmatprep.mubr.bf16.mxu0 %v1549
      %2970 = vmatmul.mubr.bf16.gmra.mrb[0].mxu0 %v1485
      %v2971 = vpop.f32.mrb[0].mxu0
      %v2972 = vadd.f32 0.0, %v2971
      %v2973 = vpop.f32.mrb[0].mxu0
      %v2974 = vpop.f32.mrb[0].mxu0
      %v2975 = vadd.f32 0.0, %v2974
      %v2976 = vpop.f32.mrb[0].mxu0
      %2977 = vmatprep.mubr.bf16.mxu0 %v1550
      %2978 = vmatmul.mubr.bf16.gmra.mrb[0].mxu0 %v1486
      %v2979 = vpop.f32.mrb[0].mxu0
      %v2980 = vadd.f32 0.0, %v2979
      %v2981 = vpop.f32.mrb[0].mxu0
      %v2982 = vpop.f32.mrb[0].mxu0
      %v2983 = vadd.f32 0.0, %v2982
      %v2984 = vpop.f32.mrb[0].mxu0
      %2985 = vmatprep.mubr.bf16.mxu0 %v1551
      %2986 = vmatmul.mubr.bf16.gmra.mrb[0].mxu0 %v1487
      %v2987 = vpop.f32.mrb[0].mxu0
      %v2988 = vadd.f32 0.0, %v2987
      %v2989 = vpop.f32.mrb[0].mxu0
      %v2990 = vpop.f32.mrb[0].mxu0
      %v2991 = vadd.f32 0.0, %v2990
      %v2992 = vpop.f32.mrb[0].mxu0
      %2993 = vmatprep.mubr.bf16.mxu0 %v1552
      %2994 = vmatmul.mubr.bf16.gmra.mrb[0].mxu0 %v1488
      %v2995 = vpop.f32.mrb[0].mxu0
      %v2996 = vadd.f32 0.0, %v2995
      %v2997 = vpop.f32.mrb[0].mxu0
      %v2998 = vpop.f32.mrb[0].mxu0
      %v2999 = vadd.f32 0.0, %v2998
      %v3000 = vpop.f32.mrb[0].mxu0
      %3001 = vmatprep.mubr.bf16.mxu0 %v1553
      %3002 = vmatmul.mubr.bf16.gmra.mrb[0].mxu0 %v1489
      %v3003 = vpop.f32.mrb[0].mxu0
      %v3004 = vadd.f32 0.0, %v3003
      %v3005 = vpop.f32.mrb[0].mxu0
      %v3006 = vpop.f32.mrb[0].mxu0
      %v3007 = vadd.f32 0.0, %v3006
      %v3008 = vpop.f32.mrb[0].mxu0
      %3009 = vmatprep.mubr.bf16.mxu0 %v1554
      %3010 = vmatmul.mubr.bf16.gmra.mrb[0].mxu0 %v1490
      %v3011 = vpop.f32.mrb[0].mxu0
      %v3012 = vadd.f32 0.0, %v3011
      %v3013 = vpop.f32.mrb[0].mxu0
      %v3014 = vpop.f32.mrb[0].mxu0
      %v3015 = vadd.f32 0.0, %v3014
      %v3016 = vpop.f32.mrb[0].mxu0
      %3017 = vmatprep.mubr.bf16.mxu0 %v2384
      %3018 = vmatmul.mubr.bf16.gmra.mrb[0].mxu0 %v1802
      %v3019 = vpop.f32.mrb[0].mxu0
      %v3020 = vadd.f32 0.0, %v3019
      %v3021 = vpop.f32.mrb[0].mxu0
      %v3022 = vpop.f32.mrb[0].mxu0
      %v3023 = vadd.f32 0.0, %v3022
      %v3024 = vpop.f32.mrb[0].mxu0
      %3025 = vmatprep.mubr.bf16.mxu0 %v2743
      %3026 = vmatmul.mubr.bf16.gmra.mrb[0].mxu0 %v2739
      %v3027 = vpop.f32.mrb[0].mxu0
      %v3028 = vadd.f32 0.0, %v3027
      %v3029 = vpop.f32.mrb[0].mxu0
      %v3030 = vpop.f32.mrb[0].mxu0
      %v3031 = vadd.f32 0.0, %v3030
      %v3032 = vpop.f32.mrb[0].mxu0
      %3033 = vdwg.mxu0
      %v3034 = vadd.f32 %v2679, %v2908
      %v3035 = vadd.f32 %v2680, %v2911
      %v3036 = vadd.f32 %v2681, %v2916
      %v3037 = vadd.f32 %v2682, %v2919
      %v3038 = vadd.f32 %v2683, %v2924
      %v3039 = vadd.f32 %v2684, %v2927
      %v3040 = vadd.f32 %v2685, %v2932
      %v3041 = vadd.f32 %v2686, %v2935
      %v3042 = vadd.f32 %v2687, %v2940
      %v3043 = vadd.f32 %v2688, %v2943
      %v3044 = vadd.f32 %v2689, %v2948
      %v3045 = vadd.f32 %v2690, %v2951
      %v3046 = vadd.f32 %v2691, %v2956
      %v3047 = vadd.f32 %v2692, %v2959
      %v3048 = vadd.f32 %v2693, %v2964
      %v3049 = vadd.f32 %v2694, %v2967
      %v3050 = vadd.f32 %v2695, %v2972
      %v3051 = vadd.f32 %v2696, %v2975
      %v3052 = vadd.f32 %v2697, %v2980
      %v3053 = vadd.f32 %v2698, %v2983
      %v3054 = vadd.f32 %v2699, %v2988
      %v3055 = vadd.f32 %v2700, %v2991
      %v3056 = vadd.f32 %v2701, %v2996
      %v3057 = vadd.f32 %v2702, %v2999
      %v3058 = vadd.f32 %v2703, %v3004
      %v3059 = vadd.f32 %v2704, %v3007
      %v3060 = vadd.f32 %v2705, %v3012
      %v3061 = vadd.f32 %v2706, %v3015
      %v3062 = vadd.f32 %v2707, %v3020
      %v3063 = vadd.f32 %v2708, %v3023
      %v3064 = vadd.f32 %v2709, %v3028
      %v3065 = vadd.f32 %v2710, %v3031
      %v3067 = vrot.slane %v1021, 5
      %v3068 = vrot.slane %v3067, 4
      %v3069 = vrot.slane %v1022, 5
      %v3070 = vsel %vm1621, %v3068, %v3069
      %v3071 = vrot.slane %v3069, 4
      %v3072 = vrot.slane %v1023, 5
      %v3073 = vsel %vm1621, %v3071, %v3072
      %v3074 = vld [vmem:[%s3 + $0x200] sm:$0xf]
      %v3075 = vld [vmem:[%s3 + $0x204] sm:$0xf]
      %v3076 = vld [vmem:[%s3 + $0x208] sm:$0xf]
      %v3077 = vld [vmem:[%s3 + $0x20c] sm:$0xf]
      %v3078 = vld [vmem:[%s3 + $0x210] sm:$0xf]
      %v3079 = vld [vmem:[%s3 + $0x214] sm:$0xf]
      %v3080 = vld [vmem:[%s3 + $0x218] sm:$0xf]
      %v3081 = vld [vmem:[%s3 + $0x21c] sm:$0xf]
      %v3082 = vld [vmem:[%s3 + $0x220] sm:$0xf]
      %v3083 = vld [vmem:[%s3 + $0x224] sm:$0xf]
      %v3084 = vld [vmem:[%s3 + $0x228] sm:$0xf]
      %v3085 = vld [vmem:[%s3 + $0x22c] sm:$0xf]
      %v3086 = vld [vmem:[%s3 + $0x230] sm:$0xf]
      %v3087 = vld [vmem:[%s3 + $0x234] sm:$0xf]
      %v3088 = vld [vmem:[%s3 + $0x238] sm:$0xf]
      %v3089 = vld [vmem:[%s3 + $0x23c] sm:$0xf]
      %v3090 = vunpack.c.l.b16 %v3070
      %v3091 = vunpack.c.l.b16 %v3073
      %v3092 = vpack.c.b16 %v3091, %v3090
      %v3110 = vunpack.c.l.b16 %v3074
      %v3111 = vunpack.c.l.b16 %v3075
      %v3112 = vunpack.c.l.b16 %v3076
      %v3113 = vunpack.c.l.b16 %v3077
      %v3114 = vunpack.c.l.b16 %v3078
      %v3115 = vunpack.c.l.b16 %v3079
      %v3116 = vunpack.c.l.b16 %v3080
      %v3117 = vunpack.c.l.b16 %v3081
      %v3118 = vunpack.c.l.b16 %v3082
      %v3119 = vunpack.c.l.b16 %v3083
      %v3120 = vunpack.c.l.b16 %v3084
      %v3121 = vunpack.c.l.b16 %v3085
      %v3122 = vunpack.c.l.b16 %v3086
      %v3123 = vunpack.c.l.b16 %v3087
      %v3124 = vunpack.c.l.b16 %v3088
      %v3125 = vunpack.c.l.b16 %v3089
      %v3126 = vpack.c.b16 %v3111, %v3110
      %v3127 = vpack.c.b16 %v3113, %v3112
      %v3128 = vpack.c.b16 %v3115, %v3114
      %v3129 = vpack.c.b16 %v3117, %v3116
      %v3130 = vpack.c.b16 %v3119, %v3118
      %v3131 = vpack.c.b16 %v3121, %v3120
      %v3132 = vpack.c.b16 %v3123, %v3122
      %v3133 = vpack.c.b16 %v3125, %v3124
      %3142 = vmatprep.subr.bf16.mxu0 0
      %3143 = vmatpush1.bf16.msra.mxu0 %v3126
      %3144 = vmatprep.subr.bf16.mxu0 0
      %3145 = vmatpush1.bf16.msra.mxu0 %v3127
      %3146 = vmatprep.subr.bf16.mxu0 0
      %3147 = vmatpush1.bf16.msra.mxu0 %v3128
      %3148 = vmatprep.subr.bf16.mxu0 0
      %3149 = vmatpush1.bf16.msra.mxu0 %v3129
      %3150 = vmatprep.subr.bf16.mxu0 0
      %3151 = vmatpush1.bf16.msra.mxu0 %v3130
      %3152 = vmatprep.subr.bf16.mxu0 0
      %3153 = vmatpush1.bf16.msra.mxu0 %v3131
      %3154 = vmatprep.subr.bf16.mxu0 0
      %3155 = vmatpush1.bf16.msra.mxu0 %v3132
      %3156 = vmatprep.subr.bf16.mxu0 0
      %3157 = vmatpush1.bf16.msra.mxu0 %v3133
      %3158 = vmatprep.subr.bf16.mxu0 0
      %3159 = vmatpush1.bf16.msra.mxu0 0
      %3160 = vmatprep.subr.bf16.mxu0 0
      %3161 = vmatpush1.bf16.msra.mxu0 0
      %3162 = vmatprep.subr.bf16.mxu0 0
      %3163 = vmatpush1.bf16.msra.mxu0 0
      %3164 = vmatprep.subr.bf16.mxu0 0
      %3165 = vmatpush1.bf16.msra.mxu0 0
      %3166 = vmatprep.subr.bf16.mxu0 0
      %3167 = vmatpush1.bf16.msra.mxu0 0
      %3168 = vmatprep.subr.bf16.mxu0 0
      %3169 = vmatpush1.bf16.msra.mxu0 0
      %3170 = vmatprep.subr.bf16.mxu0 0
      %3171 = vmatpush1.bf16.msra.mxu0 0
      %3172 = vmatprep.subr.bf16.mxu0 0
      %3173 = vmatpush1.bf16.msra.mxu0 0
      %3174 = vmatprep.mubr.bf16.mxu0 0
      %3175 = vmatmul.mubr.bf16.gmra.mrb[0].mxu0 %v1768
      %v3176 = vpop.f32.mrb[0].mxu0
      %v3177 = vadd.f32 0.0, %v3176
      %v3178 = vpop.f32.mrb[0].mxu0
      %v3179 = vpop.f32.mrb[0].mxu0
      %v3180 = vadd.f32 0.0, %v3179
      %v3181 = vpop.f32.mrb[0].mxu0
      %3182 = vmatprep.mubr.bf16.mxu0 0
      %3183 = vmatmul.mubr.bf16.gmra.mrb[0].mxu0 %v1769
      %v3184 = vpop.f32.mrb[0].mxu0
      %v3185 = vadd.f32 0.0, %v3184
      %v3186 = vpop.f32.mrb[0].mxu0
      %v3187 = vpop.f32.mrb[0].mxu0
      %v3188 = vadd.f32 0.0, %v3187
      %v3189 = vpop.f32.mrb[0].mxu0
      %3190 = vmatprep.mubr.bf16.mxu0 0
      %3191 = vmatmul.mubr.bf16.gmra.mrb[0].mxu0 %v1770
      %v3192 = vpop.f32.mrb[0].mxu0
      %v3193 = vadd.f32 0.0, %v3192
      %v3194 = vpop.f32.mrb[0].mxu0
      %v3195 = vpop.f32.mrb[0].mxu0
      %v3196 = vadd.f32 0.0, %v3195
      %v3197 = vpop.f32.mrb[0].mxu0
      %3198 = vmatprep.mubr.bf16.mxu0 0
      %3199 = vmatmul.mubr.bf16.gmra.mrb[0].mxu0 %v1771
      %v3200 = vpop.f32.mrb[0].mxu0
      %v3201 = vadd.f32 0.0, %v3200
      %v3202 = vpop.f32.mrb[0].mxu0
      %v3203 = vpop.f32.mrb[0].mxu0
      %v3204 = vadd.f32 0.0, %v3203
      %v3205 = vpop.f32.mrb[0].mxu0
      %3206 = vmatprep.mubr.bf16.mxu0 0
      %3207 = vmatmul.mubr.bf16.gmra.mrb[0].mxu0 %v1772
      %v3208 = vpop.f32.mrb[0].mxu0
      %v3209 = vadd.f32 0.0, %v3208
      %v3210 = vpop.f32.mrb[0].mxu0
      %v3211 = vpop.f32.mrb[0].mxu0
      %v3212 = vadd.f32 0.0, %v3211
      %v3213 = vpop.f32.mrb[0].mxu0
      %3214 = vmatprep.mubr.bf16.mxu0 0
      %3215 = vmatmul.mubr.bf16.gmra.mrb[0].mxu0 %v1773
      %v3216 = vpop.f32.mrb[0].mxu0
      %v3217 = vadd.f32 0.0, %v3216
      %v3218 = vpop.f32.mrb[0].mxu0
      %v3219 = vpop.f32.mrb[0].mxu0
      %v3220 = vadd.f32 0.0, %v3219
      %v3221 = vpop.f32.mrb[0].mxu0
      %3222 = vmatprep.mubr.bf16.mxu0 0
      %3223 = vmatmul.mubr.bf16.gmra.mrb[0].mxu0 %v1774
      %v3224 = vpop.f32.mrb[0].mxu0
      %v3225 = vadd.f32 0.0, %v3224
      %v3226 = vpop.f32.mrb[0].mxu0
      %v3227 = vpop.f32.mrb[0].mxu0
      %v3228 = vadd.f32 0.0, %v3227
      %v3229 = vpop.f32.mrb[0].mxu0
      %3230 = vmatprep.mubr.bf16.mxu0 0
      %3231 = vmatmul.mubr.bf16.gmra.mrb[0].mxu0 %v1775
      %v3232 = vpop.f32.mrb[0].mxu0
      %v3233 = vadd.f32 0.0, %v3232
      %v3234 = vpop.f32.mrb[0].mxu0
      %v3235 = vpop.f32.mrb[0].mxu0
      %v3236 = vadd.f32 0.0, %v3235
      %v3237 = vpop.f32.mrb[0].mxu0
      %3238 = vmatprep.mubr.bf16.mxu0 0
      %3239 = vmatmul.mubr.bf16.gmra.mrb[0].mxu0 %v1776
      %v3240 = vpop.f32.mrb[0].mxu0
      %v3241 = vadd.f32 0.0, %v3240
      %v3242 = vpop.f32.mrb[0].mxu0
      %v3243 = vpop.f32.mrb[0].mxu0
      %v3244 = vadd.f32 0.0, %v3243
      %v3245 = vpop.f32.mrb[0].mxu0
      %3246 = vmatprep.mubr.bf16.mxu0 0
      %3247 = vmatmul.mubr.bf16.gmra.mrb[0].mxu0 %v1777
      %v3248 = vpop.f32.mrb[0].mxu0
      %v3249 = vadd.f32 0.0, %v3248
      %v3250 = vpop.f32.mrb[0].mxu0
      %v3251 = vpop.f32.mrb[0].mxu0
      %v3252 = vadd.f32 0.0, %v3251
      %v3253 = vpop.f32.mrb[0].mxu0
      %3254 = vmatprep.mubr.bf16.mxu0 0
      %3255 = vmatmul.mubr.bf16.gmra.mrb[0].mxu0 %v1778
      %v3256 = vpop.f32.mrb[0].mxu0
      %v3257 = vadd.f32 0.0, %v3256
      %v3258 = vpop.f32.mrb[0].mxu0
      %v3259 = vpop.f32.mrb[0].mxu0
      %v3260 = vadd.f32 0.0, %v3259
      %v3261 = vpop.f32.mrb[0].mxu0
      %3262 = vmatprep.mubr.bf16.mxu0 0
      %3263 = vmatmul.mubr.bf16.gmra.mrb[0].mxu0 %v1779
      %v3264 = vpop.f32.mrb[0].mxu0
      %v3265 = vadd.f32 0.0, %v3264
      %v3266 = vpop.f32.mrb[0].mxu0
      %v3267 = vpop.f32.mrb[0].mxu0
      %v3268 = vadd.f32 0.0, %v3267
      %v3269 = vpop.f32.mrb[0].mxu0
      %3270 = vmatprep.mubr.bf16.mxu0 0
      %3271 = vmatmul.mubr.bf16.gmra.mrb[0].mxu0 %v1780
      %v3272 = vpop.f32.mrb[0].mxu0
      %v3273 = vadd.f32 0.0, %v3272
      %v3274 = vpop.f32.mrb[0].mxu0
      %v3275 = vpop.f32.mrb[0].mxu0
      %v3276 = vadd.f32 0.0, %v3275
      %v3277 = vpop.f32.mrb[0].mxu0
      %3278 = vmatprep.mubr.bf16.mxu0 0
      %3279 = vmatmul.mubr.bf16.gmra.mrb[0].mxu0 %v1781
      %v3280 = vpop.f32.mrb[0].mxu0
      %v3281 = vadd.f32 0.0, %v3280
      %v3282 = vpop.f32.mrb[0].mxu0
      %v3283 = vpop.f32.mrb[0].mxu0
      %v3284 = vadd.f32 0.0, %v3283
      %v3285 = vpop.f32.mrb[0].mxu0
      %3286 = vmatprep.mubr.bf16.mxu0 0
      %3287 = vmatmul.mubr.bf16.gmra.mrb[0].mxu0 %v2388
      %v3288 = vpop.f32.mrb[0].mxu0
      %v3289 = vadd.f32 0.0, %v3288
      %v3290 = vpop.f32.mrb[0].mxu0
      %v3291 = vpop.f32.mrb[0].mxu0
      %v3292 = vadd.f32 0.0, %v3291
      %v3293 = vpop.f32.mrb[0].mxu0
      %3294 = vmatprep.mubr.bf16.mxu0 0
      %3295 = vmatmul.mubr.bf16.gmra.mrb[0].mxu0 %v3092
      %v3296 = vpop.f32.mrb[0].mxu0
      %v3297 = vadd.f32 0.0, %v3296
      %v3298 = vpop.f32.mrb[0].mxu0
      %v3299 = vpop.f32.mrb[0].mxu0
      %v3300 = vadd.f32 0.0, %v3299
      %v3301 = vpop.f32.mrb[0].mxu0
      %3302 = vdwg.mxu0
      %v3303 = vadd.f32 %v3034, %v3177
      %v3304 = vadd.f32 %v3035, %v3180
      %v3305 = vadd.f32 %v3036, %v3185
      %v3306 = vadd.f32 %v3037, %v3188
      %v3307 = vadd.f32 %v3038, %v3193
      %v3308 = vadd.f32 %v3039, %v3196
      %v3309 = vadd.f32 %v3040, %v3201
      %v3310 = vadd.f32 %v3041, %v3204
      %v3311 = vadd.f32 %v3042, %v3209
      %v3312 = vadd.f32 %v3043, %v3212
      %v3313 = vadd.f32 %v3044, %v3217
      %v3314 = vadd.f32 %v3045, %v3220
      %v3315 = vadd.f32 %v3046, %v3225
      %v3316 = vadd.f32 %v3047, %v3228
      %v3317 = vadd.f32 %v3048, %v3233
      %v3318 = vadd.f32 %v3049, %v3236
      %v3319 = vadd.f32 %v3050, %v3241
      %v3320 = vadd.f32 %v3051, %v3244
      %v3321 = vadd.f32 %v3052, %v3249
      %v3322 = vadd.f32 %v3053, %v3252
      %v3323 = vadd.f32 %v3054, %v3257
      %v3324 = vadd.f32 %v3055, %v3260
      %v3325 = vadd.f32 %v3056, %v3265
      %v3326 = vadd.f32 %v3057, %v3268
      %v3327 = vadd.f32 %v3058, %v3273
      %v3328 = vadd.f32 %v3059, %v3276
      %v3329 = vadd.f32 %v3060, %v3281
      %v3330 = vadd.f32 %v3061, %v3284
      %v3331 = vadd.f32 %v3062, %v3289
      %v3332 = vadd.f32 %v3063, %v3292
      %v3333 = vadd.f32 %v3064, %v3297
      %v3334 = vadd.f32 %v3065, %v3300
      %3335 = vst [vmem:[%s231] sm:$0xff] %v3303
      %3336 = vst [vmem:[%s231 + $0x8] sm:$0xff] %v3304
      %3337 = vst [vmem:[%s231 + $0x10] sm:$0xff] %v3305
      %3338 = vst [vmem:[%s231 + $0x18] sm:$0xff] %v3306
      %3339 = vst [vmem:[%s231 + $0x20] sm:$0xff] %v3307
      %3340 = vst [vmem:[%s231 + $0x28] sm:$0xff] %v3308
      %3341 = vst [vmem:[%s231 + $0x30] sm:$0xff] %v3309
      %3342 = vst [vmem:[%s231 + $0x38] sm:$0xff] %v3310
      %3343 = vst [vmem:[%s231 + $0x40] sm:$0xff] %v3311
      %3344 = vst [vmem:[%s231 + $0x48] sm:$0xff] %v3312
      %3345 = vst [vmem:[%s231 + $0x50] sm:$0xff] %v3313
      %3346 = vst [vmem:[%s231 + $0x58] sm:$0xff] %v3314
      %3347 = vst [vmem:[%s231 + $0x60] sm:$0xff] %v3315
      %3348 = vst [vmem:[%s231 + $0x68] sm:$0xff] %v3316
      %3349 = vst [vmem:[%s231 + $0x70] sm:$0xff] %v3317
      %3350 = vst [vmem:[%s231 + $0x78] sm:$0xff] %v3318
      %3351 = vst [vmem:[%s231 + $0x80] sm:$0xff] %v3319
      %3352 = vst [vmem:[%s231 + $0x88] sm:$0xff] %v3320
      %3353 = vst [vmem:[%s231 + $0x90] sm:$0xff] %v3321
      %3354 = vst [vmem:[%s231 + $0x98] sm:$0xff] %v3322
      %3355 = vst [vmem:[%s231 + $0xa0] sm:$0xff] %v3323
      %3356 = vst [vmem:[%s231 + $0xa8] sm:$0xff] %v3324
      %3357 = vst [vmem:[%s231 + $0xb0] sm:$0xff] %v3325
      %3358 = vst [vmem:[%s231 + $0xb8] sm:$0xff] %v3326
      %3359 = vst [vmem:[%s231 + $0xc0] sm:$0xff] %v3327
      %3360 = vst [vmem:[%s231 + $0xc8] sm:$0xff] %v3328
      %3361 = vst [vmem:[%s231 + $0xd0] sm:$0xff] %v3329
      %3362 = vst [vmem:[%s231 + $0xd8] sm:$0xff] %v3330
      %3363 = vst [vmem:[%s231 + $0xe0] sm:$0xff] %v3331
      %3364 = vst [vmem:[%s231 + $0xe8] sm:$0xff] %v3332
      %3365 = vst [vmem:[%s231 + $0xf0] sm:$0xff] %v3333
      %3366 = vst [vmem:[%s231 + $0xf8] sm:$0xff] %v3334
      %v3367 = vadd.f32 %v3303, %v3304
      %v3368 = vadd.f32 %v3367, %v3305
      %v3369 = vadd.f32 %v3368, %v3306
      %v3370 = vadd.f32 %v3369, %v3307
      %v3371 = vadd.f32 %v3370, %v3308
      %v3372 = vadd.f32 %v3371, %v3309
      %v3373 = vadd.f32 %v3372, %v3310
      %v3374 = vadd.f32 %v3373, %v3311
      %v3375 = vadd.f32 %v3374, %v3312
      %v3376 = vadd.f32 %v3375, %v3313
      %v3377 = vadd.f32 %v3376, %v3314
      %v3378 = vadd.f32 %v3377, %v3315
      %v3379 = vadd.f32 %v3378, %v3316
      %v3380 = vadd.f32 %v3379, %v3317
      %v3381 = vadd.f32 %v3380, %v3318
      %v3382 = vadd.f32 %v3381, %v3319
      %v3383 = vadd.f32 %v3382, %v3320
      %v3384 = vadd.f32 %v3383, %v3321
      %v3385 = vadd.f32 %v3384, %v3322
      %v3386 = vadd.f32 %v3385, %v3323
      %v3387 = vadd.f32 %v3386, %v3324
      %v3388 = vadd.f32 %v3387, %v3325
      %v3389 = vadd.f32 %v3388, %v3326
      %v3390 = vadd.f32 %v3389, %v3327
      %v3391 = vadd.f32 %v3390, %v3328
      %v3392 = vadd.f32 %v3391, %v3329
      %v3393 = vadd.f32 %v3392, %v3330
      %v3394 = vadd.f32 %v3393, %v3331
      %v3395 = vadd.f32 %v3394, %v3332
      %v3396 = vadd.f32 %v3395, %v3333
      %v3397 = vadd.f32 %v3396, %v3334
      %v3398 = vrot.slane %v3397, 4
      %v3399 = vadd.f32 %v3397, %v3398
      %v3400 = vrot.slane %v3399, 2
      %v3401 = vadd.f32 %v3399, %v3400
      %v3402 = vrot.slane %v3401, 1
      %v3403 = vadd.f32 %v3401, %v3402
      %v3404 = vmul.f32 %v3403, 0.00390625
      %v3405 = vsub.f32 %v3303, %v3404
      %v3406 = vsub.f32 %v3304, %v3404
      %v3407 = vsub.f32 %v3305, %v3404
      %v3408 = vsub.f32 %v3306, %v3404
      %v3409 = vsub.f32 %v3307, %v3404
      %v3410 = vsub.f32 %v3308, %v3404
      %v3411 = vsub.f32 %v3309, %v3404
      %v3412 = vsub.f32 %v3310, %v3404
      %v3413 = vsub.f32 %v3311, %v3404
      %v3414 = vsub.f32 %v3312, %v3404
      %v3415 = vsub.f32 %v3313, %v3404
      %v3416 = vsub.f32 %v3314, %v3404
      %v3417 = vsub.f32 %v3315, %v3404
      %v3418 = vsub.f32 %v3316, %v3404
      %v3419 = vsub.f32 %v3317, %v3404
      %v3420 = vsub.f32 %v3318, %v3404
      %v3421 = vsub.f32 %v3319, %v3404
      %v3422 = vsub.f32 %v3320, %v3404
      %v3423 = vsub.f32 %v3321, %v3404
      %v3424 = vsub.f32 %v3322, %v3404
      %v3425 = vsub.f32 %v3323, %v3404
      %v3426 = vsub.f32 %v3324, %v3404
      %v3427 = vsub.f32 %v3325, %v3404
      %v3428 = vsub.f32 %v3326, %v3404
      %v3429 = vsub.f32 %v3327, %v3404
      %v3430 = vsub.f32 %v3328, %v3404
      %v3431 = vsub.f32 %v3329, %v3404
      %v3432 = vsub.f32 %v3330, %v3404
      %v3433 = vsub.f32 %v3331, %v3404
      %v3434 = vsub.f32 %v3332, %v3404
      %v3435 = vsub.f32 %v3333, %v3404
      %v3436 = vsub.f32 %v3334, %v3404
      %v3437 = vmul.f32 %v3405, %v3405
      %v3438 = vmul.f32 %v3406, %v3406
      %v3439 = vmul.f32 %v3407, %v3407
      %v3440 = vmul.f32 %v3408, %v3408
      %v3441 = vmul.f32 %v3409, %v3409
      %v3442 = vmul.f32 %v3410, %v3410
      %v3443 = vmul.f32 %v3411, %v3411
      %v3444 = vmul.f32 %v3412, %v3412
      %v3445 = vmul.f32 %v3413, %v3413
      %v3446 = vmul.f32 %v3414, %v3414
      %v3447 = vmul.f32 %v3415, %v3415
      %v3448 = vmul.f32 %v3416, %v3416
      %v3449 = vmul.f32 %v3417, %v3417
      %v3450 = vmul.f32 %v3418, %v3418
      %v3451 = vmul.f32 %v3419, %v3419
      %v3452 = vmul.f32 %v3420, %v3420
      %v3453 = vmul.f32 %v3421, %v3421
      %v3454 = vmul.f32 %v3422, %v3422
      %v3455 = vmul.f32 %v3423, %v3423
      %v3456 = vmul.f32 %v3424, %v3424
      %v3457 = vmul.f32 %v3425, %v3425
      %v3458 = vmul.f32 %v3426, %v3426
      %v3459 = vmul.f32 %v3427, %v3427
      %v3460 = vmul.f32 %v3428, %v3428
      %v3461 = vmul.f32 %v3429, %v3429
      %v3462 = vmul.f32 %v3430, %v3430
      %v3463 = vmul.f32 %v3431, %v3431
      %v3464 = vmul.f32 %v3432, %v3432
      %v3465 = vmul.f32 %v3433, %v3433
      %v3466 = vmul.f32 %v3434, %v3434
      %v3467 = vmul.f32 %v3435, %v3435
      %v3468 = vmul.f32 %v3436, %v3436
      %v3469 = vadd.f32 %v3437, %v3438
      %v3470 = vadd.f32 %v3469, %v3439
      %v3471 = vadd.f32 %v3470, %v3440
      %v3472 = vadd.f32 %v3471, %v3441
      %v3473 = vadd.f32 %v3472, %v3442
      %v3474 = vadd.f32 %v3473, %v3443
      %v3475 = vadd.f32 %v3474, %v3444
      %v3476 = vadd.f32 %v3475, %v3445
      %v3477 = vadd.f32 %v3476, %v3446
      %v3478 = vadd.f32 %v3477, %v3447
      %v3479 = vadd.f32 %v3478, %v3448
      %v3480 = vadd.f32 %v3479, %v3449
      %v3481 = vadd.f32 %v3480, %v3450
      %v3482 = vadd.f32 %v3481, %v3451
      %v3483 = vadd.f32 %v3482, %v3452
      %v3484 = vadd.f32 %v3483, %v3453
      %v3485 = vadd.f32 %v3484, %v3454
      %v3486 = vadd.f32 %v3485, %v3455
      %v3487 = vadd.f32 %v3486, %v3456
      %v3488 = vadd.f32 %v3487, %v3457
      %v3489 = vadd.f32 %v3488, %v3458
      %v3490 = vadd.f32 %v3489, %v3459
      %v3491 = vadd.f32 %v3490, %v3460
      %v3492 = vadd.f32 %v3491, %v3461
      %v3493 = vadd.f32 %v3492, %v3462
      %v3494 = vadd.f32 %v3493, %v3463
      %v3495 = vadd.f32 %v3494, %v3464
      %v3496 = vadd.f32 %v3495, %v3465
      %v3497 = vadd.f32 %v3496, %v3466
      %v3498 = vadd.f32 %v3497, %v3467
      %v3499 = vadd.f32 %v3498, %v3468
      %v3500 = vrot.slane %v3499, 4
      %v3501 = vadd.f32 %v3499, %v3500
      %v3502 = vrot.slane %v3501, 2
      %v3503 = vadd.f32 %v3501, %v3502
      %v3504 = vrot.slane %v3503, 1
      %v3505 = vadd.f32 %v3503, %v3504
      %vm3506 = vcmask 1040384
      %v3507 = vsel %vm3506, %v3403, %v3505
      %3508 = vst [vmem:[%s235] sm:$0x3] %v3507
      %p3509 = scmp.lt.s32.totalorder %s17, 1
      %s3510 = scalar_select %p3509, %s17, 1
      %s3511 = smul.addr %s3510, 32
      %s3512 = smul.addr %s3511, 8
      %s3513 = scalar_lea.vmem %s4, %s3512
      %p3514 = scmp.lt.s32.totalorder %s17, 1
      %s3515 = scalar_select %p3514, %s17, 1
      %s3516 = smul.addr %s3515, 2
      %s3517 = scalar_lea.vmem %s5, %s3516
      // Predicated region
      $region37: #{_bottleneck_impl.5} parent=35 // pred_check
        %p3518 = pneg %p124
      $region38: #{_bottleneck_impl.5} parent=35 // pred_check_branch
        %3520 = sbr.rel (%p3518) target = $region40
      $region39: #{_bottleneck_impl.5} parent=35 // pred_region
        _
      $region40: #{_bottleneck_impl.5} parent=35 // pred_fallthru
        _
      // Predicated region
      $region41: #{_bottleneck_impl.5} parent=35 // pred_check
        %p3521 = pneg %p150
      $region42: #{_bottleneck_impl.5} parent=35 // pred_check_branch
        %3523 = sbr.rel (%p3521) target = $region44
      $region43: #{_bottleneck_impl.5} parent=35 // pred_region
        _
      $region44: #{_bottleneck_impl.5} parent=35 // pred_fallthru
        _
    $region36: #{_bottleneck_impl.5} parent=5 // pred_fallthru
      _
    %p3524 = scmp.le.s32.totalorder 2, %s12
    // Predicated region
    $region45: #{_bottleneck_impl.5} parent=5 // pred_check
      %p3525 = pneg %p3524
    $region46: #{_bottleneck_impl.5} parent=5 // pred_check_branch
      %3527 = sbr.rel (%p3525) target = $region48
    $region47: #{_bottleneck_impl.5} parent=5 // pred_region
      %s3528 = ssub.s32 %s12, 2
      // Predicated region
      $region49: #{_bottleneck_impl.5} parent=47 // pred_check
        %p3529 = pneg %p130
      $region50: #{_bottleneck_impl.5} parent=47 // pred_check_branch
        %3531 = sbr.rel (%p3529) target = $region52
      $region51: #{_bottleneck_impl.5} parent=47 // pred_region
        %p3532 = scmp.lt.s32.totalorder %s18, 1
        %s3533 = scalar_select %p3532, %s18, 1
        %s3534 = smul.addr %s3533, 32
        %s3535 = smul.addr %s3534, 8
        %s3536 = scalar_lea.vmem %s4, %s3535
      $region52: #{_bottleneck_impl.5} parent=47 // pred_fallthru
        _
      // Predicated region
      $region53: #{_bottleneck_impl.5} parent=47 // pred_check
        %p3537 = pneg %p156
      $region54: #{_bottleneck_impl.5} parent=47 // pred_check_branch
        %3539 = sbr.rel (%p3537) target = $region56
      $region55: #{_bottleneck_impl.5} parent=47 // pred_region
        %p3540 = scmp.lt.s32.totalorder %s18, 1
        %s3541 = scalar_select %p3540, %s18, 1
        %s3542 = smul.addr %s3541, 2
        %s3543 = scalar_lea.vmem %s5, %s3542
      $region56: #{_bottleneck_impl.5} parent=47 // pred_fallthru
        _
    $region48: #{_bottleneck_impl.5} parent=5 // pred_fallthru
      _
  $region6: #{_bottleneck_impl.5} parent=0 // loop_footer
    %s16 = sadd.s32 1, %s12
  $region7: #{_bottleneck_impl.5} parent=0 // loop_footer_branch
    %11 = sbr.rel target = $region3
  $region8: #{_bottleneck_impl.5} parent=0 // loop_exit
    _

</llo_original>
